<compile_context>
chip_gen: v7x
topology: tpu7x:2x2x1
jax: 0.10.0
libtpu: 0.0.40
codegen_flags: <defaults>
</compile_context>

<pallas_src>
import jax
import jax.numpy as jnp
from jax import lax
from jax.experimental import pallas as pl
from jax.experimental.pallas import tpu as pltpu


def _lane_weights(w, W):
    """(3,3,Cin,Cout) HWIO conv weights -> (9*(2C-1), W*C) per-lane weight rows.

    Row r = (dh*3 + dw)*(2C-1) + k holds, for target lane t = w_idx*C + co, the
    scalar w[dh, dw, co + d, co] with diagonal d = k - (C-1) (0 where co+d is
    out of range).  The matching input lane shift is (dw+1)*C + d.
    """
    C = w.shape[2]
    co = jnp.arange(W * C) % C
    rows = []
    for dh in range(3):
        for dw in range(3):
            for k in range(2 * C - 1):
                d = k - (C - 1)
                ci = co + d
                valid = (ci >= 0) & (ci < C)
                rows.append(
                    jnp.where(valid, w[dh, dw, jnp.clip(ci, 0, C - 1), co], 0.0))
    return jnp.stack(rows, axis=0).astype(jnp.float32)


def resblock(x, w1, b1, w2, b2):
    """x: (N,H,W,C) f32; w*: (3,3,C,C) HWIO; b*: (C,)."""
    N, H, W, C = x.shape
    WC = W * C
    ND = 2 * C - 1                  # number of channel diagonals per tap
    Hp = H + 2
    WpC = (W + 4) * C               # W padded by 2 so every diagonal shift is >= 1

    # Pad H by 1 / W by 2 and flatten (W, C) onto the lane axis.
    xp = jnp.pad(x, ((0, 0), (1, 1), (2, 2), (0, 0))).reshape(N, Hp, WpC)

    v1 = _lane_weights(w1, W)                                   # (9*ND, WC)
    v2 = _lane_weights(w2, W)
    b1v = jnp.tile(b1.astype(jnp.float32), W).reshape(1, WC)    # bias per lane
    b2v = jnp.tile(b2.astype(jnp.float32), W).reshape(1, WC)

    def kernel(xp_ref, v1_ref, b1_ref, v2_ref, b2_ref, o_ref):
        def conv3x3(load_tap, v_ref, b_ref):
            acc = jnp.broadcast_to(b_ref[...], (H, WC))
            r = 0
            for dh in range(3):
                for dw in range(3):
                    for k in range(ND):
                        s = (dw + 1) * C + (k - (C - 1))        # static lane shift
                        acc = acc + load_tap(dh, s) * v_ref[r:r + 1, :]
                        r += 1
            return acc

        # ---- conv1: taps sliced directly from the padded-input ref ----
        h1 = conv3x3(lambda dh, s: xp_ref[0, dh:dh + H, s:s + WC], v1_ref, b1_ref)
        h1 = jnp.maximum(h1, 0.0)                               # activation('relu')

        # ---- conv2 halo: zero border around h1 built as a value ----
        zrow = jnp.zeros((1, WC), jnp.float32)
        h1p = jnp.concatenate([zrow, h1, zrow], axis=0)         # (H+2, WC)
        zcol = jnp.zeros((Hp, 2 * C), jnp.float32)
        h1p = jnp.concatenate([zcol, h1p, zcol], axis=1)        # (H+2, (W+4)*C)

        h2 = conv3x3(lambda dh, s: h1p[dh:dh + H, s:s + WC], v2_ref, b2_ref)

        # residual comes straight out of the padded input (no duplicate x input)
        residual = xp_ref[0, 1:1 + H, 2 * C:2 * C + WC]
        o_ref[0] = jnp.maximum(h2 + residual, 0.0).astype(o_ref.dtype)

    out_flat = pl.pallas_call(
        kernel,
        out_shape=jax.ShapeDtypeStruct((N, H, WC), x.dtype),
        grid=(N,),
        in_specs=[
            pl.BlockSpec((1, Hp, WpC), lambda n: (n, 0, 0)),    # padded activations
            pl.BlockSpec((9 * ND, WC), lambda n: (0, 0)),       # conv1 lane weights
            pl.BlockSpec((1, WC), lambda n: (0, 0)),            # conv1 lane bias
            pl.BlockSpec((9 * ND, WC), lambda n: (0, 0)),       # conv2 lane weights
            pl.BlockSpec((1, WC), lambda n: (0, 0)),            # conv2 lane bias
        ],
        out_specs=pl.BlockSpec((1, H, WC), lambda n: (n, 0, 0)),
        compiler_params=pltpu.CompilerParams(
            dimension_semantics=("parallel",)),                  # megacore on v7x
    )(xp, v1, b1v, v2, b2v)

    # TODO(synk): for large H/W also tile over H-rows (halo via Element index_map +
    # vmem_limit_bytes budget for v7x); for large C switch taps to bf16 im2col MXU matmuls.
    return out_flat.reshape(N, H, W, C)


def ref_resblock(x, w1, b1, w2, b2):
    """Pure-JAX reference (NHWC / HWIO conv)."""
    dn = lax.conv_dimension_numbers(x.shape, w1.shape, ('NHWC', 'HWIO', 'NHWC'))
    h = lax.conv_general_dilated(x, w1, (1, 1), 'SAME', dimension_numbers=dn)
    h = jnp.maximum(h + b1, 0.0)
    h = lax.conv_general_dilated(h, w2, (1, 1), 'SAME', dimension_numbers=dn)
    return jnp.maximum(h + b2 + x, 0.0)


if __name__ == "__main__":
    N, C, H, W = 2, 4, 16, 16          # PyTorch input would be NCHW (2, 4, 16, 16)

    key = jax.random.PRNGKey(0)
    kx, kw1, kb1, kw2, kb2 = jax.random.split(key, 5)

    x_nchw = jax.random.normal(kx, (N, C, H, W), jnp.float32)
    x = jnp.transpose(x_nchw, (0, 2, 3, 1))            # NCHW -> NHWC

    scale = 1.0 / (3 * 3 * C) ** 0.5                   # ~ PyTorch conv default init scale
    w1 = jax.random.normal(kw1, (3, 3, C, C), jnp.float32) * scale
    b1 = jax.random.normal(kb1, (C,), jnp.float32) * scale
    w2 = jax.random.normal(kw2, (3, 3, C, C), jnp.float32) * scale
    b2 = jax.random.normal(kb2, (C,), jnp.float32) * scale

    out = jax.block_until_ready(resblock(x, w1, b1, w2, b2))
    ref = jax.block_until_ready(ref_resblock(x, w1, b1, w2, b2))

    assert out.shape == (N, H, W, C)
    assert jnp.allclose(out, ref, atol=1e-4, rtol=1e-4), "mismatch vs reference"
    print("KERNEL_OK")
</pallas_src>

<mosaic_0001>
module attributes {stable_mosaic.version = 11 : i64} {
  func.func @kernel(%arg0: i32, %arg1: memref<1x18x80xf32, #tpu.memory_space<vmem>>, %arg2: memref<63x64xf32, #tpu.memory_space<vmem>>, %arg3: memref<1x64xf32, #tpu.memory_space<vmem>>, %arg4: memref<63x64xf32, #tpu.memory_space<vmem>>, %arg5: memref<1x64xf32, #tpu.memory_space<vmem>>, %arg6: memref<1x16x64xf32, #tpu.memory_space<vmem>>) attributes {dimension_semantics = [#tpu.dimension_semantics<parallel>], iteration_bounds = array<i64: 2>, scalar_prefetch = 0 : i64, scratch_operands = 0 : i64, tpu.core_type = #tpu.core_type<tc>, window_params = [{transform_indices = @transform_0, window_bounds = array<i64: 1, 18, 80>}, {pipeline_mode = #tpu.pipeline_mode<synchronous>, transform_indices = @transform_1, window_bounds = array<i64: 63, 64>}, {pipeline_mode = #tpu.pipeline_mode<synchronous>, transform_indices = @transform_2, window_bounds = array<i64: 1, 64>}, {pipeline_mode = #tpu.pipeline_mode<synchronous>, transform_indices = @transform_3, window_bounds = array<i64: 63, 64>}, {pipeline_mode = #tpu.pipeline_mode<synchronous>, transform_indices = @transform_4, window_bounds = array<i64: 1, 64>}, {transform_indices = @transform_5, window_bounds = array<i64: 1, 16, 64>}]} {
    %c0 = arith.constant 0 : index
    %c0_0 = arith.constant 0 : index
    %0 = vector.load %arg3[%c0, %c0_0] : memref<1x64xf32, #tpu.memory_space<vmem>>, vector<1x64xf32>
    %1 = vector.shape_cast %0 : vector<1x64xf32> to vector<1x64xf32>
    %2 = vector.broadcast %1 : vector<1x64xf32> to vector<16x64xf32>
    %c0_1 = arith.constant 0 : index
    %c0_2 = arith.constant 0 : index
    %c1 = arith.constant 1 : index
    %3 = vector.load %arg1[%c0_1, %c0_2, %c1] : memref<1x18x80xf32, #tpu.memory_space<vmem>>, vector<1x16x64xf32>
    %4 = vector.shape_cast %3 : vector<1x16x64xf32> to vector<16x64xf32>
    %c0_3 = arith.constant 0 : index
    %c0_4 = arith.constant 0 : index
    %5 = vector.load %arg2[%c0_3, %c0_4] : memref<63x64xf32, #tpu.memory_space<vmem>>, vector<1x64xf32>
    %6 = vector.broadcast %5 : vector<1x64xf32> to vector<16x64xf32>
    %7 = arith.mulf %4, %6 : vector<16x64xf32>
    %8 = arith.addf %2, %7 : vector<16x64xf32>
    %c0_5 = arith.constant 0 : index
    %c0_6 = arith.constant 0 : index
    %c2 = arith.constant 2 : index
    %9 = vector.load %arg1[%c0_5, %c0_6, %c2] : memref<1x18x80xf32, #tpu.memory_space<vmem>>, vector<1x16x64xf32>
    %10 = vector.shape_cast %9 : vector<1x16x64xf32> to vector<16x64xf32>
    %c1_7 = arith.constant 1 : index
    %c0_8 = arith.constant 0 : index
    %11 = vector.load %arg2[%c1_7, %c0_8] : memref<63x64xf32, #tpu.memory_space<vmem>>, vector<1x64xf32>
    %12 = vector.broadcast %11 : vector<1x64xf32> to vector<16x64xf32>
    %13 = arith.mulf %10, %12 : vector<16x64xf32>
    %14 = arith.addf %8, %13 : vector<16x64xf32>
    %c0_9 = arith.constant 0 : index
    %c0_10 = arith.constant 0 : index
    %c3 = arith.constant 3 : index
    %15 = vector.load %arg1[%c0_9, %c0_10, %c3] : memref<1x18x80xf32, #tpu.memory_space<vmem>>, vector<1x16x64xf32>
    %16 = vector.shape_cast %15 : vector<1x16x64xf32> to vector<16x64xf32>
    %c2_11 = arith.constant 2 : index
    %c0_12 = arith.constant 0 : index
    %17 = vector.load %arg2[%c2_11, %c0_12] : memref<63x64xf32, #tpu.memory_space<vmem>>, vector<1x64xf32>
    %18 = vector.broadcast %17 : vector<1x64xf32> to vector<16x64xf32>
    %19 = arith.mulf %16, %18 : vector<16x64xf32>
    %20 = arith.addf %14, %19 : vector<16x64xf32>
    %c0_13 = arith.constant 0 : index
    %c0_14 = arith.constant 0 : index
    %c4 = arith.constant 4 : index
    %21 = vector.load %arg1[%c0_13, %c0_14, %c4] : memref<1x18x80xf32, #tpu.memory_space<vmem>>, vector<1x16x64xf32>
    %22 = vector.shape_cast %21 : vector<1x16x64xf32> to vector<16x64xf32>
    %c3_15 = arith.constant 3 : index
    %c0_16 = arith.constant 0 : index
    %23 = vector.load %arg2[%c3_15, %c0_16] : memref<63x64xf32, #tpu.memory_space<vmem>>, vector<1x64xf32>
    %24 = vector.broadcast %23 : vector<1x64xf32> to vector<16x64xf32>
    %25 = arith.mulf %22, %24 : vector<16x64xf32>
    %26 = arith.addf %20, %25 : vector<16x64xf32>
    %c0_17 = arith.constant 0 : index
    %c0_18 = arith.constant 0 : index
    %c5 = arith.constant 5 : index
    %27 = vector.load %arg1[%c0_17, %c0_18, %c5] : memref<1x18x80xf32, #tpu.memory_space<vmem>>, vector<1x16x64xf32>
    %28 = vector.shape_cast %27 : vector<1x16x64xf32> to vector<16x64xf32>
    %c4_19 = arith.constant 4 : index
    %c0_20 = arith.constant 0 : index
    %29 = vector.load %arg2[%c4_19, %c0_20] : memref<63x64xf32, #tpu.memory_space<vmem>>, vector<1x64xf32>
    %30 = vector.broadcast %29 : vector<1x64xf32> to vector<16x64xf32>
    %31 = arith.mulf %28, %30 : vector<16x64xf32>
    %32 = arith.addf %26, %31 : vector<16x64xf32>
    %c0_21 = arith.constant 0 : index
    %c0_22 = arith.constant 0 : index
    %c6 = arith.constant 6 : index
    %33 = vector.load %arg1[%c0_21, %c0_22, %c6] : memref<1x18x80xf32, #tpu.memory_space<vmem>>, vector<1x16x64xf32>
    %34 = vector.shape_cast %33 : vector<1x16x64xf32> to vector<16x64xf32>
    %c5_23 = arith.constant 5 : index
    %c0_24 = arith.constant 0 : index
    %35 = vector.load %arg2[%c5_23, %c0_24] : memref<63x64xf32, #tpu.memory_space<vmem>>, vector<1x64xf32>
    %36 = vector.broadcast %35 : vector<1x64xf32> to vector<16x64xf32>
    %37 = arith.mulf %34, %36 : vector<16x64xf32>
    %38 = arith.addf %32, %37 : vector<16x64xf32>
    %c0_25 = arith.constant 0 : index
    %c0_26 = arith.constant 0 : index
    %c7 = arith.constant 7 : index
    %39 = vector.load %arg1[%c0_25, %c0_26, %c7] : memref<1x18x80xf32, #tpu.memory_space<vmem>>, vector<1x16x64xf32>
    %40 = vector.shape_cast %39 : vector<1x16x64xf32> to vector<16x64xf32>
    %c6_27 = arith.constant 6 : index
    %c0_28 = arith.constant 0 : index
    %41 = vector.load %arg2[%c6_27, %c0_28] : memref<63x64xf32, #tpu.memory_space<vmem>>, vector<1x64xf32>
    %42 = vector.broadcast %41 : vector<1x64xf32> to vector<16x64xf32>
    %43 = arith.mulf %40, %42 : vector<16x64xf32>
    %44 = arith.addf %38, %43 : vector<16x64xf32>
    %c0_29 = arith.constant 0 : index
    %c0_30 = arith.constant 0 : index
    %c5_31 = arith.constant 5 : index
    %45 = vector.load %arg1[%c0_29, %c0_30, %c5_31] : memref<1x18x80xf32, #tpu.memory_space<vmem>>, vector<1x16x64xf32>
    %46 = vector.shape_cast %45 : vector<1x16x64xf32> to vector<16x64xf32>
    %c7_32 = arith.constant 7 : index
    %c0_33 = arith.constant 0 : index
    %47 = vector.load %arg2[%c7_32, %c0_33] : memref<63x64xf32, #tpu.memory_space<vmem>>, vector<1x64xf32>
    %48 = vector.broadcast %47 : vector<1x64xf32> to vector<16x64xf32>
    %49 = arith.mulf %46, %48 : vector<16x64xf32>
    %50 = arith.addf %44, %49 : vector<16x64xf32>
    %c0_34 = arith.constant 0 : index
    %c0_35 = arith.constant 0 : index
    %c6_36 = arith.constant 6 : index
    %51 = vector.load %arg1[%c0_34, %c0_35, %c6_36] : memref<1x18x80xf32, #tpu.memory_space<vmem>>, vector<1x16x64xf32>
    %52 = vector.shape_cast %51 : vector<1x16x64xf32> to vector<16x64xf32>
    %c8 = arith.constant 8 : index
    %c0_37 = arith.constant 0 : index
    %53 = vector.load %arg2[%c8, %c0_37] : memref<63x64xf32, #tpu.memory_space<vmem>>, vector<1x64xf32>
    %54 = vector.broadcast %53 : vector<1x64xf32> to vector<16x64xf32>
    %55 = arith.mulf %52, %54 : vector<16x64xf32>
    %56 = arith.addf %50, %55 : vector<16x64xf32>
    %c0_38 = arith.constant 0 : index
    %c0_39 = arith.constant 0 : index
    %c7_40 = arith.constant 7 : index
    %57 = vector.load %arg1[%c0_38, %c0_39, %c7_40] : memref<1x18x80xf32, #tpu.memory_space<vmem>>, vector<1x16x64xf32>
    %58 = vector.shape_cast %57 : vector<1x16x64xf32> to vector<16x64xf32>
    %c9 = arith.constant 9 : index
    %c0_41 = arith.constant 0 : index
    %59 = vector.load %arg2[%c9, %c0_41] : memref<63x64xf32, #tpu.memory_space<vmem>>, vector<1x64xf32>
    %60 = vector.broadcast %59 : vector<1x64xf32> to vector<16x64xf32>
    %61 = arith.mulf %58, %60 : vector<16x64xf32>
    %62 = arith.addf %56, %61 : vector<16x64xf32>
    %c0_42 = arith.constant 0 : index
    %c0_43 = arith.constant 0 : index
    %c8_44 = arith.constant 8 : index
    %63 = vector.load %arg1[%c0_42, %c0_43, %c8_44] : memref<1x18x80xf32, #tpu.memory_space<vmem>>, vector<1x16x64xf32>
    %64 = vector.shape_cast %63 : vector<1x16x64xf32> to vector<16x64xf32>
    %c10 = arith.constant 10 : index
    %c0_45 = arith.constant 0 : index
    %65 = vector.load %arg2[%c10, %c0_45] : memref<63x64xf32, #tpu.memory_space<vmem>>, vector<1x64xf32>
    %66 = vector.broadcast %65 : vector<1x64xf32> to vector<16x64xf32>
    %67 = arith.mulf %64, %66 : vector<16x64xf32>
    %68 = arith.addf %62, %67 : vector<16x64xf32>
    %c0_46 = arith.constant 0 : index
    %c0_47 = arith.constant 0 : index
    %c9_48 = arith.constant 9 : index
    %69 = vector.load %arg1[%c0_46, %c0_47, %c9_48] : memref<1x18x80xf32, #tpu.memory_space<vmem>>, vector<1x16x64xf32>
    %70 = vector.shape_cast %69 : vector<1x16x64xf32> to vector<16x64xf32>
    %c11 = arith.constant 11 : index
    %c0_49 = arith.constant 0 : index
    %71 = vector.load %arg2[%c11, %c0_49] : memref<63x64xf32, #tpu.memory_space<vmem>>, vector<1x64xf32>
    %72 = vector.broadcast %71 : vector<1x64xf32> to vector<16x64xf32>
    %73 = arith.mulf %70, %72 : vector<16x64xf32>
    %74 = arith.addf %68, %73 : vector<16x64xf32>
    %c0_50 = arith.constant 0 : index
    %c0_51 = arith.constant 0 : index
    %c10_52 = arith.constant 10 : index
    %75 = vector.load %arg1[%c0_50, %c0_51, %c10_52] : memref<1x18x80xf32, #tpu.memory_space<vmem>>, vector<1x16x64xf32>
    %76 = vector.shape_cast %75 : vector<1x16x64xf32> to vector<16x64xf32>
    %c12 = arith.constant 12 : index
    %c0_53 = arith.constant 0 : index
    %77 = vector.load %arg2[%c12, %c0_53] : memref<63x64xf32, #tpu.memory_space<vmem>>, vector<1x64xf32>
    %78 = vector.broadcast %77 : vector<1x64xf32> to vector<16x64xf32>
    %79 = arith.mulf %76, %78 : vector<16x64xf32>
    %80 = arith.addf %74, %79 : vector<16x64xf32>
    %c0_54 = arith.constant 0 : index
    %c0_55 = arith.constant 0 : index
    %c11_56 = arith.constant 11 : index
    %81 = vector.load %arg1[%c0_54, %c0_55, %c11_56] : memref<1x18x80xf32, #tpu.memory_space<vmem>>, vector<1x16x64xf32>
    %82 = vector.shape_cast %81 : vector<1x16x64xf32> to vector<16x64xf32>
    %c13 = arith.constant 13 : index
    %c0_57 = arith.constant 0 : index
    %83 = vector.load %arg2[%c13, %c0_57] : memref<63x64xf32, #tpu.memory_space<vmem>>, vector<1x64xf32>
    %84 = vector.broadcast %83 : vector<1x64xf32> to vector<16x64xf32>
    %85 = arith.mulf %82, %84 : vector<16x64xf32>
    %86 = arith.addf %80, %85 : vector<16x64xf32>
    %c0_58 = arith.constant 0 : index
    %c0_59 = arith.constant 0 : index
    %c9_60 = arith.constant 9 : index
    %87 = vector.load %arg1[%c0_58, %c0_59, %c9_60] : memref<1x18x80xf32, #tpu.memory_space<vmem>>, vector<1x16x64xf32>
    %88 = vector.shape_cast %87 : vector<1x16x64xf32> to vector<16x64xf32>
    %c14 = arith.constant 14 : index
    %c0_61 = arith.constant 0 : index
    %89 = vector.load %arg2[%c14, %c0_61] : memref<63x64xf32, #tpu.memory_space<vmem>>, vector<1x64xf32>
    %90 = vector.broadcast %89 : vector<1x64xf32> to vector<16x64xf32>
    %91 = arith.mulf %88, %90 : vector<16x64xf32>
    %92 = arith.addf %86, %91 : vector<16x64xf32>
    %c0_62 = arith.constant 0 : index
    %c0_63 = arith.constant 0 : index
    %c10_64 = arith.constant 10 : index
    %93 = vector.load %arg1[%c0_62, %c0_63, %c10_64] : memref<1x18x80xf32, #tpu.memory_space<vmem>>, vector<1x16x64xf32>
    %94 = vector.shape_cast %93 : vector<1x16x64xf32> to vector<16x64xf32>
    %c15 = arith.constant 15 : index
    %c0_65 = arith.constant 0 : index
    %95 = vector.load %arg2[%c15, %c0_65] : memref<63x64xf32, #tpu.memory_space<vmem>>, vector<1x64xf32>
    %96 = vector.broadcast %95 : vector<1x64xf32> to vector<16x64xf32>
    %97 = arith.mulf %94, %96 : vector<16x64xf32>
    %98 = arith.addf %92, %97 : vector<16x64xf32>
    %c0_66 = arith.constant 0 : index
    %c0_67 = arith.constant 0 : index
    %c11_68 = arith.constant 11 : index
    %99 = vector.load %arg1[%c0_66, %c0_67, %c11_68] : memref<1x18x80xf32, #tpu.memory_space<vmem>>, vector<1x16x64xf32>
    %100 = vector.shape_cast %99 : vector<1x16x64xf32> to vector<16x64xf32>
    %c16 = arith.constant 16 : index
    %c0_69 = arith.constant 0 : index
    %101 = vector.load %arg2[%c16, %c0_69] : memref<63x64xf32, #tpu.memory_space<vmem>>, vector<1x64xf32>
    %102 = vector.broadcast %101 : vector<1x64xf32> to vector<16x64xf32>
    %103 = arith.mulf %100, %102 : vector<16x64xf32>
    %104 = arith.addf %98, %103 : vector<16x64xf32>
    %c0_70 = arith.constant 0 : index
    %c0_71 = arith.constant 0 : index
    %c12_72 = arith.constant 12 : index
    %105 = vector.load %arg1[%c0_70, %c0_71, %c12_72] : memref<1x18x80xf32, #tpu.memory_space<vmem>>, vector<1x16x64xf32>
    %106 = vector.shape_cast %105 : vector<1x16x64xf32> to vector<16x64xf32>
    %c17 = arith.constant 17 : index
    %c0_73 = arith.constant 0 : index
    %107 = vector.load %arg2[%c17, %c0_73] : memref<63x64xf32, #tpu.memory_space<vmem>>, vector<1x64xf32>
    %108 = vector.broadcast %107 : vector<1x64xf32> to vector<16x64xf32>
    %109 = arith.mulf %106, %108 : vector<16x64xf32>
    %110 = arith.addf %104, %109 : vector<16x64xf32>
    %c0_74 = arith.constant 0 : index
    %c0_75 = arith.constant 0 : index
    %c13_76 = arith.constant 13 : index
    %111 = vector.load %arg1[%c0_74, %c0_75, %c13_76] : memref<1x18x80xf32, #tpu.memory_space<vmem>>, vector<1x16x64xf32>
    %112 = vector.shape_cast %111 : vector<1x16x64xf32> to vector<16x64xf32>
    %c18 = arith.constant 18 : index
    %c0_77 = arith.constant 0 : index
    %113 = vector.load %arg2[%c18, %c0_77] : memref<63x64xf32, #tpu.memory_space<vmem>>, vector<1x64xf32>
    %114 = vector.broadcast %113 : vector<1x64xf32> to vector<16x64xf32>
    %115 = arith.mulf %112, %114 : vector<16x64xf32>
    %116 = arith.addf %110, %115 : vector<16x64xf32>
    %c0_78 = arith.constant 0 : index
    %c0_79 = arith.constant 0 : index
    %c14_80 = arith.constant 14 : index
    %117 = vector.load %arg1[%c0_78, %c0_79, %c14_80] : memref<1x18x80xf32, #tpu.memory_space<vmem>>, vector<1x16x64xf32>
    %118 = vector.shape_cast %117 : vector<1x16x64xf32> to vector<16x64xf32>
    %c19 = arith.constant 19 : index
    %c0_81 = arith.constant 0 : index
    %119 = vector.load %arg2[%c19, %c0_81] : memref<63x64xf32, #tpu.memory_space<vmem>>, vector<1x64xf32>
    %120 = vector.broadcast %119 : vector<1x64xf32> to vector<16x64xf32>
    %121 = arith.mulf %118, %120 : vector<16x64xf32>
    %122 = arith.addf %116, %121 : vector<16x64xf32>
    %c0_82 = arith.constant 0 : index
    %c0_83 = arith.constant 0 : index
    %c15_84 = arith.constant 15 : index
    %123 = vector.load %arg1[%c0_82, %c0_83, %c15_84] : memref<1x18x80xf32, #tpu.memory_space<vmem>>, vector<1x16x64xf32>
    %124 = vector.shape_cast %123 : vector<1x16x64xf32> to vector<16x64xf32>
    %c20 = arith.constant 20 : index
    %c0_85 = arith.constant 0 : index
    %125 = vector.load %arg2[%c20, %c0_85] : memref<63x64xf32, #tpu.memory_space<vmem>>, vector<1x64xf32>
    %126 = vector.broadcast %125 : vector<1x64xf32> to vector<16x64xf32>
    %127 = arith.mulf %124, %126 : vector<16x64xf32>
    %128 = arith.addf %122, %127 : vector<16x64xf32>
    %c0_86 = arith.constant 0 : index
    %c1_87 = arith.constant 1 : index
    %c1_88 = arith.constant 1 : index
    %129 = vector.load %arg1[%c0_86, %c1_87, %c1_88] : memref<1x18x80xf32, #tpu.memory_space<vmem>>, vector<1x16x64xf32>
    %130 = vector.shape_cast %129 : vector<1x16x64xf32> to vector<16x64xf32>
    %c21 = arith.constant 21 : index
    %c0_89 = arith.constant 0 : index
    %131 = vector.load %arg2[%c21, %c0_89] : memref<63x64xf32, #tpu.memory_space<vmem>>, vector<1x64xf32>
    %132 = vector.broadcast %131 : vector<1x64xf32> to vector<16x64xf32>
    %133 = arith.mulf %130, %132 : vector<16x64xf32>
    %134 = arith.addf %128, %133 : vector<16x64xf32>
    %c0_90 = arith.constant 0 : index
    %c1_91 = arith.constant 1 : index
    %c2_92 = arith.constant 2 : index
    %135 = vector.load %arg1[%c0_90, %c1_91, %c2_92] : memref<1x18x80xf32, #tpu.memory_space<vmem>>, vector<1x16x64xf32>
    %136 = vector.shape_cast %135 : vector<1x16x64xf32> to vector<16x64xf32>
    %c22 = arith.constant 22 : index
    %c0_93 = arith.constant 0 : index
    %137 = vector.load %arg2[%c22, %c0_93] : memref<63x64xf32, #tpu.memory_space<vmem>>, vector<1x64xf32>
    %138 = vector.broadcast %137 : vector<1x64xf32> to vector<16x64xf32>
    %139 = arith.mulf %136, %138 : vector<16x64xf32>
    %140 = arith.addf %134, %139 : vector<16x64xf32>
    %c0_94 = arith.constant 0 : index
    %c1_95 = arith.constant 1 : index
    %c3_96 = arith.constant 3 : index
    %141 = vector.load %arg1[%c0_94, %c1_95, %c3_96] : memref<1x18x80xf32, #tpu.memory_space<vmem>>, vector<1x16x64xf32>
    %142 = vector.shape_cast %141 : vector<1x16x64xf32> to vector<16x64xf32>
    %c23 = arith.constant 23 : index
    %c0_97 = arith.constant 0 : index
    %143 = vector.load %arg2[%c23, %c0_97] : memref<63x64xf32, #tpu.memory_space<vmem>>, vector<1x64xf32>
    %144 = vector.broadcast %143 : vector<1x64xf32> to vector<16x64xf32>
    %145 = arith.mulf %142, %144 : vector<16x64xf32>
    %146 = arith.addf %140, %145 : vector<16x64xf32>
    %c0_98 = arith.constant 0 : index
    %c1_99 = arith.constant 1 : index
    %c4_100 = arith.constant 4 : index
    %147 = vector.load %arg1[%c0_98, %c1_99, %c4_100] : memref<1x18x80xf32, #tpu.memory_space<vmem>>, vector<1x16x64xf32>
    %148 = vector.shape_cast %147 : vector<1x16x64xf32> to vector<16x64xf32>
    %c24 = arith.constant 24 : index
    %c0_101 = arith.constant 0 : index
    %149 = vector.load %arg2[%c24, %c0_101] : memref<63x64xf32, #tpu.memory_space<vmem>>, vector<1x64xf32>
    %150 = vector.broadcast %149 : vector<1x64xf32> to vector<16x64xf32>
    %151 = arith.mulf %148, %150 : vector<16x64xf32>
    %152 = arith.addf %146, %151 : vector<16x64xf32>
    %c0_102 = arith.constant 0 : index
    %c1_103 = arith.constant 1 : index
    %c5_104 = arith.constant 5 : index
    %153 = vector.load %arg1[%c0_102, %c1_103, %c5_104] : memref<1x18x80xf32, #tpu.memory_space<vmem>>, vector<1x16x64xf32>
    %154 = vector.shape_cast %153 : vector<1x16x64xf32> to vector<16x64xf32>
    %c25 = arith.constant 25 : index
    %c0_105 = arith.constant 0 : index
    %155 = vector.load %arg2[%c25, %c0_105] : memref<63x64xf32, #tpu.memory_space<vmem>>, vector<1x64xf32>
    %156 = vector.broadcast %155 : vector<1x64xf32> to vector<16x64xf32>
    %157 = arith.mulf %154, %156 : vector<16x64xf32>
    %158 = arith.addf %152, %157 : vector<16x64xf32>
    %c0_106 = arith.constant 0 : index
    %c1_107 = arith.constant 1 : index
    %c6_108 = arith.constant 6 : index
    %159 = vector.load %arg1[%c0_106, %c1_107, %c6_108] : memref<1x18x80xf32, #tpu.memory_space<vmem>>, vector<1x16x64xf32>
    %160 = vector.shape_cast %159 : vector<1x16x64xf32> to vector<16x64xf32>
    %c26 = arith.constant 26 : index
    %c0_109 = arith.constant 0 : index
    %161 = vector.load %arg2[%c26, %c0_109] : memref<63x64xf32, #tpu.memory_space<vmem>>, vector<1x64xf32>
    %162 = vector.broadcast %161 : vector<1x64xf32> to vector<16x64xf32>
    %163 = arith.mulf %160, %162 : vector<16x64xf32>
    %164 = arith.addf %158, %163 : vector<16x64xf32>
    %c0_110 = arith.constant 0 : index
    %c1_111 = arith.constant 1 : index
    %c7_112 = arith.constant 7 : index
    %165 = vector.load %arg1[%c0_110, %c1_111, %c7_112] : memref<1x18x80xf32, #tpu.memory_space<vmem>>, vector<1x16x64xf32>
    %166 = vector.shape_cast %165 : vector<1x16x64xf32> to vector<16x64xf32>
    %c27 = arith.constant 27 : index
    %c0_113 = arith.constant 0 : index
    %167 = vector.load %arg2[%c27, %c0_113] : memref<63x64xf32, #tpu.memory_space<vmem>>, vector<1x64xf32>
    %168 = vector.broadcast %167 : vector<1x64xf32> to vector<16x64xf32>
    %169 = arith.mulf %166, %168 : vector<16x64xf32>
    %170 = arith.addf %164, %169 : vector<16x64xf32>
    %c0_114 = arith.constant 0 : index
    %c1_115 = arith.constant 1 : index
    %c5_116 = arith.constant 5 : index
    %171 = vector.load %arg1[%c0_114, %c1_115, %c5_116] : memref<1x18x80xf32, #tpu.memory_space<vmem>>, vector<1x16x64xf32>
    %172 = vector.shape_cast %171 : vector<1x16x64xf32> to vector<16x64xf32>
    %c28 = arith.constant 28 : index
    %c0_117 = arith.constant 0 : index
    %173 = vector.load %arg2[%c28, %c0_117] : memref<63x64xf32, #tpu.memory_space<vmem>>, vector<1x64xf32>
    %174 = vector.broadcast %173 : vector<1x64xf32> to vector<16x64xf32>
    %175 = arith.mulf %172, %174 : vector<16x64xf32>
    %176 = arith.addf %170, %175 : vector<16x64xf32>
    %c0_118 = arith.constant 0 : index
    %c1_119 = arith.constant 1 : index
    %c6_120 = arith.constant 6 : index
    %177 = vector.load %arg1[%c0_118, %c1_119, %c6_120] : memref<1x18x80xf32, #tpu.memory_space<vmem>>, vector<1x16x64xf32>
    %178 = vector.shape_cast %177 : vector<1x16x64xf32> to vector<16x64xf32>
    %c29 = arith.constant 29 : index
    %c0_121 = arith.constant 0 : index
    %179 = vector.load %arg2[%c29, %c0_121] : memref<63x64xf32, #tpu.memory_space<vmem>>, vector<1x64xf32>
    %180 = vector.broadcast %179 : vector<1x64xf32> to vector<16x64xf32>
    %181 = arith.mulf %178, %180 : vector<16x64xf32>
    %182 = arith.addf %176, %181 : vector<16x64xf32>
    %c0_122 = arith.constant 0 : index
    %c1_123 = arith.constant 1 : index
    %c7_124 = arith.constant 7 : index
    %183 = vector.load %arg1[%c0_122, %c1_123, %c7_124] : memref<1x18x80xf32, #tpu.memory_space<vmem>>, vector<1x16x64xf32>
    %184 = vector.shape_cast %183 : vector<1x16x64xf32> to vector<16x64xf32>
    %c30 = arith.constant 30 : index
    %c0_125 = arith.constant 0 : index
    %185 = vector.load %arg2[%c30, %c0_125] : memref<63x64xf32, #tpu.memory_space<vmem>>, vector<1x64xf32>
    %186 = vector.broadcast %185 : vector<1x64xf32> to vector<16x64xf32>
    %187 = arith.mulf %184, %186 : vector<16x64xf32>
    %188 = arith.addf %182, %187 : vector<16x64xf32>
    %c0_126 = arith.constant 0 : index
    %c1_127 = arith.constant 1 : index
    %c8_128 = arith.constant 8 : index
    %189 = vector.load %arg1[%c0_126, %c1_127, %c8_128] : memref<1x18x80xf32, #tpu.memory_space<vmem>>, vector<1x16x64xf32>
    %190 = vector.shape_cast %189 : vector<1x16x64xf32> to vector<16x64xf32>
    %c31 = arith.constant 31 : index
    %c0_129 = arith.constant 0 : index
    %191 = vector.load %arg2[%c31, %c0_129] : memref<63x64xf32, #tpu.memory_space<vmem>>, vector<1x64xf32>
    %192 = vector.broadcast %191 : vector<1x64xf32> to vector<16x64xf32>
    %193 = arith.mulf %190, %192 : vector<16x64xf32>
    %194 = arith.addf %188, %193 : vector<16x64xf32>
    %c0_130 = arith.constant 0 : index
    %c1_131 = arith.constant 1 : index
    %c9_132 = arith.constant 9 : index
    %195 = vector.load %arg1[%c0_130, %c1_131, %c9_132] : memref<1x18x80xf32, #tpu.memory_space<vmem>>, vector<1x16x64xf32>
    %196 = vector.shape_cast %195 : vector<1x16x64xf32> to vector<16x64xf32>
    %c32 = arith.constant 32 : index
    %c0_133 = arith.constant 0 : index
    %197 = vector.load %arg2[%c32, %c0_133] : memref<63x64xf32, #tpu.memory_space<vmem>>, vector<1x64xf32>
    %198 = vector.broadcast %197 : vector<1x64xf32> to vector<16x64xf32>
    %199 = arith.mulf %196, %198 : vector<16x64xf32>
    %200 = arith.addf %194, %199 : vector<16x64xf32>
    %c0_134 = arith.constant 0 : index
    %c1_135 = arith.constant 1 : index
    %c10_136 = arith.constant 10 : index
    %201 = vector.load %arg1[%c0_134, %c1_135, %c10_136] : memref<1x18x80xf32, #tpu.memory_space<vmem>>, vector<1x16x64xf32>
    %202 = vector.shape_cast %201 : vector<1x16x64xf32> to vector<16x64xf32>
    %c33 = arith.constant 33 : index
    %c0_137 = arith.constant 0 : index
    %203 = vector.load %arg2[%c33, %c0_137] : memref<63x64xf32, #tpu.memory_space<vmem>>, vector<1x64xf32>
    %204 = vector.broadcast %203 : vector<1x64xf32> to vector<16x64xf32>
    %205 = arith.mulf %202, %204 : vector<16x64xf32>
    %206 = arith.addf %200, %205 : vector<16x64xf32>
    %c0_138 = arith.constant 0 : index
    %c1_139 = arith.constant 1 : index
    %c11_140 = arith.constant 11 : index
    %207 = vector.load %arg1[%c0_138, %c1_139, %c11_140] : memref<1x18x80xf32, #tpu.memory_space<vmem>>, vector<1x16x64xf32>
    %208 = vector.shape_cast %207 : vector<1x16x64xf32> to vector<16x64xf32>
    %c34 = arith.constant 34 : index
    %c0_141 = arith.constant 0 : index
    %209 = vector.load %arg2[%c34, %c0_141] : memref<63x64xf32, #tpu.memory_space<vmem>>, vector<1x64xf32>
    %210 = vector.broadcast %209 : vector<1x64xf32> to vector<16x64xf32>
    %211 = arith.mulf %208, %210 : vector<16x64xf32>
    %212 = arith.addf %206, %211 : vector<16x64xf32>
    %c0_142 = arith.constant 0 : index
    %c1_143 = arith.constant 1 : index
    %c9_144 = arith.constant 9 : index
    %213 = vector.load %arg1[%c0_142, %c1_143, %c9_144] : memref<1x18x80xf32, #tpu.memory_space<vmem>>, vector<1x16x64xf32>
    %214 = vector.shape_cast %213 : vector<1x16x64xf32> to vector<16x64xf32>
    %c35 = arith.constant 35 : index
    %c0_145 = arith.constant 0 : index
    %215 = vector.load %arg2[%c35, %c0_145] : memref<63x64xf32, #tpu.memory_space<vmem>>, vector<1x64xf32>
    %216 = vector.broadcast %215 : vector<1x64xf32> to vector<16x64xf32>
    %217 = arith.mulf %214, %216 : vector<16x64xf32>
    %218 = arith.addf %212, %217 : vector<16x64xf32>
    %c0_146 = arith.constant 0 : index
    %c1_147 = arith.constant 1 : index
    %c10_148 = arith.constant 10 : index
    %219 = vector.load %arg1[%c0_146, %c1_147, %c10_148] : memref<1x18x80xf32, #tpu.memory_space<vmem>>, vector<1x16x64xf32>
    %220 = vector.shape_cast %219 : vector<1x16x64xf32> to vector<16x64xf32>
    %c36 = arith.constant 36 : index
    %c0_149 = arith.constant 0 : index
    %221 = vector.load %arg2[%c36, %c0_149] : memref<63x64xf32, #tpu.memory_space<vmem>>, vector<1x64xf32>
    %222 = vector.broadcast %221 : vector<1x64xf32> to vector<16x64xf32>
    %223 = arith.mulf %220, %222 : vector<16x64xf32>
    %224 = arith.addf %218, %223 : vector<16x64xf32>
    %c0_150 = arith.constant 0 : index
    %c1_151 = arith.constant 1 : index
    %c11_152 = arith.constant 11 : index
    %225 = vector.load %arg1[%c0_150, %c1_151, %c11_152] : memref<1x18x80xf32, #tpu.memory_space<vmem>>, vector<1x16x64xf32>
    %226 = vector.shape_cast %225 : vector<1x16x64xf32> to vector<16x64xf32>
    %c37 = arith.constant 37 : index
    %c0_153 = arith.constant 0 : index
    %227 = vector.load %arg2[%c37, %c0_153] : memref<63x64xf32, #tpu.memory_space<vmem>>, vector<1x64xf32>
    %228 = vector.broadcast %227 : vector<1x64xf32> to vector<16x64xf32>
    %229 = arith.mulf %226, %228 : vector<16x64xf32>
    %230 = arith.addf %224, %229 : vector<16x64xf32>
    %c0_154 = arith.constant 0 : index
    %c1_155 = arith.constant 1 : index
    %c12_156 = arith.constant 12 : index
    %231 = vector.load %arg1[%c0_154, %c1_155, %c12_156] : memref<1x18x80xf32, #tpu.memory_space<vmem>>, vector<1x16x64xf32>
    %232 = vector.shape_cast %231 : vector<1x16x64xf32> to vector<16x64xf32>
    %c38 = arith.constant 38 : index
    %c0_157 = arith.constant 0 : index
    %233 = vector.load %arg2[%c38, %c0_157] : memref<63x64xf32, #tpu.memory_space<vmem>>, vector<1x64xf32>
    %234 = vector.broadcast %233 : vector<1x64xf32> to vector<16x64xf32>
    %235 = arith.mulf %232, %234 : vector<16x64xf32>
    %236 = arith.addf %230, %235 : vector<16x64xf32>
    %c0_158 = arith.constant 0 : index
    %c1_159 = arith.constant 1 : index
    %c13_160 = arith.constant 13 : index
    %237 = vector.load %arg1[%c0_158, %c1_159, %c13_160] : memref<1x18x80xf32, #tpu.memory_space<vmem>>, vector<1x16x64xf32>
    %238 = vector.shape_cast %237 : vector<1x16x64xf32> to vector<16x64xf32>
    %c39 = arith.constant 39 : index
    %c0_161 = arith.constant 0 : index
    %239 = vector.load %arg2[%c39, %c0_161] : memref<63x64xf32, #tpu.memory_space<vmem>>, vector<1x64xf32>
    %240 = vector.broadcast %239 : vector<1x64xf32> to vector<16x64xf32>
    %241 = arith.mulf %238, %240 : vector<16x64xf32>
    %242 = arith.addf %236, %241 : vector<16x64xf32>
    %c0_162 = arith.constant 0 : index
    %c1_163 = arith.constant 1 : index
    %c14_164 = arith.constant 14 : index
    %243 = vector.load %arg1[%c0_162, %c1_163, %c14_164] : memref<1x18x80xf32, #tpu.memory_space<vmem>>, vector<1x16x64xf32>
    %244 = vector.shape_cast %243 : vector<1x16x64xf32> to vector<16x64xf32>
    %c40 = arith.constant 40 : index
    %c0_165 = arith.constant 0 : index
    %245 = vector.load %arg2[%c40, %c0_165] : memref<63x64xf32, #tpu.memory_space<vmem>>, vector<1x64xf32>
    %246 = vector.broadcast %245 : vector<1x64xf32> to vector<16x64xf32>
    %247 = arith.mulf %244, %246 : vector<16x64xf32>
    %248 = arith.addf %242, %247 : vector<16x64xf32>
    %c0_166 = arith.constant 0 : index
    %c1_167 = arith.constant 1 : index
    %c15_168 = arith.constant 15 : index
    %249 = vector.load %arg1[%c0_166, %c1_167, %c15_168] : memref<1x18x80xf32, #tpu.memory_space<vmem>>, vector<1x16x64xf32>
    %250 = vector.shape_cast %249 : vector<1x16x64xf32> to vector<16x64xf32>
    %c41 = arith.constant 41 : index
    %c0_169 = arith.constant 0 : index
    %251 = vector.load %arg2[%c41, %c0_169] : memref<63x64xf32, #tpu.memory_space<vmem>>, vector<1x64xf32>
    %252 = vector.broadcast %251 : vector<1x64xf32> to vector<16x64xf32>
    %253 = arith.mulf %250, %252 : vector<16x64xf32>
    %254 = arith.addf %248, %253 : vector<16x64xf32>
    %c0_170 = arith.constant 0 : index
    %c2_171 = arith.constant 2 : index
    %c1_172 = arith.constant 1 : index
    %255 = vector.load %arg1[%c0_170, %c2_171, %c1_172] : memref<1x18x80xf32, #tpu.memory_space<vmem>>, vector<1x16x64xf32>
    %256 = vector.shape_cast %255 : vector<1x16x64xf32> to vector<16x64xf32>
    %c42 = arith.constant 42 : index
    %c0_173 = arith.constant 0 : index
    %257 = vector.load %arg2[%c42, %c0_173] : memref<63x64xf32, #tpu.memory_space<vmem>>, vector<1x64xf32>
    %258 = vector.broadcast %257 : vector<1x64xf32> to vector<16x64xf32>
    %259 = arith.mulf %256, %258 : vector<16x64xf32>
    %260 = arith.addf %254, %259 : vector<16x64xf32>
    %c0_174 = arith.constant 0 : index
    %c2_175 = arith.constant 2 : index
    %c2_176 = arith.constant 2 : index
    %261 = vector.load %arg1[%c0_174, %c2_175, %c2_176] : memref<1x18x80xf32, #tpu.memory_space<vmem>>, vector<1x16x64xf32>
    %262 = vector.shape_cast %261 : vector<1x16x64xf32> to vector<16x64xf32>
    %c43 = arith.constant 43 : index
    %c0_177 = arith.constant 0 : index
    %263 = vector.load %arg2[%c43, %c0_177] : memref<63x64xf32, #tpu.memory_space<vmem>>, vector<1x64xf32>
    %264 = vector.broadcast %263 : vector<1x64xf32> to vector<16x64xf32>
    %265 = arith.mulf %262, %264 : vector<16x64xf32>
    %266 = arith.addf %260, %265 : vector<16x64xf32>
    %c0_178 = arith.constant 0 : index
    %c2_179 = arith.constant 2 : index
    %c3_180 = arith.constant 3 : index
    %267 = vector.load %arg1[%c0_178, %c2_179, %c3_180] : memref<1x18x80xf32, #tpu.memory_space<vmem>>, vector<1x16x64xf32>
    %268 = vector.shape_cast %267 : vector<1x16x64xf32> to vector<16x64xf32>
    %c44 = arith.constant 44 : index
    %c0_181 = arith.constant 0 : index
    %269 = vector.load %arg2[%c44, %c0_181] : memref<63x64xf32, #tpu.memory_space<vmem>>, vector<1x64xf32>
    %270 = vector.broadcast %269 : vector<1x64xf32> to vector<16x64xf32>
    %271 = arith.mulf %268, %270 : vector<16x64xf32>
    %272 = arith.addf %266, %271 : vector<16x64xf32>
    %c0_182 = arith.constant 0 : index
    %c2_183 = arith.constant 2 : index
    %c4_184 = arith.constant 4 : index
    %273 = vector.load %arg1[%c0_182, %c2_183, %c4_184] : memref<1x18x80xf32, #tpu.memory_space<vmem>>, vector<1x16x64xf32>
    %274 = vector.shape_cast %273 : vector<1x16x64xf32> to vector<16x64xf32>
    %c45 = arith.constant 45 : index
    %c0_185 = arith.constant 0 : index
    %275 = vector.load %arg2[%c45, %c0_185] : memref<63x64xf32, #tpu.memory_space<vmem>>, vector<1x64xf32>
    %276 = vector.broadcast %275 : vector<1x64xf32> to vector<16x64xf32>
    %277 = arith.mulf %274, %276 : vector<16x64xf32>
    %278 = arith.addf %272, %277 : vector<16x64xf32>
    %c0_186 = arith.constant 0 : index
    %c2_187 = arith.constant 2 : index
    %c5_188 = arith.constant 5 : index
    %279 = vector.load %arg1[%c0_186, %c2_187, %c5_188] : memref<1x18x80xf32, #tpu.memory_space<vmem>>, vector<1x16x64xf32>
    %280 = vector.shape_cast %279 : vector<1x16x64xf32> to vector<16x64xf32>
    %c46 = arith.constant 46 : index
    %c0_189 = arith.constant 0 : index
    %281 = vector.load %arg2[%c46, %c0_189] : memref<63x64xf32, #tpu.memory_space<vmem>>, vector<1x64xf32>
    %282 = vector.broadcast %281 : vector<1x64xf32> to vector<16x64xf32>
    %283 = arith.mulf %280, %282 : vector<16x64xf32>
    %284 = arith.addf %278, %283 : vector<16x64xf32>
    %c0_190 = arith.constant 0 : index
    %c2_191 = arith.constant 2 : index
    %c6_192 = arith.constant 6 : index
    %285 = vector.load %arg1[%c0_190, %c2_191, %c6_192] : memref<1x18x80xf32, #tpu.memory_space<vmem>>, vector<1x16x64xf32>
    %286 = vector.shape_cast %285 : vector<1x16x64xf32> to vector<16x64xf32>
    %c47 = arith.constant 47 : index
    %c0_193 = arith.constant 0 : index
    %287 = vector.load %arg2[%c47, %c0_193] : memref<63x64xf32, #tpu.memory_space<vmem>>, vector<1x64xf32>
    %288 = vector.broadcast %287 : vector<1x64xf32> to vector<16x64xf32>
    %289 = arith.mulf %286, %288 : vector<16x64xf32>
    %290 = arith.addf %284, %289 : vector<16x64xf32>
    %c0_194 = arith.constant 0 : index
    %c2_195 = arith.constant 2 : index
    %c7_196 = arith.constant 7 : index
    %291 = vector.load %arg1[%c0_194, %c2_195, %c7_196] : memref<1x18x80xf32, #tpu.memory_space<vmem>>, vector<1x16x64xf32>
    %292 = vector.shape_cast %291 : vector<1x16x64xf32> to vector<16x64xf32>
    %c48 = arith.constant 48 : index
    %c0_197 = arith.constant 0 : index
    %293 = vector.load %arg2[%c48, %c0_197] : memref<63x64xf32, #tpu.memory_space<vmem>>, vector<1x64xf32>
    %294 = vector.broadcast %293 : vector<1x64xf32> to vector<16x64xf32>
    %295 = arith.mulf %292, %294 : vector<16x64xf32>
    %296 = arith.addf %290, %295 : vector<16x64xf32>
    %c0_198 = arith.constant 0 : index
    %c2_199 = arith.constant 2 : index
    %c5_200 = arith.constant 5 : index
    %297 = vector.load %arg1[%c0_198, %c2_199, %c5_200] : memref<1x18x80xf32, #tpu.memory_space<vmem>>, vector<1x16x64xf32>
    %298 = vector.shape_cast %297 : vector<1x16x64xf32> to vector<16x64xf32>
    %c49 = arith.constant 49 : index
    %c0_201 = arith.constant 0 : index
    %299 = vector.load %arg2[%c49, %c0_201] : memref<63x64xf32, #tpu.memory_space<vmem>>, vector<1x64xf32>
    %300 = vector.broadcast %299 : vector<1x64xf32> to vector<16x64xf32>
    %301 = arith.mulf %298, %300 : vector<16x64xf32>
    %302 = arith.addf %296, %301 : vector<16x64xf32>
    %c0_202 = arith.constant 0 : index
    %c2_203 = arith.constant 2 : index
    %c6_204 = arith.constant 6 : index
    %303 = vector.load %arg1[%c0_202, %c2_203, %c6_204] : memref<1x18x80xf32, #tpu.memory_space<vmem>>, vector<1x16x64xf32>
    %304 = vector.shape_cast %303 : vector<1x16x64xf32> to vector<16x64xf32>
    %c50 = arith.constant 50 : index
    %c0_205 = arith.constant 0 : index
    %305 = vector.load %arg2[%c50, %c0_205] : memref<63x64xf32, #tpu.memory_space<vmem>>, vector<1x64xf32>
    %306 = vector.broadcast %305 : vector<1x64xf32> to vector<16x64xf32>
    %307 = arith.mulf %304, %306 : vector<16x64xf32>
    %308 = arith.addf %302, %307 : vector<16x64xf32>
    %c0_206 = arith.constant 0 : index
    %c2_207 = arith.constant 2 : index
    %c7_208 = arith.constant 7 : index
    %309 = vector.load %arg1[%c0_206, %c2_207, %c7_208] : memref<1x18x80xf32, #tpu.memory_space<vmem>>, vector<1x16x64xf32>
    %310 = vector.shape_cast %309 : vector<1x16x64xf32> to vector<16x64xf32>
    %c51 = arith.constant 51 : index
    %c0_209 = arith.constant 0 : index
    %311 = vector.load %arg2[%c51, %c0_209] : memref<63x64xf32, #tpu.memory_space<vmem>>, vector<1x64xf32>
    %312 = vector.broadcast %311 : vector<1x64xf32> to vector<16x64xf32>
    %313 = arith.mulf %310, %312 : vector<16x64xf32>
    %314 = arith.addf %308, %313 : vector<16x64xf32>
    %c0_210 = arith.constant 0 : index
    %c2_211 = arith.constant 2 : index
    %c8_212 = arith.constant 8 : index
    %315 = vector.load %arg1[%c0_210, %c2_211, %c8_212] : memref<1x18x80xf32, #tpu.memory_space<vmem>>, vector<1x16x64xf32>
    %316 = vector.shape_cast %315 : vector<1x16x64xf32> to vector<16x64xf32>
    %c52 = arith.constant 52 : index
    %c0_213 = arith.constant 0 : index
    %317 = vector.load %arg2[%c52, %c0_213] : memref<63x64xf32, #tpu.memory_space<vmem>>, vector<1x64xf32>
    %318 = vector.broadcast %317 : vector<1x64xf32> to vector<16x64xf32>
    %319 = arith.mulf %316, %318 : vector<16x64xf32>
    %320 = arith.addf %314, %319 : vector<16x64xf32>
    %c0_214 = arith.constant 0 : index
    %c2_215 = arith.constant 2 : index
    %c9_216 = arith.constant 9 : index
    %321 = vector.load %arg1[%c0_214, %c2_215, %c9_216] : memref<1x18x80xf32, #tpu.memory_space<vmem>>, vector<1x16x64xf32>
    %322 = vector.shape_cast %321 : vector<1x16x64xf32> to vector<16x64xf32>
    %c53 = arith.constant 53 : index
    %c0_217 = arith.constant 0 : index
    %323 = vector.load %arg2[%c53, %c0_217] : memref<63x64xf32, #tpu.memory_space<vmem>>, vector<1x64xf32>
    %324 = vector.broadcast %323 : vector<1x64xf32> to vector<16x64xf32>
    %325 = arith.mulf %322, %324 : vector<16x64xf32>
    %326 = arith.addf %320, %325 : vector<16x64xf32>
    %c0_218 = arith.constant 0 : index
    %c2_219 = arith.constant 2 : index
    %c10_220 = arith.constant 10 : index
    %327 = vector.load %arg1[%c0_218, %c2_219, %c10_220] : memref<1x18x80xf32, #tpu.memory_space<vmem>>, vector<1x16x64xf32>
    %328 = vector.shape_cast %327 : vector<1x16x64xf32> to vector<16x64xf32>
    %c54 = arith.constant 54 : index
    %c0_221 = arith.constant 0 : index
    %329 = vector.load %arg2[%c54, %c0_221] : memref<63x64xf32, #tpu.memory_space<vmem>>, vector<1x64xf32>
    %330 = vector.broadcast %329 : vector<1x64xf32> to vector<16x64xf32>
    %331 = arith.mulf %328, %330 : vector<16x64xf32>
    %332 = arith.addf %326, %331 : vector<16x64xf32>
    %c0_222 = arith.constant 0 : index
    %c2_223 = arith.constant 2 : index
    %c11_224 = arith.constant 11 : index
    %333 = vector.load %arg1[%c0_222, %c2_223, %c11_224] : memref<1x18x80xf32, #tpu.memory_space<vmem>>, vector<1x16x64xf32>
    %334 = vector.shape_cast %333 : vector<1x16x64xf32> to vector<16x64xf32>
    %c55 = arith.constant 55 : index
    %c0_225 = arith.constant 0 : index
    %335 = vector.load %arg2[%c55, %c0_225] : memref<63x64xf32, #tpu.memory_space<vmem>>, vector<1x64xf32>
    %336 = vector.broadcast %335 : vector<1x64xf32> to vector<16x64xf32>
    %337 = arith.mulf %334, %336 : vector<16x64xf32>
    %338 = arith.addf %332, %337 : vector<16x64xf32>
    %c0_226 = arith.constant 0 : index
    %c2_227 = arith.constant 2 : index
    %c9_228 = arith.constant 9 : index
    %339 = vector.load %arg1[%c0_226, %c2_227, %c9_228] : memref<1x18x80xf32, #tpu.memory_space<vmem>>, vector<1x16x64xf32>
    %340 = vector.shape_cast %339 : vector<1x16x64xf32> to vector<16x64xf32>
    %c56 = arith.constant 56 : index
    %c0_229 = arith.constant 0 : index
    %341 = vector.load %arg2[%c56, %c0_229] : memref<63x64xf32, #tpu.memory_space<vmem>>, vector<1x64xf32>
    %342 = vector.broadcast %341 : vector<1x64xf32> to vector<16x64xf32>
    %343 = arith.mulf %340, %342 : vector<16x64xf32>
    %344 = arith.addf %338, %343 : vector<16x64xf32>
    %c0_230 = arith.constant 0 : index
    %c2_231 = arith.constant 2 : index
    %c10_232 = arith.constant 10 : index
    %345 = vector.load %arg1[%c0_230, %c2_231, %c10_232] : memref<1x18x80xf32, #tpu.memory_space<vmem>>, vector<1x16x64xf32>
    %346 = vector.shape_cast %345 : vector<1x16x64xf32> to vector<16x64xf32>
    %c57 = arith.constant 57 : index
    %c0_233 = arith.constant 0 : index
    %347 = vector.load %arg2[%c57, %c0_233] : memref<63x64xf32, #tpu.memory_space<vmem>>, vector<1x64xf32>
    %348 = vector.broadcast %347 : vector<1x64xf32> to vector<16x64xf32>
    %349 = arith.mulf %346, %348 : vector<16x64xf32>
    %350 = arith.addf %344, %349 : vector<16x64xf32>
    %c0_234 = arith.constant 0 : index
    %c2_235 = arith.constant 2 : index
    %c11_236 = arith.constant 11 : index
    %351 = vector.load %arg1[%c0_234, %c2_235, %c11_236] : memref<1x18x80xf32, #tpu.memory_space<vmem>>, vector<1x16x64xf32>
    %352 = vector.shape_cast %351 : vector<1x16x64xf32> to vector<16x64xf32>
    %c58 = arith.constant 58 : index
    %c0_237 = arith.constant 0 : index
    %353 = vector.load %arg2[%c58, %c0_237] : memref<63x64xf32, #tpu.memory_space<vmem>>, vector<1x64xf32>
    %354 = vector.broadcast %353 : vector<1x64xf32> to vector<16x64xf32>
    %355 = arith.mulf %352, %354 : vector<16x64xf32>
    %356 = arith.addf %350, %355 : vector<16x64xf32>
    %c0_238 = arith.constant 0 : index
    %c2_239 = arith.constant 2 : index
    %c12_240 = arith.constant 12 : index
    %357 = vector.load %arg1[%c0_238, %c2_239, %c12_240] : memref<1x18x80xf32, #tpu.memory_space<vmem>>, vector<1x16x64xf32>
    %358 = vector.shape_cast %357 : vector<1x16x64xf32> to vector<16x64xf32>
    %c59 = arith.constant 59 : index
    %c0_241 = arith.constant 0 : index
    %359 = vector.load %arg2[%c59, %c0_241] : memref<63x64xf32, #tpu.memory_space<vmem>>, vector<1x64xf32>
    %360 = vector.broadcast %359 : vector<1x64xf32> to vector<16x64xf32>
    %361 = arith.mulf %358, %360 : vector<16x64xf32>
    %362 = arith.addf %356, %361 : vector<16x64xf32>
    %c0_242 = arith.constant 0 : index
    %c2_243 = arith.constant 2 : index
    %c13_244 = arith.constant 13 : index
    %363 = vector.load %arg1[%c0_242, %c2_243, %c13_244] : memref<1x18x80xf32, #tpu.memory_space<vmem>>, vector<1x16x64xf32>
    %364 = vector.shape_cast %363 : vector<1x16x64xf32> to vector<16x64xf32>
    %c60 = arith.constant 60 : index
    %c0_245 = arith.constant 0 : index
    %365 = vector.load %arg2[%c60, %c0_245] : memref<63x64xf32, #tpu.memory_space<vmem>>, vector<1x64xf32>
    %366 = vector.broadcast %365 : vector<1x64xf32> to vector<16x64xf32>
    %367 = arith.mulf %364, %366 : vector<16x64xf32>
    %368 = arith.addf %362, %367 : vector<16x64xf32>
    %c0_246 = arith.constant 0 : index
    %c2_247 = arith.constant 2 : index
    %c14_248 = arith.constant 14 : index
    %369 = vector.load %arg1[%c0_246, %c2_247, %c14_248] : memref<1x18x80xf32, #tpu.memory_space<vmem>>, vector<1x16x64xf32>
    %370 = vector.shape_cast %369 : vector<1x16x64xf32> to vector<16x64xf32>
    %c61 = arith.constant 61 : index
    %c0_249 = arith.constant 0 : index
    %371 = vector.load %arg2[%c61, %c0_249] : memref<63x64xf32, #tpu.memory_space<vmem>>, vector<1x64xf32>
    %372 = vector.broadcast %371 : vector<1x64xf32> to vector<16x64xf32>
    %373 = arith.mulf %370, %372 : vector<16x64xf32>
    %374 = arith.addf %368, %373 : vector<16x64xf32>
    %c0_250 = arith.constant 0 : index
    %c2_251 = arith.constant 2 : index
    %c15_252 = arith.constant 15 : index
    %375 = vector.load %arg1[%c0_250, %c2_251, %c15_252] : memref<1x18x80xf32, #tpu.memory_space<vmem>>, vector<1x16x64xf32>
    %376 = vector.shape_cast %375 : vector<1x16x64xf32> to vector<16x64xf32>
    %c62 = arith.constant 62 : index
    %c0_253 = arith.constant 0 : index
    %377 = vector.load %arg2[%c62, %c0_253] : memref<63x64xf32, #tpu.memory_space<vmem>>, vector<1x64xf32>
    %378 = vector.broadcast %377 : vector<1x64xf32> to vector<16x64xf32>
    %379 = arith.mulf %376, %378 : vector<16x64xf32>
    %380 = arith.addf %374, %379 : vector<16x64xf32>
    %cst = arith.constant 0.000000e+00 : f32
    %381 = vector.broadcast %cst : f32 to vector<16x64xf32>
    %382 = arith.maximumf %380, %381 : vector<16x64xf32>
    %cst_254 = arith.constant 0.000000e+00 : f32
    %383 = vector.broadcast %cst_254 : f32 to vector<1x64xf32>
    %384 = tpu.concatenate %383, %382, %383 in 0 : vector<1x64xf32>, vector<16x64xf32>, vector<1x64xf32> -> vector<18x64xf32>
    %cst_255 = arith.constant 0.000000e+00 : f32
    %385 = vector.broadcast %cst_255 : f32 to vector<18x8xf32>
    %386 = tpu.concatenate %385, %384, %385 in 1 : vector<18x8xf32>, vector<18x64xf32>, vector<18x8xf32> -> vector<18x80xf32>
    %c0_256 = arith.constant 0 : index
    %c0_257 = arith.constant 0 : index
    %387 = vector.load %arg5[%c0_256, %c0_257] : memref<1x64xf32, #tpu.memory_space<vmem>>, vector<1x64xf32>
    %388 = vector.shape_cast %387 : vector<1x64xf32> to vector<1x64xf32>
    %389 = vector.broadcast %388 : vector<1x64xf32> to vector<16x64xf32>
    %390 = vector.extract_strided_slice %386 {offsets = [0, 1], sizes = [16, 64], strides = [1, 1]} : vector<18x80xf32> to vector<16x64xf32>
    %c0_258 = arith.constant 0 : index
    %c0_259 = arith.constant 0 : index
    %391 = vector.load %arg4[%c0_258, %c0_259] : memref<63x64xf32, #tpu.memory_space<vmem>>, vector<1x64xf32>
    %392 = vector.broadcast %391 : vector<1x64xf32> to vector<16x64xf32>
    %393 = arith.mulf %390, %392 : vector<16x64xf32>
    %394 = arith.addf %389, %393 : vector<16x64xf32>
    %395 = vector.extract_strided_slice %386 {offsets = [0, 2], sizes = [16, 64], strides = [1, 1]} : vector<18x80xf32> to vector<16x64xf32>
    %c1_260 = arith.constant 1 : index
    %c0_261 = arith.constant 0 : index
    %396 = vector.load %arg4[%c1_260, %c0_261] : memref<63x64xf32, #tpu.memory_space<vmem>>, vector<1x64xf32>
    %397 = vector.broadcast %396 : vector<1x64xf32> to vector<16x64xf32>
    %398 = arith.mulf %395, %397 : vector<16x64xf32>
    %399 = arith.addf %394, %398 : vector<16x64xf32>
    %400 = vector.extract_strided_slice %386 {offsets = [0, 3], sizes = [16, 64], strides = [1, 1]} : vector<18x80xf32> to vector<16x64xf32>
    %c2_262 = arith.constant 2 : index
    %c0_263 = arith.constant 0 : index
    %401 = vector.load %arg4[%c2_262, %c0_263] : memref<63x64xf32, #tpu.memory_space<vmem>>, vector<1x64xf32>
    %402 = vector.broadcast %401 : vector<1x64xf32> to vector<16x64xf32>
    %403 = arith.mulf %400, %402 : vector<16x64xf32>
    %404 = arith.addf %399, %403 : vector<16x64xf32>
    %405 = vector.extract_strided_slice %386 {offsets = [0, 4], sizes = [16, 64], strides = [1, 1]} : vector<18x80xf32> to vector<16x64xf32>
    %c3_264 = arith.constant 3 : index
    %c0_265 = arith.constant 0 : index
    %406 = vector.load %arg4[%c3_264, %c0_265] : memref<63x64xf32, #tpu.memory_space<vmem>>, vector<1x64xf32>
    %407 = vector.broadcast %406 : vector<1x64xf32> to vector<16x64xf32>
    %408 = arith.mulf %405, %407 : vector<16x64xf32>
    %409 = arith.addf %404, %408 : vector<16x64xf32>
    %410 = vector.extract_strided_slice %386 {offsets = [0, 5], sizes = [16, 64], strides = [1, 1]} : vector<18x80xf32> to vector<16x64xf32>
    %c4_266 = arith.constant 4 : index
    %c0_267 = arith.constant 0 : index
    %411 = vector.load %arg4[%c4_266, %c0_267] : memref<63x64xf32, #tpu.memory_space<vmem>>, vector<1x64xf32>
    %412 = vector.broadcast %411 : vector<1x64xf32> to vector<16x64xf32>
    %413 = arith.mulf %410, %412 : vector<16x64xf32>
    %414 = arith.addf %409, %413 : vector<16x64xf32>
    %415 = vector.extract_strided_slice %386 {offsets = [0, 6], sizes = [16, 64], strides = [1, 1]} : vector<18x80xf32> to vector<16x64xf32>
    %c5_268 = arith.constant 5 : index
    %c0_269 = arith.constant 0 : index
    %416 = vector.load %arg4[%c5_268, %c0_269] : memref<63x64xf32, #tpu.memory_space<vmem>>, vector<1x64xf32>
    %417 = vector.broadcast %416 : vector<1x64xf32> to vector<16x64xf32>
    %418 = arith.mulf %415, %417 : vector<16x64xf32>
    %419 = arith.addf %414, %418 : vector<16x64xf32>
    %420 = vector.extract_strided_slice %386 {offsets = [0, 7], sizes = [16, 64], strides = [1, 1]} : vector<18x80xf32> to vector<16x64xf32>
    %c6_270 = arith.constant 6 : index
    %c0_271 = arith.constant 0 : index
    %421 = vector.load %arg4[%c6_270, %c0_271] : memref<63x64xf32, #tpu.memory_space<vmem>>, vector<1x64xf32>
    %422 = vector.broadcast %421 : vector<1x64xf32> to vector<16x64xf32>
    %423 = arith.mulf %420, %422 : vector<16x64xf32>
    %424 = arith.addf %419, %423 : vector<16x64xf32>
    %425 = vector.extract_strided_slice %386 {offsets = [0, 5], sizes = [16, 64], strides = [1, 1]} : vector<18x80xf32> to vector<16x64xf32>
    %c7_272 = arith.constant 7 : index
    %c0_273 = arith.constant 0 : index
    %426 = vector.load %arg4[%c7_272, %c0_273] : memref<63x64xf32, #tpu.memory_space<vmem>>, vector<1x64xf32>
    %427 = vector.broadcast %426 : vector<1x64xf32> to vector<16x64xf32>
    %428 = arith.mulf %425, %427 : vector<16x64xf32>
    %429 = arith.addf %424, %428 : vector<16x64xf32>
    %430 = vector.extract_strided_slice %386 {offsets = [0, 6], sizes = [16, 64], strides = [1, 1]} : vector<18x80xf32> to vector<16x64xf32>
    %c8_274 = arith.constant 8 : index
    %c0_275 = arith.constant 0 : index
    %431 = vector.load %arg4[%c8_274, %c0_275] : memref<63x64xf32, #tpu.memory_space<vmem>>, vector<1x64xf32>
    %432 = vector.broadcast %431 : vector<1x64xf32> to vector<16x64xf32>
    %433 = arith.mulf %430, %432 : vector<16x64xf32>
    %434 = arith.addf %429, %433 : vector<16x64xf32>
    %435 = vector.extract_strided_slice %386 {offsets = [0, 7], sizes = [16, 64], strides = [1, 1]} : vector<18x80xf32> to vector<16x64xf32>
    %c9_276 = arith.constant 9 : index
    %c0_277 = arith.constant 0 : index
    %436 = vector.load %arg4[%c9_276, %c0_277] : memref<63x64xf32, #tpu.memory_space<vmem>>, vector<1x64xf32>
    %437 = vector.broadcast %436 : vector<1x64xf32> to vector<16x64xf32>
    %438 = arith.mulf %435, %437 : vector<16x64xf32>
    %439 = arith.addf %434, %438 : vector<16x64xf32>
    %440 = vector.extract_strided_slice %386 {offsets = [0, 8], sizes = [16, 64], strides = [1, 1]} : vector<18x80xf32> to vector<16x64xf32>
    %c10_278 = arith.constant 10 : index
    %c0_279 = arith.constant 0 : index
    %441 = vector.load %arg4[%c10_278, %c0_279] : memref<63x64xf32, #tpu.memory_space<vmem>>, vector<1x64xf32>
    %442 = vector.broadcast %441 : vector<1x64xf32> to vector<16x64xf32>
    %443 = arith.mulf %440, %442 : vector<16x64xf32>
    %444 = arith.addf %439, %443 : vector<16x64xf32>
    %445 = vector.extract_strided_slice %386 {offsets = [0, 9], sizes = [16, 64], strides = [1, 1]} : vector<18x80xf32> to vector<16x64xf32>
    %c11_280 = arith.constant 11 : index
    %c0_281 = arith.constant 0 : index
    %446 = vector.load %arg4[%c11_280, %c0_281] : memref<63x64xf32, #tpu.memory_space<vmem>>, vector<1x64xf32>
    %447 = vector.broadcast %446 : vector<1x64xf32> to vector<16x64xf32>
    %448 = arith.mulf %445, %447 : vector<16x64xf32>
    %449 = arith.addf %444, %448 : vector<16x64xf32>
    %450 = vector.extract_strided_slice %386 {offsets = [0, 10], sizes = [16, 64], strides = [1, 1]} : vector<18x80xf32> to vector<16x64xf32>
    %c12_282 = arith.constant 12 : index
    %c0_283 = arith.constant 0 : index
    %451 = vector.load %arg4[%c12_282, %c0_283] : memref<63x64xf32, #tpu.memory_space<vmem>>, vector<1x64xf32>
    %452 = vector.broadcast %451 : vector<1x64xf32> to vector<16x64xf32>
    %453 = arith.mulf %450, %452 : vector<16x64xf32>
    %454 = arith.addf %449, %453 : vector<16x64xf32>
    %455 = vector.extract_strided_slice %386 {offsets = [0, 11], sizes = [16, 64], strides = [1, 1]} : vector<18x80xf32> to vector<16x64xf32>
    %c13_284 = arith.constant 13 : index
    %c0_285 = arith.constant 0 : index
    %456 = vector.load %arg4[%c13_284, %c0_285] : memref<63x64xf32, #tpu.memory_space<vmem>>, vector<1x64xf32>
    %457 = vector.broadcast %456 : vector<1x64xf32> to vector<16x64xf32>
    %458 = arith.mulf %455, %457 : vector<16x64xf32>
    %459 = arith.addf %454, %458 : vector<16x64xf32>
    %460 = vector.extract_strided_slice %386 {offsets = [0, 9], sizes = [16, 64], strides = [1, 1]} : vector<18x80xf32> to vector<16x64xf32>
    %c14_286 = arith.constant 14 : index
    %c0_287 = arith.constant 0 : index
    %461 = vector.load %arg4[%c14_286, %c0_287] : memref<63x64xf32, #tpu.memory_space<vmem>>, vector<1x64xf32>
    %462 = vector.broadcast %461 : vector<1x64xf32> to vector<16x64xf32>
    %463 = arith.mulf %460, %462 : vector<16x64xf32>
    %464 = arith.addf %459, %463 : vector<16x64xf32>
    %465 = vector.extract_strided_slice %386 {offsets = [0, 10], sizes = [16, 64], strides = [1, 1]} : vector<18x80xf32> to vector<16x64xf32>
    %c15_288 = arith.constant 15 : index
    %c0_289 = arith.constant 0 : index
    %466 = vector.load %arg4[%c15_288, %c0_289] : memref<63x64xf32, #tpu.memory_space<vmem>>, vector<1x64xf32>
    %467 = vector.broadcast %466 : vector<1x64xf32> to vector<16x64xf32>
    %468 = arith.mulf %465, %467 : vector<16x64xf32>
    %469 = arith.addf %464, %468 : vector<16x64xf32>
    %470 = vector.extract_strided_slice %386 {offsets = [0, 11], sizes = [16, 64], strides = [1, 1]} : vector<18x80xf32> to vector<16x64xf32>
    %c16_290 = arith.constant 16 : index
    %c0_291 = arith.constant 0 : index
    %471 = vector.load %arg4[%c16_290, %c0_291] : memref<63x64xf32, #tpu.memory_space<vmem>>, vector<1x64xf32>
    %472 = vector.broadcast %471 : vector<1x64xf32> to vector<16x64xf32>
    %473 = arith.mulf %470, %472 : vector<16x64xf32>
    %474 = arith.addf %469, %473 : vector<16x64xf32>
    %475 = vector.extract_strided_slice %386 {offsets = [0, 12], sizes = [16, 64], strides = [1, 1]} : vector<18x80xf32> to vector<16x64xf32>
    %c17_292 = arith.constant 17 : index
    %c0_293 = arith.constant 0 : index
    %476 = vector.load %arg4[%c17_292, %c0_293] : memref<63x64xf32, #tpu.memory_space<vmem>>, vector<1x64xf32>
    %477 = vector.broadcast %476 : vector<1x64xf32> to vector<16x64xf32>
    %478 = arith.mulf %475, %477 : vector<16x64xf32>
    %479 = arith.addf %474, %478 : vector<16x64xf32>
    %480 = vector.extract_strided_slice %386 {offsets = [0, 13], sizes = [16, 64], strides = [1, 1]} : vector<18x80xf32> to vector<16x64xf32>
    %c18_294 = arith.constant 18 : index
    %c0_295 = arith.constant 0 : index
    %481 = vector.load %arg4[%c18_294, %c0_295] : memref<63x64xf32, #tpu.memory_space<vmem>>, vector<1x64xf32>
    %482 = vector.broadcast %481 : vector<1x64xf32> to vector<16x64xf32>
    %483 = arith.mulf %480, %482 : vector<16x64xf32>
    %484 = arith.addf %479, %483 : vector<16x64xf32>
    %485 = vector.extract_strided_slice %386 {offsets = [0, 14], sizes = [16, 64], strides = [1, 1]} : vector<18x80xf32> to vector<16x64xf32>
    %c19_296 = arith.constant 19 : index
    %c0_297 = arith.constant 0 : index
    %486 = vector.load %arg4[%c19_296, %c0_297] : memref<63x64xf32, #tpu.memory_space<vmem>>, vector<1x64xf32>
    %487 = vector.broadcast %486 : vector<1x64xf32> to vector<16x64xf32>
    %488 = arith.mulf %485, %487 : vector<16x64xf32>
    %489 = arith.addf %484, %488 : vector<16x64xf32>
    %490 = vector.extract_strided_slice %386 {offsets = [0, 15], sizes = [16, 64], strides = [1, 1]} : vector<18x80xf32> to vector<16x64xf32>
    %c20_298 = arith.constant 20 : index
    %c0_299 = arith.constant 0 : index
    %491 = vector.load %arg4[%c20_298, %c0_299] : memref<63x64xf32, #tpu.memory_space<vmem>>, vector<1x64xf32>
    %492 = vector.broadcast %491 : vector<1x64xf32> to vector<16x64xf32>
    %493 = arith.mulf %490, %492 : vector<16x64xf32>
    %494 = arith.addf %489, %493 : vector<16x64xf32>
    %495 = vector.extract_strided_slice %386 {offsets = [1, 1], sizes = [16, 64], strides = [1, 1]} : vector<18x80xf32> to vector<16x64xf32>
    %c21_300 = arith.constant 21 : index
    %c0_301 = arith.constant 0 : index
    %496 = vector.load %arg4[%c21_300, %c0_301] : memref<63x64xf32, #tpu.memory_space<vmem>>, vector<1x64xf32>
    %497 = vector.broadcast %496 : vector<1x64xf32> to vector<16x64xf32>
    %498 = arith.mulf %495, %497 : vector<16x64xf32>
    %499 = arith.addf %494, %498 : vector<16x64xf32>
    %500 = vector.extract_strided_slice %386 {offsets = [1, 2], sizes = [16, 64], strides = [1, 1]} : vector<18x80xf32> to vector<16x64xf32>
    %c22_302 = arith.constant 22 : index
    %c0_303 = arith.constant 0 : index
    %501 = vector.load %arg4[%c22_302, %c0_303] : memref<63x64xf32, #tpu.memory_space<vmem>>, vector<1x64xf32>
    %502 = vector.broadcast %501 : vector<1x64xf32> to vector<16x64xf32>
    %503 = arith.mulf %500, %502 : vector<16x64xf32>
    %504 = arith.addf %499, %503 : vector<16x64xf32>
    %505 = vector.extract_strided_slice %386 {offsets = [1, 3], sizes = [16, 64], strides = [1, 1]} : vector<18x80xf32> to vector<16x64xf32>
    %c23_304 = arith.constant 23 : index
    %c0_305 = arith.constant 0 : index
    %506 = vector.load %arg4[%c23_304, %c0_305] : memref<63x64xf32, #tpu.memory_space<vmem>>, vector<1x64xf32>
    %507 = vector.broadcast %506 : vector<1x64xf32> to vector<16x64xf32>
    %508 = arith.mulf %505, %507 : vector<16x64xf32>
    %509 = arith.addf %504, %508 : vector<16x64xf32>
    %510 = vector.extract_strided_slice %386 {offsets = [1, 4], sizes = [16, 64], strides = [1, 1]} : vector<18x80xf32> to vector<16x64xf32>
    %c24_306 = arith.constant 24 : index
    %c0_307 = arith.constant 0 : index
    %511 = vector.load %arg4[%c24_306, %c0_307] : memref<63x64xf32, #tpu.memory_space<vmem>>, vector<1x64xf32>
    %512 = vector.broadcast %511 : vector<1x64xf32> to vector<16x64xf32>
    %513 = arith.mulf %510, %512 : vector<16x64xf32>
    %514 = arith.addf %509, %513 : vector<16x64xf32>
    %515 = vector.extract_strided_slice %386 {offsets = [1, 5], sizes = [16, 64], strides = [1, 1]} : vector<18x80xf32> to vector<16x64xf32>
    %c25_308 = arith.constant 25 : index
    %c0_309 = arith.constant 0 : index
    %516 = vector.load %arg4[%c25_308, %c0_309] : memref<63x64xf32, #tpu.memory_space<vmem>>, vector<1x64xf32>
    %517 = vector.broadcast %516 : vector<1x64xf32> to vector<16x64xf32>
    %518 = arith.mulf %515, %517 : vector<16x64xf32>
    %519 = arith.addf %514, %518 : vector<16x64xf32>
    %520 = vector.extract_strided_slice %386 {offsets = [1, 6], sizes = [16, 64], strides = [1, 1]} : vector<18x80xf32> to vector<16x64xf32>
    %c26_310 = arith.constant 26 : index
    %c0_311 = arith.constant 0 : index
    %521 = vector.load %arg4[%c26_310, %c0_311] : memref<63x64xf32, #tpu.memory_space<vmem>>, vector<1x64xf32>
    %522 = vector.broadcast %521 : vector<1x64xf32> to vector<16x64xf32>
    %523 = arith.mulf %520, %522 : vector<16x64xf32>
    %524 = arith.addf %519, %523 : vector<16x64xf32>
    %525 = vector.extract_strided_slice %386 {offsets = [1, 7], sizes = [16, 64], strides = [1, 1]} : vector<18x80xf32> to vector<16x64xf32>
    %c27_312 = arith.constant 27 : index
    %c0_313 = arith.constant 0 : index
    %526 = vector.load %arg4[%c27_312, %c0_313] : memref<63x64xf32, #tpu.memory_space<vmem>>, vector<1x64xf32>
    %527 = vector.broadcast %526 : vector<1x64xf32> to vector<16x64xf32>
    %528 = arith.mulf %525, %527 : vector<16x64xf32>
    %529 = arith.addf %524, %528 : vector<16x64xf32>
    %530 = vector.extract_strided_slice %386 {offsets = [1, 5], sizes = [16, 64], strides = [1, 1]} : vector<18x80xf32> to vector<16x64xf32>
    %c28_314 = arith.constant 28 : index
    %c0_315 = arith.constant 0 : index
    %531 = vector.load %arg4[%c28_314, %c0_315] : memref<63x64xf32, #tpu.memory_space<vmem>>, vector<1x64xf32>
    %532 = vector.broadcast %531 : vector<1x64xf32> to vector<16x64xf32>
    %533 = arith.mulf %530, %532 : vector<16x64xf32>
    %534 = arith.addf %529, %533 : vector<16x64xf32>
    %535 = vector.extract_strided_slice %386 {offsets = [1, 6], sizes = [16, 64], strides = [1, 1]} : vector<18x80xf32> to vector<16x64xf32>
    %c29_316 = arith.constant 29 : index
    %c0_317 = arith.constant 0 : index
    %536 = vector.load %arg4[%c29_316, %c0_317] : memref<63x64xf32, #tpu.memory_space<vmem>>, vector<1x64xf32>
    %537 = vector.broadcast %536 : vector<1x64xf32> to vector<16x64xf32>
    %538 = arith.mulf %535, %537 : vector<16x64xf32>
    %539 = arith.addf %534, %538 : vector<16x64xf32>
    %540 = vector.extract_strided_slice %386 {offsets = [1, 7], sizes = [16, 64], strides = [1, 1]} : vector<18x80xf32> to vector<16x64xf32>
    %c30_318 = arith.constant 30 : index
    %c0_319 = arith.constant 0 : index
    %541 = vector.load %arg4[%c30_318, %c0_319] : memref<63x64xf32, #tpu.memory_space<vmem>>, vector<1x64xf32>
    %542 = vector.broadcast %541 : vector<1x64xf32> to vector<16x64xf32>
    %543 = arith.mulf %540, %542 : vector<16x64xf32>
    %544 = arith.addf %539, %543 : vector<16x64xf32>
    %545 = vector.extract_strided_slice %386 {offsets = [1, 8], sizes = [16, 64], strides = [1, 1]} : vector<18x80xf32> to vector<16x64xf32>
    %c31_320 = arith.constant 31 : index
    %c0_321 = arith.constant 0 : index
    %546 = vector.load %arg4[%c31_320, %c0_321] : memref<63x64xf32, #tpu.memory_space<vmem>>, vector<1x64xf32>
    %547 = vector.broadcast %546 : vector<1x64xf32> to vector<16x64xf32>
    %548 = arith.mulf %545, %547 : vector<16x64xf32>
    %549 = arith.addf %544, %548 : vector<16x64xf32>
    %550 = vector.extract_strided_slice %386 {offsets = [1, 9], sizes = [16, 64], strides = [1, 1]} : vector<18x80xf32> to vector<16x64xf32>
    %c32_322 = arith.constant 32 : index
    %c0_323 = arith.constant 0 : index
    %551 = vector.load %arg4[%c32_322, %c0_323] : memref<63x64xf32, #tpu.memory_space<vmem>>, vector<1x64xf32>
    %552 = vector.broadcast %551 : vector<1x64xf32> to vector<16x64xf32>
    %553 = arith.mulf %550, %552 : vector<16x64xf32>
    %554 = arith.addf %549, %553 : vector<16x64xf32>
    %555 = vector.extract_strided_slice %386 {offsets = [1, 10], sizes = [16, 64], strides = [1, 1]} : vector<18x80xf32> to vector<16x64xf32>
    %c33_324 = arith.constant 33 : index
    %c0_325 = arith.constant 0 : index
    %556 = vector.load %arg4[%c33_324, %c0_325] : memref<63x64xf32, #tpu.memory_space<vmem>>, vector<1x64xf32>
    %557 = vector.broadcast %556 : vector<1x64xf32> to vector<16x64xf32>
    %558 = arith.mulf %555, %557 : vector<16x64xf32>
    %559 = arith.addf %554, %558 : vector<16x64xf32>
    %560 = vector.extract_strided_slice %386 {offsets = [1, 11], sizes = [16, 64], strides = [1, 1]} : vector<18x80xf32> to vector<16x64xf32>
    %c34_326 = arith.constant 34 : index
    %c0_327 = arith.constant 0 : index
    %561 = vector.load %arg4[%c34_326, %c0_327] : memref<63x64xf32, #tpu.memory_space<vmem>>, vector<1x64xf32>
    %562 = vector.broadcast %561 : vector<1x64xf32> to vector<16x64xf32>
    %563 = arith.mulf %560, %562 : vector<16x64xf32>
    %564 = arith.addf %559, %563 : vector<16x64xf32>
    %565 = vector.extract_strided_slice %386 {offsets = [1, 9], sizes = [16, 64], strides = [1, 1]} : vector<18x80xf32> to vector<16x64xf32>
    %c35_328 = arith.constant 35 : index
    %c0_329 = arith.constant 0 : index
    %566 = vector.load %arg4[%c35_328, %c0_329] : memref<63x64xf32, #tpu.memory_space<vmem>>, vector<1x64xf32>
    %567 = vector.broadcast %566 : vector<1x64xf32> to vector<16x64xf32>
    %568 = arith.mulf %565, %567 : vector<16x64xf32>
    %569 = arith.addf %564, %568 : vector<16x64xf32>
    %570 = vector.extract_strided_slice %386 {offsets = [1, 10], sizes = [16, 64], strides = [1, 1]} : vector<18x80xf32> to vector<16x64xf32>
    %c36_330 = arith.constant 36 : index
    %c0_331 = arith.constant 0 : index
    %571 = vector.load %arg4[%c36_330, %c0_331] : memref<63x64xf32, #tpu.memory_space<vmem>>, vector<1x64xf32>
    %572 = vector.broadcast %571 : vector<1x64xf32> to vector<16x64xf32>
    %573 = arith.mulf %570, %572 : vector<16x64xf32>
    %574 = arith.addf %569, %573 : vector<16x64xf32>
    %575 = vector.extract_strided_slice %386 {offsets = [1, 11], sizes = [16, 64], strides = [1, 1]} : vector<18x80xf32> to vector<16x64xf32>
    %c37_332 = arith.constant 37 : index
    %c0_333 = arith.constant 0 : index
    %576 = vector.load %arg4[%c37_332, %c0_333] : memref<63x64xf32, #tpu.memory_space<vmem>>, vector<1x64xf32>
    %577 = vector.broadcast %576 : vector<1x64xf32> to vector<16x64xf32>
    %578 = arith.mulf %575, %577 : vector<16x64xf32>
    %579 = arith.addf %574, %578 : vector<16x64xf32>
    %580 = vector.extract_strided_slice %386 {offsets = [1, 12], sizes = [16, 64], strides = [1, 1]} : vector<18x80xf32> to vector<16x64xf32>
    %c38_334 = arith.constant 38 : index
    %c0_335 = arith.constant 0 : index
    %581 = vector.load %arg4[%c38_334, %c0_335] : memref<63x64xf32, #tpu.memory_space<vmem>>, vector<1x64xf32>
    %582 = vector.broadcast %581 : vector<1x64xf32> to vector<16x64xf32>
    %583 = arith.mulf %580, %582 : vector<16x64xf32>
    %584 = arith.addf %579, %583 : vector<16x64xf32>
    %585 = vector.extract_strided_slice %386 {offsets = [1, 13], sizes = [16, 64], strides = [1, 1]} : vector<18x80xf32> to vector<16x64xf32>
    %c39_336 = arith.constant 39 : index
    %c0_337 = arith.constant 0 : index
    %586 = vector.load %arg4[%c39_336, %c0_337] : memref<63x64xf32, #tpu.memory_space<vmem>>, vector<1x64xf32>
    %587 = vector.broadcast %586 : vector<1x64xf32> to vector<16x64xf32>
    %588 = arith.mulf %585, %587 : vector<16x64xf32>
    %589 = arith.addf %584, %588 : vector<16x64xf32>
    %590 = vector.extract_strided_slice %386 {offsets = [1, 14], sizes = [16, 64], strides = [1, 1]} : vector<18x80xf32> to vector<16x64xf32>
    %c40_338 = arith.constant 40 : index
    %c0_339 = arith.constant 0 : index
    %591 = vector.load %arg4[%c40_338, %c0_339] : memref<63x64xf32, #tpu.memory_space<vmem>>, vector<1x64xf32>
    %592 = vector.broadcast %591 : vector<1x64xf32> to vector<16x64xf32>
    %593 = arith.mulf %590, %592 : vector<16x64xf32>
    %594 = arith.addf %589, %593 : vector<16x64xf32>
    %595 = vector.extract_strided_slice %386 {offsets = [1, 15], sizes = [16, 64], strides = [1, 1]} : vector<18x80xf32> to vector<16x64xf32>
    %c41_340 = arith.constant 41 : index
    %c0_341 = arith.constant 0 : index
    %596 = vector.load %arg4[%c41_340, %c0_341] : memref<63x64xf32, #tpu.memory_space<vmem>>, vector<1x64xf32>
    %597 = vector.broadcast %596 : vector<1x64xf32> to vector<16x64xf32>
    %598 = arith.mulf %595, %597 : vector<16x64xf32>
    %599 = arith.addf %594, %598 : vector<16x64xf32>
    %600 = vector.extract_strided_slice %386 {offsets = [2, 1], sizes = [16, 64], strides = [1, 1]} : vector<18x80xf32> to vector<16x64xf32>
    %c42_342 = arith.constant 42 : index
    %c0_343 = arith.constant 0 : index
    %601 = vector.load %arg4[%c42_342, %c0_343] : memref<63x64xf32, #tpu.memory_space<vmem>>, vector<1x64xf32>
    %602 = vector.broadcast %601 : vector<1x64xf32> to vector<16x64xf32>
    %603 = arith.mulf %600, %602 : vector<16x64xf32>
    %604 = arith.addf %599, %603 : vector<16x64xf32>
    %605 = vector.extract_strided_slice %386 {offsets = [2, 2], sizes = [16, 64], strides = [1, 1]} : vector<18x80xf32> to vector<16x64xf32>
    %c43_344 = arith.constant 43 : index
    %c0_345 = arith.constant 0 : index
    %606 = vector.load %arg4[%c43_344, %c0_345] : memref<63x64xf32, #tpu.memory_space<vmem>>, vector<1x64xf32>
    %607 = vector.broadcast %606 : vector<1x64xf32> to vector<16x64xf32>
    %608 = arith.mulf %605, %607 : vector<16x64xf32>
    %609 = arith.addf %604, %608 : vector<16x64xf32>
    %610 = vector.extract_strided_slice %386 {offsets = [2, 3], sizes = [16, 64], strides = [1, 1]} : vector<18x80xf32> to vector<16x64xf32>
    %c44_346 = arith.constant 44 : index
    %c0_347 = arith.constant 0 : index
    %611 = vector.load %arg4[%c44_346, %c0_347] : memref<63x64xf32, #tpu.memory_space<vmem>>, vector<1x64xf32>
    %612 = vector.broadcast %611 : vector<1x64xf32> to vector<16x64xf32>
    %613 = arith.mulf %610, %612 : vector<16x64xf32>
    %614 = arith.addf %609, %613 : vector<16x64xf32>
    %615 = vector.extract_strided_slice %386 {offsets = [2, 4], sizes = [16, 64], strides = [1, 1]} : vector<18x80xf32> to vector<16x64xf32>
    %c45_348 = arith.constant 45 : index
    %c0_349 = arith.constant 0 : index
    %616 = vector.load %arg4[%c45_348, %c0_349] : memref<63x64xf32, #tpu.memory_space<vmem>>, vector<1x64xf32>
    %617 = vector.broadcast %616 : vector<1x64xf32> to vector<16x64xf32>
    %618 = arith.mulf %615, %617 : vector<16x64xf32>
    %619 = arith.addf %614, %618 : vector<16x64xf32>
    %620 = vector.extract_strided_slice %386 {offsets = [2, 5], sizes = [16, 64], strides = [1, 1]} : vector<18x80xf32> to vector<16x64xf32>
    %c46_350 = arith.constant 46 : index
    %c0_351 = arith.constant 0 : index
    %621 = vector.load %arg4[%c46_350, %c0_351] : memref<63x64xf32, #tpu.memory_space<vmem>>, vector<1x64xf32>
    %622 = vector.broadcast %621 : vector<1x64xf32> to vector<16x64xf32>
    %623 = arith.mulf %620, %622 : vector<16x64xf32>
    %624 = arith.addf %619, %623 : vector<16x64xf32>
    %625 = vector.extract_strided_slice %386 {offsets = [2, 6], sizes = [16, 64], strides = [1, 1]} : vector<18x80xf32> to vector<16x64xf32>
    %c47_352 = arith.constant 47 : index
    %c0_353 = arith.constant 0 : index
    %626 = vector.load %arg4[%c47_352, %c0_353] : memref<63x64xf32, #tpu.memory_space<vmem>>, vector<1x64xf32>
    %627 = vector.broadcast %626 : vector<1x64xf32> to vector<16x64xf32>
    %628 = arith.mulf %625, %627 : vector<16x64xf32>
    %629 = arith.addf %624, %628 : vector<16x64xf32>
    %630 = vector.extract_strided_slice %386 {offsets = [2, 7], sizes = [16, 64], strides = [1, 1]} : vector<18x80xf32> to vector<16x64xf32>
    %c48_354 = arith.constant 48 : index
    %c0_355 = arith.constant 0 : index
    %631 = vector.load %arg4[%c48_354, %c0_355] : memref<63x64xf32, #tpu.memory_space<vmem>>, vector<1x64xf32>
    %632 = vector.broadcast %631 : vector<1x64xf32> to vector<16x64xf32>
    %633 = arith.mulf %630, %632 : vector<16x64xf32>
    %634 = arith.addf %629, %633 : vector<16x64xf32>
    %635 = vector.extract_strided_slice %386 {offsets = [2, 5], sizes = [16, 64], strides = [1, 1]} : vector<18x80xf32> to vector<16x64xf32>
    %c49_356 = arith.constant 49 : index
    %c0_357 = arith.constant 0 : index
    %636 = vector.load %arg4[%c49_356, %c0_357] : memref<63x64xf32, #tpu.memory_space<vmem>>, vector<1x64xf32>
    %637 = vector.broadcast %636 : vector<1x64xf32> to vector<16x64xf32>
    %638 = arith.mulf %635, %637 : vector<16x64xf32>
    %639 = arith.addf %634, %638 : vector<16x64xf32>
    %640 = vector.extract_strided_slice %386 {offsets = [2, 6], sizes = [16, 64], strides = [1, 1]} : vector<18x80xf32> to vector<16x64xf32>
    %c50_358 = arith.constant 50 : index
    %c0_359 = arith.constant 0 : index
    %641 = vector.load %arg4[%c50_358, %c0_359] : memref<63x64xf32, #tpu.memory_space<vmem>>, vector<1x64xf32>
    %642 = vector.broadcast %641 : vector<1x64xf32> to vector<16x64xf32>
    %643 = arith.mulf %640, %642 : vector<16x64xf32>
    %644 = arith.addf %639, %643 : vector<16x64xf32>
    %645 = vector.extract_strided_slice %386 {offsets = [2, 7], sizes = [16, 64], strides = [1, 1]} : vector<18x80xf32> to vector<16x64xf32>
    %c51_360 = arith.constant 51 : index
    %c0_361 = arith.constant 0 : index
    %646 = vector.load %arg4[%c51_360, %c0_361] : memref<63x64xf32, #tpu.memory_space<vmem>>, vector<1x64xf32>
    %647 = vector.broadcast %646 : vector<1x64xf32> to vector<16x64xf32>
    %648 = arith.mulf %645, %647 : vector<16x64xf32>
    %649 = arith.addf %644, %648 : vector<16x64xf32>
    %650 = vector.extract_strided_slice %386 {offsets = [2, 8], sizes = [16, 64], strides = [1, 1]} : vector<18x80xf32> to vector<16x64xf32>
    %c52_362 = arith.constant 52 : index
    %c0_363 = arith.constant 0 : index
    %651 = vector.load %arg4[%c52_362, %c0_363] : memref<63x64xf32, #tpu.memory_space<vmem>>, vector<1x64xf32>
    %652 = vector.broadcast %651 : vector<1x64xf32> to vector<16x64xf32>
    %653 = arith.mulf %650, %652 : vector<16x64xf32>
    %654 = arith.addf %649, %653 : vector<16x64xf32>
    %655 = vector.extract_strided_slice %386 {offsets = [2, 9], sizes = [16, 64], strides = [1, 1]} : vector<18x80xf32> to vector<16x64xf32>
    %c53_364 = arith.constant 53 : index
    %c0_365 = arith.constant 0 : index
    %656 = vector.load %arg4[%c53_364, %c0_365] : memref<63x64xf32, #tpu.memory_space<vmem>>, vector<1x64xf32>
    %657 = vector.broadcast %656 : vector<1x64xf32> to vector<16x64xf32>
    %658 = arith.mulf %655, %657 : vector<16x64xf32>
    %659 = arith.addf %654, %658 : vector<16x64xf32>
    %660 = vector.extract_strided_slice %386 {offsets = [2, 10], sizes = [16, 64], strides = [1, 1]} : vector<18x80xf32> to vector<16x64xf32>
    %c54_366 = arith.constant 54 : index
    %c0_367 = arith.constant 0 : index
    %661 = vector.load %arg4[%c54_366, %c0_367] : memref<63x64xf32, #tpu.memory_space<vmem>>, vector<1x64xf32>
    %662 = vector.broadcast %661 : vector<1x64xf32> to vector<16x64xf32>
    %663 = arith.mulf %660, %662 : vector<16x64xf32>
    %664 = arith.addf %659, %663 : vector<16x64xf32>
    %665 = vector.extract_strided_slice %386 {offsets = [2, 11], sizes = [16, 64], strides = [1, 1]} : vector<18x80xf32> to vector<16x64xf32>
    %c55_368 = arith.constant 55 : index
    %c0_369 = arith.constant 0 : index
    %666 = vector.load %arg4[%c55_368, %c0_369] : memref<63x64xf32, #tpu.memory_space<vmem>>, vector<1x64xf32>
    %667 = vector.broadcast %666 : vector<1x64xf32> to vector<16x64xf32>
    %668 = arith.mulf %665, %667 : vector<16x64xf32>
    %669 = arith.addf %664, %668 : vector<16x64xf32>
    %670 = vector.extract_strided_slice %386 {offsets = [2, 9], sizes = [16, 64], strides = [1, 1]} : vector<18x80xf32> to vector<16x64xf32>
    %c56_370 = arith.constant 56 : index
    %c0_371 = arith.constant 0 : index
    %671 = vector.load %arg4[%c56_370, %c0_371] : memref<63x64xf32, #tpu.memory_space<vmem>>, vector<1x64xf32>
    %672 = vector.broadcast %671 : vector<1x64xf32> to vector<16x64xf32>
    %673 = arith.mulf %670, %672 : vector<16x64xf32>
    %674 = arith.addf %669, %673 : vector<16x64xf32>
    %675 = vector.extract_strided_slice %386 {offsets = [2, 10], sizes = [16, 64], strides = [1, 1]} : vector<18x80xf32> to vector<16x64xf32>
    %c57_372 = arith.constant 57 : index
    %c0_373 = arith.constant 0 : index
    %676 = vector.load %arg4[%c57_372, %c0_373] : memref<63x64xf32, #tpu.memory_space<vmem>>, vector<1x64xf32>
    %677 = vector.broadcast %676 : vector<1x64xf32> to vector<16x64xf32>
    %678 = arith.mulf %675, %677 : vector<16x64xf32>
    %679 = arith.addf %674, %678 : vector<16x64xf32>
    %680 = vector.extract_strided_slice %386 {offsets = [2, 11], sizes = [16, 64], strides = [1, 1]} : vector<18x80xf32> to vector<16x64xf32>
    %c58_374 = arith.constant 58 : index
    %c0_375 = arith.constant 0 : index
    %681 = vector.load %arg4[%c58_374, %c0_375] : memref<63x64xf32, #tpu.memory_space<vmem>>, vector<1x64xf32>
    %682 = vector.broadcast %681 : vector<1x64xf32> to vector<16x64xf32>
    %683 = arith.mulf %680, %682 : vector<16x64xf32>
    %684 = arith.addf %679, %683 : vector<16x64xf32>
    %685 = vector.extract_strided_slice %386 {offsets = [2, 12], sizes = [16, 64], strides = [1, 1]} : vector<18x80xf32> to vector<16x64xf32>
    %c59_376 = arith.constant 59 : index
    %c0_377 = arith.constant 0 : index
    %686 = vector.load %arg4[%c59_376, %c0_377] : memref<63x64xf32, #tpu.memory_space<vmem>>, vector<1x64xf32>
    %687 = vector.broadcast %686 : vector<1x64xf32> to vector<16x64xf32>
    %688 = arith.mulf %685, %687 : vector<16x64xf32>
    %689 = arith.addf %684, %688 : vector<16x64xf32>
    %690 = vector.extract_strided_slice %386 {offsets = [2, 13], sizes = [16, 64], strides = [1, 1]} : vector<18x80xf32> to vector<16x64xf32>
    %c60_378 = arith.constant 60 : index
    %c0_379 = arith.constant 0 : index
    %691 = vector.load %arg4[%c60_378, %c0_379] : memref<63x64xf32, #tpu.memory_space<vmem>>, vector<1x64xf32>
    %692 = vector.broadcast %691 : vector<1x64xf32> to vector<16x64xf32>
    %693 = arith.mulf %690, %692 : vector<16x64xf32>
    %694 = arith.addf %689, %693 : vector<16x64xf32>
    %695 = vector.extract_strided_slice %386 {offsets = [2, 14], sizes = [16, 64], strides = [1, 1]} : vector<18x80xf32> to vector<16x64xf32>
    %c61_380 = arith.constant 61 : index
    %c0_381 = arith.constant 0 : index
    %696 = vector.load %arg4[%c61_380, %c0_381] : memref<63x64xf32, #tpu.memory_space<vmem>>, vector<1x64xf32>
    %697 = vector.broadcast %696 : vector<1x64xf32> to vector<16x64xf32>
    %698 = arith.mulf %695, %697 : vector<16x64xf32>
    %699 = arith.addf %694, %698 : vector<16x64xf32>
    %700 = vector.extract_strided_slice %386 {offsets = [2, 15], sizes = [16, 64], strides = [1, 1]} : vector<18x80xf32> to vector<16x64xf32>
    %c62_382 = arith.constant 62 : index
    %c0_383 = arith.constant 0 : index
    %701 = vector.load %arg4[%c62_382, %c0_383] : memref<63x64xf32, #tpu.memory_space<vmem>>, vector<1x64xf32>
    %702 = vector.broadcast %701 : vector<1x64xf32> to vector<16x64xf32>
    %703 = arith.mulf %700, %702 : vector<16x64xf32>
    %704 = arith.addf %699, %703 : vector<16x64xf32>
    %c0_384 = arith.constant 0 : index
    %c1_385 = arith.constant 1 : index
    %c8_386 = arith.constant 8 : index
    %705 = vector.load %arg1[%c0_384, %c1_385, %c8_386] : memref<1x18x80xf32, #tpu.memory_space<vmem>>, vector<1x16x64xf32>
    %706 = vector.shape_cast %705 : vector<1x16x64xf32> to vector<16x64xf32>
    %707 = arith.addf %704, %706 : vector<16x64xf32>
    %cst_387 = arith.constant 0.000000e+00 : f32
    %708 = vector.broadcast %cst_387 : f32 to vector<16x64xf32>
    %709 = arith.maximumf %707, %708 : vector<16x64xf32>
    %c0_388 = arith.constant 0 : index
    %c0_389 = arith.constant 0 : index
    %c0_390 = arith.constant 0 : index
    %710 = vector.load %arg6[%c0_388, %c0_389, %c0_390] : memref<1x16x64xf32, #tpu.memory_space<vmem>>, vector<1x16x64xf32>
    %711 = vector.shape_cast %710 : vector<1x16x64xf32> to vector<16x64xf32>
    %712 = vector.shape_cast %709 : vector<16x64xf32> to vector<1x16x64xf32>
    tpu.vector_store %arg6[%c0_388, %c0_389, %c0_390], %712 {strides = array<i32>} : memref<1x16x64xf32, #tpu.memory_space<vmem>>, vector<1x16x64xf32>,
    return
  }
  func.func @transform_0(%arg0: i32) -> (i32, i32, i32) {
    %c0_i32 = arith.constant 0 : i32
    %c0_i32_0 = arith.constant 0 : i32
    %c0_i32_1 = arith.constant 0 : i32
    return %arg0, %c0_i32, %c0_i32_0 : i32, i32, i32
  }
  func.func @transform_1(%arg0: i32) -> (i32, i32) {
    %c0_i32 = arith.constant 0 : i32
    %c0_i32_0 = arith.constant 0 : i32
    %c0_i32_1 = arith.constant 0 : i32
    return %c0_i32, %c0_i32_0 : i32, i32
  }
  func.func @transform_2(%arg0: i32) -> (i32, i32) {
    %c0_i32 = arith.constant 0 : i32
    %c0_i32_0 = arith.constant 0 : i32
    %c0_i32_1 = arith.constant 0 : i32
    return %c0_i32, %c0_i32_0 : i32, i32
  }
  func.func @transform_3(%arg0: i32) -> (i32, i32) {
    %c0_i32 = arith.constant 0 : i32
    %c0_i32_0 = arith.constant 0 : i32
    %c0_i32_1 = arith.constant 0 : i32
    return %c0_i32, %c0_i32_0 : i32, i32
  }
  func.func @transform_4(%arg0: i32) -> (i32, i32) {
    %c0_i32 = arith.constant 0 : i32
    %c0_i32_0 = arith.constant 0 : i32
    %c0_i32_1 = arith.constant 0 : i32
    return %c0_i32, %c0_i32_0 : i32, i32
  }
  func.func @transform_5(%arg0: i32) -> (i32, i32, i32) {
    %c0_i32 = arith.constant 0 : i32
    %c0_i32_0 = arith.constant 0 : i32
    %c0_i32_1 = arith.constant 0 : i32
    return %arg0, %c0_i32, %c0_i32_0 : i32, i32, i32
  }
}

</mosaic_0001>

<llo_original>
// kernel: tpu_custom_call.1
$region0: #{tpu_custom_call.1}
  #allocation0 [shape = 'u32[]', space=smem, size = 0x4, offset = 0x4, fixed_abs, tag = 'smem constant byte address 0x4 - core index']
  #allocation1 [shape = 'u32[144,128]{1,0:T(1,128)}', space=vmem, size = 0x12000, scoped, tag = 'internal scratch']
  %s0 = inlined_call_operand.vmem [shape: f32[2,18,80], index: 0, kind: input, shape index: {}]
  %s1 = inlined_call_operand.vmem [shape: f32[63,64], index: 1, kind: input, shape index: {}]
  %s2 = inlined_call_operand.vmem [shape: f32[1,64], index: 2, kind: input, shape index: {}]
  %s3 = inlined_call_operand.hbm [shape: f32[63,64], index: 3, kind: input, shape index: {}]
  %s4 = inlined_call_operand.vmem [shape: f32[1,64], index: 4, kind: input, shape index: {}]
  %s5 = inlined_call_operand.hbm [shape: f32[2,16,64], index: 5, kind: output, shape index: {}]
  %s6 = sld [smem:[#allocation0]]
  $region57: #{tpu_custom_call.1} parent=0
    _
  %s8 = ssub.s32 1, %s6
  %s9 = scalar_select 0, %s8, %s6
  $region1: #{tpu_custom_call.1} parent=0
    #allocation2 [shape = 'u8[32768]{0}', space=vmem, size = 0x8000, scoped, tag = 'input window, operand 3, single buffered']
    #allocation3 [shape = 's32[2]{0}', space=sflag, size = 0x8, scoped, tag = 'scoped memory for tpu_custom_call.1']
    #allocation4 [shape = 's32[2]{0}', space=sflag, size = 0x8, scoped, tag = 'scoped memory for tpu_custom_call.1']
    #allocation5 [shape = 'u8[16384]{0}', space=vmem, size = 0x4000, scoped, tag = 'output window, operand 0']
    %10 = vsyncpa [#allocation3], 0
    %11 = vsyncpa [#allocation4], 0
    %s12 = scalar_lea.sflag [#allocation4], 1
    %13 = vsyncpa %s12, 0
    loop: start=0, step=1, limit=4
    $region2: #{tpu_custom_call.1} parent=1 // loop_pre_header
      _
    $region3: #{tpu_custom_call.1} parent=1 // loop_header
      %s15 = sphi 0, %s19
      %p16 = scmp.ge.s32.totalorder %s15, 4
      %s25 = sphi 0, %s27
      %s28 = sphi 0, %s25
      %s29 = sphi 0, %s28
      %s45 = sphi 0, %s29
      %s49 = sphi 0, %s49
      %s51 = sphi 0, %s49
      %s52 = sphi 0, %s51
      %s66 = sphi 0, %s52
      %s70 = sphi 0, %s70
      %s72 = sphi 0, %s70
      %s73 = sphi 0, %s72
      %s87 = sphi 0, %s73
      %s91 = sphi 0, %s91
      %s93 = sphi 0, %s91
      %s94 = sphi 0, %s93
      %s108 = sphi 0, %s94
      %s112 = sphi 0, %s112
      %s114 = sphi 0, %s112
      %s115 = sphi 0, %s114
      %s129 = sphi 0, %s115
      %s135 = sphi 0, %s137
      %s138 = sphi 0, %s135
      %s139 = sphi 0, %s138
      %s155 = sphi 0, %s139
    $region4: #{tpu_custom_call.1} parent=1 // loop_header_branch
      %18 = sbr.rel (%p16) target = $region8
    $region5: #{tpu_custom_call.1} parent=1 // loop_body
      %s20 = ssub.s32 %s15, 1
      %s21 = ssub.s32 %s15, 2
      %s22 = sadd.s32 %s15, 1
      %s23 = ssub.s32 %s15, %s22
      %p24 = scmp.eq.s32.totalorder %s23, 0
      %s26 = sadd.s32 %s25, 1
      %s27 = scalar_select %p24, %s25, %s26
      %p30 = pneg %p24
      %p31 = scmp.eq.s32.totalorder %s15, 1
      %p32 = por %p30, %p31
      %p33 = scmp.ne.s32.totalorder %s25, %s28
      %p34 = scmp.eq.s32.totalorder %s15, 0
      %p35 = por %p33, %p34
      %p36 = scmp.ne.s32.totalorder %s25, %s28
      %p37 = scmp.eq.s32.totalorder %s20, 1
      %p38 = por %p36, %p37
      %p39 = scmp.ne.s32.totalorder %s28, %s29
      %p40 = scmp.eq.s32.totalorder %s20, 0
      %p41 = por %p39, %p40
      %p42 = scmp.ne.s32.totalorder %s28, %s29
      %p43 = scmp.eq.s32.totalorder %s21, 1
      %p44 = por %p42, %p43
      %p46 = scmp.ne.s32.totalorder %s29, %s45
      %p47 = scmp.eq.s32.totalorder %s21, 0
      %p48 = por %p46, %p47
      %s50 = sadd.s32 %s49, 1
      %p53 = scmp.eq.s32.totalorder %s15, 1
      %p54 = scmp.ne.s32.totalorder %s49, %s51
      %p55 = scmp.eq.s32.totalorder %s15, 0
      %p56 = por %p54, %p55
      %p57 = scmp.ne.s32.totalorder %s49, %s51
      %p58 = scmp.eq.s32.totalorder %s20, 1
      %p59 = por %p57, %p58
      %p60 = scmp.ne.s32.totalorder %s51, %s52
      %p61 = scmp.eq.s32.totalorder %s20, 0
      %p62 = por %p60, %p61
      %p63 = scmp.ne.s32.totalorder %s51, %s52
      %p64 = scmp.eq.s32.totalorder %s21, 1
      %p65 = por %p63, %p64
      %p67 = scmp.ne.s32.totalorder %s52, %s66
      %p68 = scmp.eq.s32.totalorder %s21, 0
      %p69 = por %p67, %p68
      %s71 = sadd.s32 %s70, 1
      %p74 = scmp.eq.s32.totalorder %s15, 1
      %p75 = scmp.ne.s32.totalorder %s70, %s72
      %p76 = scmp.eq.s32.totalorder %s15, 0
      %p77 = por %p75, %p76
      %p78 = scmp.ne.s32.totalorder %s70, %s72
      %p79 = scmp.eq.s32.totalorder %s20, 1
      %p80 = por %p78, %p79
      %p81 = scmp.ne.s32.totalorder %s72, %s73
      %p82 = scmp.eq.s32.totalorder %s20, 0
      %p83 = por %p81, %p82
      %p84 = scmp.ne.s32.totalorder %s72, %s73
      %p85 = scmp.eq.s32.totalorder %s21, 1
      %p86 = por %p84, %p85
      %p88 = scmp.ne.s32.totalorder %s73, %s87
      %p89 = scmp.eq.s32.totalorder %s21, 0
      %p90 = por %p88, %p89
      %s92 = sadd.s32 %s91, 1
      %p95 = scmp.eq.s32.totalorder %s15, 1
      %p96 = scmp.ne.s32.totalorder %s91, %s93
      %p97 = scmp.eq.s32.totalorder %s15, 0
      %p98 = por %p96, %p97
      %p99 = scmp.ne.s32.totalorder %s91, %s93
      %p100 = scmp.eq.s32.totalorder %s20, 1
      %p101 = por %p99, %p100
      %p102 = scmp.ne.s32.totalorder %s93, %s94
      %p103 = scmp.eq.s32.totalorder %s20, 0
      %p104 = por %p102, %p103
      %p105 = scmp.ne.s32.totalorder %s93, %s94
      %p106 = scmp.eq.s32.totalorder %s21, 1
      %p107 = por %p105, %p106
      %p109 = scmp.ne.s32.totalorder %s94, %s108
      %p110 = scmp.eq.s32.totalorder %s21, 0
      %p111 = por %p109, %p110
      %s113 = sadd.s32 %s112, 1
      %p116 = scmp.eq.s32.totalorder %s15, 1
      %p117 = scmp.ne.s32.totalorder %s112, %s114
      %p118 = scmp.eq.s32.totalorder %s15, 0
      %p119 = por %p117, %p118
      %p120 = scmp.ne.s32.totalorder %s112, %s114
      %p121 = scmp.eq.s32.totalorder %s20, 1
      %p122 = por %p120, %p121
      %p123 = scmp.ne.s32.totalorder %s114, %s115
      %p124 = scmp.eq.s32.totalorder %s20, 0
      %p125 = por %p123, %p124
      %p126 = scmp.ne.s32.totalorder %s114, %s115
      %p127 = scmp.eq.s32.totalorder %s21, 1
      %p128 = por %p126, %p127
      %p130 = scmp.ne.s32.totalorder %s115, %s129
      %p131 = scmp.eq.s32.totalorder %s21, 0
      %p132 = por %p130, %p131
      %s133 = ssub.s32 %s15, %s22
      %p134 = scmp.eq.s32.totalorder %s133, 0
      %s136 = sadd.s32 %s135, 1
      %s137 = scalar_select %p134, %s135, %s136
      %p140 = pneg %p134
      %p141 = scmp.eq.s32.totalorder %s15, 1
      %p142 = por %p140, %p141
      %p143 = scmp.ne.s32.totalorder %s135, %s138
      %p144 = scmp.eq.s32.totalorder %s15, 0
      %p145 = por %p143, %p144
      %p146 = scmp.ne.s32.totalorder %s135, %s138
      %p147 = scmp.eq.s32.totalorder %s20, 1
      %p148 = por %p146, %p147
      %p149 = scmp.ne.s32.totalorder %s138, %s139
      %p150 = scmp.eq.s32.totalorder %s20, 0
      %p151 = por %p149, %p150
      %p152 = scmp.ne.s32.totalorder %s138, %s139
      %p153 = scmp.eq.s32.totalorder %s21, 1
      %p154 = por %p152, %p153
      %p156 = scmp.ne.s32.totalorder %s139, %s155
      %p157 = scmp.eq.s32.totalorder %s21, 0
      %p158 = por %p156, %p157
      %p159 = scmp.le.s32.totalorder 1, %s15
      %p160 = scmp.lt.s32.totalorder %s15, 3
      %p161 = pnand %p159, %p160
      %p162 = pneg %p161
      // Predicated region
      $region9: #{tpu_custom_call.1} parent=5 // pred_check
        _
      $region10: #{tpu_custom_call.1} parent=5 // pred_check_branch
        %164 = sbr.rel (%p161) target = $region12
      $region11: #{tpu_custom_call.1} parent=5 // pred_region
        %s165 = ssub.s32 %s15, 1
        // Predicated region
        $region13: #{tpu_custom_call.1} parent=11 // pred_check
          %p166 = pneg %p62
        $region14: #{tpu_custom_call.1} parent=11 // pred_check_branch
          %168 = sbr.rel (%p166) target = $region16
        $region15: #{tpu_custom_call.1} parent=11 // pred_region
          _
        $region16: #{tpu_custom_call.1} parent=11 // pred_fallthru
          _
        // Predicated region
        $region17: #{tpu_custom_call.1} parent=11 // pred_check
          %p169 = pneg %p83
        $region18: #{tpu_custom_call.1} parent=11 // pred_check_branch
          %171 = sbr.rel (%p169) target = $region20
        $region19: #{tpu_custom_call.1} parent=11 // pred_region
          _
        $region20: #{tpu_custom_call.1} parent=11 // pred_fallthru
          _
        // Predicated region
        $region21: #{tpu_custom_call.1} parent=11 // pred_check
          %p172 = pneg %p104
        $region22: #{tpu_custom_call.1} parent=11 // pred_check_branch
          %174 = sbr.rel (%p172) target = $region24
        $region23: #{tpu_custom_call.1} parent=11 // pred_region
          %s176 = ssub.s32 1024, 1024
          %177 = vsyncadd [#allocation3], %s176
          %s178 = sshll.u32 [#allocation2], 4
          %s179 = int_to_ptr.vmem [resolvable:$true] %s178
          %184 = dma.hbm_to_vmem [thread:$0]  %s3, 1024, %s179, [#allocation3], 128, 128, 8
        $region24: #{tpu_custom_call.1} parent=11 // pred_fallthru
          _
        // Predicated region
        $region25: #{tpu_custom_call.1} parent=11 // pred_check
          %p185 = pneg %p125
        $region26: #{tpu_custom_call.1} parent=11 // pred_check_branch
          %187 = sbr.rel (%p185) target = $region28
        $region27: #{tpu_custom_call.1} parent=11 // pred_region
          _
        $region28: #{tpu_custom_call.1} parent=11 // pred_fallthru
          _
      $region12: #{tpu_custom_call.1} parent=5 // pred_fallthru
        _
      %p188 = scmp.lt.s32.totalorder %s15, 2
      // Predicated region
      $region29: #{tpu_custom_call.1} parent=5 // pred_check
        %p189 = pneg %p188
      $region30: #{tpu_custom_call.1} parent=5 // pred_check_branch
        %191 = sbr.rel (%p189) target = $region32
      $region31: #{tpu_custom_call.1} parent=5 // pred_region
        // Predicated region
        $region33: #{tpu_custom_call.1} parent=31 // pred_check
          %p192 = pneg %p35
        $region34: #{tpu_custom_call.1} parent=31 // pred_check_branch
          %194 = sbr.rel (%p192) target = $region36
        $region35: #{tpu_custom_call.1} parent=31 // pred_region
          %p195 = scmp.lt.s32.totalorder %s15, 1
          %s196 = scalar_select %p195, %s15, 1
          %s197 = smul.addr %s196, 3
          %s198 = smul.addr %s197, 8
          %s199 = scalar_lea.vmem %s0, %s198
        $region36: #{tpu_custom_call.1} parent=31 // pred_fallthru
          _
      $region32: #{tpu_custom_call.1} parent=5 // pred_fallthru
        _
      %p200 = scmp.le.s32.totalorder 1, %s15
      %p201 = scmp.lt.s32.totalorder %s15, 3
      %p202 = pnand %p200, %p201
      %p203 = pneg %p202
      // Predicated region
      $region37: #{tpu_custom_call.1} parent=5 // pred_check
        _
      $region38: #{tpu_custom_call.1} parent=5 // pred_check_branch
        %205 = sbr.rel (%p202) target = $region40
      $region39: #{tpu_custom_call.1} parent=5 // pred_region
        %s206 = ssub.s32 %s15, 1
        // Predicated region
        $region41: #{tpu_custom_call.1} parent=39 // pred_check
          %p207 = pneg %p104
        $region42: #{tpu_custom_call.1} parent=39 // pred_check_branch
          %209 = sbr.rel (%p207) target = $region44
        $region43: #{tpu_custom_call.1} parent=39 // pred_region
          %210 = dma.done [#allocation3], 1024
        $region44: #{tpu_custom_call.1} parent=39 // pred_fallthru
          _
        %p211 = scmp.lt.s32.totalorder %s20, 1
        %s212 = scalar_select %p211, %s20, 1
        %s213 = smul.addr %s212, 3
        %s214 = smul.addr %s213, 8
        %s215 = scalar_lea.vmem %s0, %s214
        %p216 = pneg %p41
        %p217 = pneg %p38
        %p218 = pneg %p62
        %p219 = pneg %p59
        %p220 = pneg %p83
        %p221 = pneg %p80
        %p222 = pneg %p104
        %p223 = pneg %p101
        %p224 = pneg %p125
        %p225 = pneg %p122
        %p226 = pneg %p151
        %p227 = pneg %p148
        %s228 = sand.u32 %s138, 1
        %s229 = scalar_lea.sflag [#allocation4], %s228
        %s230 = sand.u32 %s138, 1
        %s231 = smul.addr %s230, 16
        %s232 = scalar_lea.vmem [#allocation5], %s231
        %p233 = scmp.lt.s32.totalorder %s20, 1
        %s234 = scalar_select %p233, %s20, 1
        %s235 = smul.addr %s234, 3
        %s236 = smul.addr %s235, 8
        %s237 = scalar_lea.vmem %s0, %s236
        %v238 = vld [vmem:[%s2] sm:$0x1]
        %v240 = vlaneseq
        %v241 = vshrl.u32 %v240, 7
        %v242 = vsub.s32 0, %v241
        %v243 = vrot.slane %v238, %v242
        %v245 = vld [vmem:[%s237] sm:$0xff]
        %v246 = vld [vmem:[%s237 + $0x8] sm:$0xff]
        %v247 = vld [vmem:[%s1] sm:$0x1]
        %v248 = vlaneseq
        %v249 = vshrl.u32 %v248, 7
        %v250 = vsub.s32 0, %v249
        %v251 = vrot.slane %v247, %v250
        %253 = vrot.lane.b32.xlu0 %v251, 1
        %v254 = vpop.permute.xlu0 %253
        %v256 = vmul.f32 %v245, %v254
        %v257 = vmul.f32 %v246, %v254
        %260 = vrot.lane.b32.xlu0 %v256, 127
        %v261 = vpop.permute.xlu0 %260
        %262 = vrot.lane.b32.xlu0 %v257, 127
        %v263 = vpop.permute.xlu0 %262
        %v266 = vadd.f32 %v243, %v261
        %v267 = vadd.f32 %v243, %v263
        %v268 = vld [vmem:[%s1 + $0x1] sm:$0x1]
        %v269 = vlaneseq
        %v270 = vshrl.u32 %v269, 7
        %v271 = vsub.s32 0, %v270
        %v272 = vrot.slane %v268, %v271
        %274 = vrot.lane.b32.xlu0 %v272, 2
        %v275 = vpop.permute.xlu0 %274
        %v277 = vmul.f32 %v245, %v275
        %v278 = vmul.f32 %v246, %v275
        %281 = vrot.lane.b32.xlu0 %v277, 126
        %v282 = vpop.permute.xlu0 %281
        %283 = vrot.lane.b32.xlu0 %v278, 126
        %v284 = vpop.permute.xlu0 %283
        %v287 = vadd.f32 %v266, %v282
        %v288 = vadd.f32 %v267, %v284
        %v289 = vld [vmem:[%s1 + $0x2] sm:$0x1]
        %v290 = vlaneseq
        %v291 = vshrl.u32 %v290, 7
        %v292 = vsub.s32 0, %v291
        %v293 = vrot.slane %v289, %v292
        %295 = vrot.lane.b32.xlu0 %v293, 3
        %v296 = vpop.permute.xlu0 %295
        %v298 = vmul.f32 %v245, %v296
        %v299 = vmul.f32 %v246, %v296
        %302 = vrot.lane.b32.xlu0 %v298, 125
        %v303 = vpop.permute.xlu0 %302
        %304 = vrot.lane.b32.xlu0 %v299, 125
        %v305 = vpop.permute.xlu0 %304
        %v308 = vadd.f32 %v287, %v303
        %v309 = vadd.f32 %v288, %v305
        %v310 = vld [vmem:[%s1 + $0x3] sm:$0x1]
        %v311 = vlaneseq
        %v312 = vshrl.u32 %v311, 7
        %v313 = vsub.s32 0, %v312
        %v314 = vrot.slane %v310, %v313
        %316 = vrot.lane.b32.xlu0 %v314, 4
        %v317 = vpop.permute.xlu0 %316
        %v319 = vmul.f32 %v245, %v317
        %v320 = vmul.f32 %v246, %v317
        %323 = vrot.lane.b32.xlu0 %v319, 124
        %v324 = vpop.permute.xlu0 %323
        %325 = vrot.lane.b32.xlu0 %v320, 124
        %v326 = vpop.permute.xlu0 %325
        %v329 = vadd.f32 %v308, %v324
        %v330 = vadd.f32 %v309, %v326
        %v331 = vld [vmem:[%s1 + $0x4] sm:$0x1]
        %v332 = vlaneseq
        %v333 = vshrl.u32 %v332, 7
        %v334 = vsub.s32 0, %v333
        %v335 = vrot.slane %v331, %v334
        %337 = vrot.lane.b32.xlu0 %v335, 5
        %v338 = vpop.permute.xlu0 %337
        %v340 = vmul.f32 %v245, %v338
        %v341 = vmul.f32 %v246, %v338
        %344 = vrot.lane.b32.xlu0 %v340, 123
        %v345 = vpop.permute.xlu0 %344
        %346 = vrot.lane.b32.xlu0 %v341, 123
        %v347 = vpop.permute.xlu0 %346
        %v350 = vadd.f32 %v329, %v345
        %v351 = vadd.f32 %v330, %v347
        %v352 = vld [vmem:[%s1 + $0x5] sm:$0x1]
        %v353 = vlaneseq
        %v354 = vshrl.u32 %v353, 7
        %v355 = vsub.s32 0, %v354
        %v356 = vrot.slane %v352, %v355
        %358 = vrot.lane.b32.xlu0 %v356, 6
        %v359 = vpop.permute.xlu0 %358
        %v361 = vmul.f32 %v245, %v359
        %v362 = vmul.f32 %v246, %v359
        %365 = vrot.lane.b32.xlu0 %v361, 122
        %v366 = vpop.permute.xlu0 %365
        %367 = vrot.lane.b32.xlu0 %v362, 122
        %v368 = vpop.permute.xlu0 %367
        %v371 = vadd.f32 %v350, %v366
        %v372 = vadd.f32 %v351, %v368
        %v373 = vld [vmem:[%s1 + $0x6] sm:$0x1]
        %v374 = vlaneseq
        %v375 = vshrl.u32 %v374, 7
        %v376 = vsub.s32 0, %v375
        %v377 = vrot.slane %v373, %v376
        %379 = vrot.lane.b32.xlu0 %v377, 7
        %v380 = vpop.permute.xlu0 %379
        %v382 = vmul.f32 %v245, %v380
        %v383 = vmul.f32 %v246, %v380
        %386 = vrot.lane.b32.xlu0 %v382, 121
        %v387 = vpop.permute.xlu0 %386
        %388 = vrot.lane.b32.xlu0 %v383, 121
        %v389 = vpop.permute.xlu0 %388
        %v392 = vadd.f32 %v371, %v387
        %v393 = vadd.f32 %v372, %v389
        %v394 = vld [vmem:[%s1 + $0x7] sm:$0x1]
        %v395 = vlaneseq
        %v396 = vshrl.u32 %v395, 7
        %v397 = vsub.s32 0, %v396
        %v398 = vrot.slane %v394, %v397
        %400 = vrot.lane.b32.xlu0 %v398, 5
        %v401 = vpop.permute.xlu0 %400
        %v403 = vmul.f32 %v245, %v401
        %v404 = vmul.f32 %v246, %v401
        %407 = vrot.lane.b32.xlu0 %v403, 123
        %v408 = vpop.permute.xlu0 %407
        %409 = vrot.lane.b32.xlu0 %v404, 123
        %v410 = vpop.permute.xlu0 %409
        %v413 = vadd.f32 %v392, %v408
        %v414 = vadd.f32 %v393, %v410
        %v415 = vld [vmem:[%s1 + $0x8] sm:$0x1]
        %v416 = vlaneseq
        %v417 = vshrl.u32 %v416, 7
        %v418 = vsub.s32 0, %v417
        %v419 = vrot.slane %v415, %v418
        %421 = vrot.lane.b32.xlu0 %v419, 6
        %v422 = vpop.permute.xlu0 %421
        %v424 = vmul.f32 %v245, %v422
        %v425 = vmul.f32 %v246, %v422
        %428 = vrot.lane.b32.xlu0 %v424, 122
        %v429 = vpop.permute.xlu0 %428
        %430 = vrot.lane.b32.xlu0 %v425, 122
        %v431 = vpop.permute.xlu0 %430
        %v434 = vadd.f32 %v413, %v429
        %v435 = vadd.f32 %v414, %v431
        %v436 = vld [vmem:[%s1 + $0x9] sm:$0x1]
        %v437 = vlaneseq
        %v438 = vshrl.u32 %v437, 7
        %v439 = vsub.s32 0, %v438
        %v440 = vrot.slane %v436, %v439
        %442 = vrot.lane.b32.xlu0 %v440, 7
        %v443 = vpop.permute.xlu0 %442
        %v445 = vmul.f32 %v245, %v443
        %v446 = vmul.f32 %v246, %v443
        %449 = vrot.lane.b32.xlu0 %v445, 121
        %v450 = vpop.permute.xlu0 %449
        %451 = vrot.lane.b32.xlu0 %v446, 121
        %v452 = vpop.permute.xlu0 %451
        %v455 = vadd.f32 %v434, %v450
        %v456 = vadd.f32 %v435, %v452
        %v457 = vld [vmem:[%s1 + $0xa] sm:$0x1]
        %v458 = vlaneseq
        %v459 = vshrl.u32 %v458, 7
        %v460 = vsub.s32 0, %v459
        %v461 = vrot.slane %v457, %v460
        %463 = vrot.lane.b32.xlu0 %v461, 8
        %v464 = vpop.permute.xlu0 %463
        %v466 = vmul.f32 %v245, %v464
        %v467 = vmul.f32 %v246, %v464
        %470 = vrot.lane.b32.xlu0 %v466, 120
        %v471 = vpop.permute.xlu0 %470
        %472 = vrot.lane.b32.xlu0 %v467, 120
        %v473 = vpop.permute.xlu0 %472
        %v476 = vadd.f32 %v455, %v471
        %v477 = vadd.f32 %v456, %v473
        %v478 = vld [vmem:[%s1 + $0xb] sm:$0x1]
        %v479 = vlaneseq
        %v480 = vshrl.u32 %v479, 7
        %v481 = vsub.s32 0, %v480
        %v482 = vrot.slane %v478, %v481
        %484 = vrot.lane.b32.xlu0 %v482, 9
        %v485 = vpop.permute.xlu0 %484
        %v487 = vmul.f32 %v245, %v485
        %v488 = vmul.f32 %v246, %v485
        %491 = vrot.lane.b32.xlu0 %v487, 119
        %v492 = vpop.permute.xlu0 %491
        %493 = vrot.lane.b32.xlu0 %v488, 119
        %v494 = vpop.permute.xlu0 %493
        %v497 = vadd.f32 %v476, %v492
        %v498 = vadd.f32 %v477, %v494
        %v499 = vld [vmem:[%s1 + $0xc] sm:$0x1]
        %v500 = vlaneseq
        %v501 = vshrl.u32 %v500, 7
        %v502 = vsub.s32 0, %v501
        %v503 = vrot.slane %v499, %v502
        %505 = vrot.lane.b32.xlu0 %v503, 10
        %v506 = vpop.permute.xlu0 %505
        %v508 = vmul.f32 %v245, %v506
        %v509 = vmul.f32 %v246, %v506
        %512 = vrot.lane.b32.xlu0 %v508, 118
        %v513 = vpop.permute.xlu0 %512
        %514 = vrot.lane.b32.xlu0 %v509, 118
        %v515 = vpop.permute.xlu0 %514
        %v518 = vadd.f32 %v497, %v513
        %v519 = vadd.f32 %v498, %v515
        %v520 = vld [vmem:[%s1 + $0xd] sm:$0x1]
        %v521 = vlaneseq
        %v522 = vshrl.u32 %v521, 7
        %v523 = vsub.s32 0, %v522
        %v524 = vrot.slane %v520, %v523
        %526 = vrot.lane.b32.xlu0 %v524, 11
        %v527 = vpop.permute.xlu0 %526
        %v529 = vmul.f32 %v245, %v527
        %v530 = vmul.f32 %v246, %v527
        %533 = vrot.lane.b32.xlu0 %v529, 117
        %v534 = vpop.permute.xlu0 %533
        %535 = vrot.lane.b32.xlu0 %v530, 117
        %v536 = vpop.permute.xlu0 %535
        %v539 = vadd.f32 %v518, %v534
        %v540 = vadd.f32 %v519, %v536
        %v541 = vld [vmem:[%s1 + $0xe] sm:$0x1]
        %v542 = vlaneseq
        %v543 = vshrl.u32 %v542, 7
        %v544 = vsub.s32 0, %v543
        %v545 = vrot.slane %v541, %v544
        %547 = vrot.lane.b32.xlu0 %v545, 9
        %v548 = vpop.permute.xlu0 %547
        %v550 = vmul.f32 %v245, %v548
        %v551 = vmul.f32 %v246, %v548
        %554 = vrot.lane.b32.xlu0 %v550, 119
        %v555 = vpop.permute.xlu0 %554
        %556 = vrot.lane.b32.xlu0 %v551, 119
        %v557 = vpop.permute.xlu0 %556
        %v560 = vadd.f32 %v539, %v555
        %v561 = vadd.f32 %v540, %v557
        %v562 = vld [vmem:[%s1 + $0xf] sm:$0x1]
        %v563 = vlaneseq
        %v564 = vshrl.u32 %v563, 7
        %v565 = vsub.s32 0, %v564
        %v566 = vrot.slane %v562, %v565
        %568 = vrot.lane.b32.xlu0 %v566, 10
        %v569 = vpop.permute.xlu0 %568
        %v571 = vmul.f32 %v245, %v569
        %v572 = vmul.f32 %v246, %v569
        %575 = vrot.lane.b32.xlu0 %v571, 118
        %v576 = vpop.permute.xlu0 %575
        %577 = vrot.lane.b32.xlu0 %v572, 118
        %v578 = vpop.permute.xlu0 %577
        %v581 = vadd.f32 %v560, %v576
        %v582 = vadd.f32 %v561, %v578
        %v583 = vld [vmem:[%s1 + $0x10] sm:$0x1]
        %v584 = vlaneseq
        %v585 = vshrl.u32 %v584, 7
        %v586 = vsub.s32 0, %v585
        %v587 = vrot.slane %v583, %v586
        %589 = vrot.lane.b32.xlu0 %v587, 11
        %v590 = vpop.permute.xlu0 %589
        %v592 = vmul.f32 %v245, %v590
        %v593 = vmul.f32 %v246, %v590
        %596 = vrot.lane.b32.xlu0 %v592, 117
        %v597 = vpop.permute.xlu0 %596
        %598 = vrot.lane.b32.xlu0 %v593, 117
        %v599 = vpop.permute.xlu0 %598
        %v602 = vadd.f32 %v581, %v597
        %v603 = vadd.f32 %v582, %v599
        %v604 = vld [vmem:[%s1 + $0x11] sm:$0x1]
        %v605 = vlaneseq
        %v606 = vshrl.u32 %v605, 7
        %v607 = vsub.s32 0, %v606
        %v608 = vrot.slane %v604, %v607
        %610 = vrot.lane.b32.xlu0 %v608, 12
        %v611 = vpop.permute.xlu0 %610
        %v613 = vmul.f32 %v245, %v611
        %v614 = vmul.f32 %v246, %v611
        %617 = vrot.lane.b32.xlu0 %v613, 116
        %v618 = vpop.permute.xlu0 %617
        %619 = vrot.lane.b32.xlu0 %v614, 116
        %v620 = vpop.permute.xlu0 %619
        %v623 = vadd.f32 %v602, %v618
        %v624 = vadd.f32 %v603, %v620
        %v625 = vld [vmem:[%s1 + $0x12] sm:$0x1]
        %v626 = vlaneseq
        %v627 = vshrl.u32 %v626, 7
        %v628 = vsub.s32 0, %v627
        %v629 = vrot.slane %v625, %v628
        %631 = vrot.lane.b32.xlu0 %v629, 13
        %v632 = vpop.permute.xlu0 %631
        %v634 = vmul.f32 %v245, %v632
        %v635 = vmul.f32 %v246, %v632
        %638 = vrot.lane.b32.xlu0 %v634, 115
        %v639 = vpop.permute.xlu0 %638
        %640 = vrot.lane.b32.xlu0 %v635, 115
        %v641 = vpop.permute.xlu0 %640
        %v644 = vadd.f32 %v623, %v639
        %v645 = vadd.f32 %v624, %v641
        %v646 = vld [vmem:[%s1 + $0x13] sm:$0x1]
        %v647 = vlaneseq
        %v648 = vshrl.u32 %v647, 7
        %v649 = vsub.s32 0, %v648
        %v650 = vrot.slane %v646, %v649
        %652 = vrot.lane.b32.xlu0 %v650, 14
        %v653 = vpop.permute.xlu0 %652
        %v655 = vmul.f32 %v245, %v653
        %v656 = vmul.f32 %v246, %v653
        %659 = vrot.lane.b32.xlu0 %v655, 114
        %v660 = vpop.permute.xlu0 %659
        %661 = vrot.lane.b32.xlu0 %v656, 114
        %v662 = vpop.permute.xlu0 %661
        %v665 = vadd.f32 %v644, %v660
        %v666 = vadd.f32 %v645, %v662
        %v667 = vld [vmem:[%s1 + $0x14] sm:$0x1]
        %v668 = vlaneseq
        %v669 = vshrl.u32 %v668, 7
        %v670 = vsub.s32 0, %v669
        %v671 = vrot.slane %v667, %v670
        %673 = vrot.lane.b32.xlu0 %v671, 15
        %v674 = vpop.permute.xlu0 %673
        %v676 = vmul.f32 %v245, %v674
        %v677 = vmul.f32 %v246, %v674
        %680 = vrot.lane.b32.xlu0 %v676, 113
        %v681 = vpop.permute.xlu0 %680
        %682 = vrot.lane.b32.xlu0 %v677, 113
        %v683 = vpop.permute.xlu0 %682
        %v686 = vadd.f32 %v665, %v681
        %v687 = vadd.f32 %v666, %v683
        %v688 = vld [vmem:[%s237 + $0x1] sm:$0xff]
        %v689 = vld [vmem:[%s237 + $0x9] sm:$0xff]
        %v690 = vld [vmem:[%s1 + $0x15] sm:$0x1]
        %v691 = vlaneseq
        %v692 = vshrl.u32 %v691, 7
        %v693 = vsub.s32 0, %v692
        %v694 = vrot.slane %v690, %v693
        %696 = vrot.lane.b32.xlu0 %v694, 1
        %v697 = vpop.permute.xlu0 %696
        %v699 = vmul.f32 %v688, %v697
        %v700 = vmul.f32 %v689, %v697
        %703 = vrot.lane.b32.xlu0 %v699, 127
        %v704 = vpop.permute.xlu0 %703
        %705 = vrot.lane.b32.xlu0 %v700, 127
        %v706 = vpop.permute.xlu0 %705
        %v709 = vadd.f32 %v686, %v704
        %v710 = vadd.f32 %v687, %v706
        %v711 = vld [vmem:[%s1 + $0x16] sm:$0x1]
        %v712 = vlaneseq
        %v713 = vshrl.u32 %v712, 7
        %v714 = vsub.s32 0, %v713
        %v715 = vrot.slane %v711, %v714
        %717 = vrot.lane.b32.xlu0 %v715, 2
        %v718 = vpop.permute.xlu0 %717
        %v720 = vmul.f32 %v688, %v718
        %v721 = vmul.f32 %v689, %v718
        %724 = vrot.lane.b32.xlu0 %v720, 126
        %v725 = vpop.permute.xlu0 %724
        %726 = vrot.lane.b32.xlu0 %v721, 126
        %v727 = vpop.permute.xlu0 %726
        %v730 = vadd.f32 %v709, %v725
        %v731 = vadd.f32 %v710, %v727
        %v732 = vld [vmem:[%s1 + $0x17] sm:$0x1]
        %v733 = vlaneseq
        %v734 = vshrl.u32 %v733, 7
        %v735 = vsub.s32 0, %v734
        %v736 = vrot.slane %v732, %v735
        %738 = vrot.lane.b32.xlu0 %v736, 3
        %v739 = vpop.permute.xlu0 %738
        %v741 = vmul.f32 %v688, %v739
        %v742 = vmul.f32 %v689, %v739
        %745 = vrot.lane.b32.xlu0 %v741, 125
        %v746 = vpop.permute.xlu0 %745
        %747 = vrot.lane.b32.xlu0 %v742, 125
        %v748 = vpop.permute.xlu0 %747
        %v751 = vadd.f32 %v730, %v746
        %v752 = vadd.f32 %v731, %v748
        %v753 = vld [vmem:[%s1 + $0x18] sm:$0x1]
        %v754 = vlaneseq
        %v755 = vshrl.u32 %v754, 7
        %v756 = vsub.s32 0, %v755
        %v757 = vrot.slane %v753, %v756
        %759 = vrot.lane.b32.xlu0 %v757, 4
        %v760 = vpop.permute.xlu0 %759
        %v762 = vmul.f32 %v688, %v760
        %v763 = vmul.f32 %v689, %v760
        %766 = vrot.lane.b32.xlu0 %v762, 124
        %v767 = vpop.permute.xlu0 %766
        %768 = vrot.lane.b32.xlu0 %v763, 124
        %v769 = vpop.permute.xlu0 %768
        %v772 = vadd.f32 %v751, %v767
        %v773 = vadd.f32 %v752, %v769
        %v774 = vld [vmem:[%s1 + $0x19] sm:$0x1]
        %v775 = vlaneseq
        %v776 = vshrl.u32 %v775, 7
        %v777 = vsub.s32 0, %v776
        %v778 = vrot.slane %v774, %v777
        %780 = vrot.lane.b32.xlu0 %v778, 5
        %v781 = vpop.permute.xlu0 %780
        %v783 = vmul.f32 %v688, %v781
        %v784 = vmul.f32 %v689, %v781
        %787 = vrot.lane.b32.xlu0 %v783, 123
        %v788 = vpop.permute.xlu0 %787
        %789 = vrot.lane.b32.xlu0 %v784, 123
        %v790 = vpop.permute.xlu0 %789
        %v793 = vadd.f32 %v772, %v788
        %v794 = vadd.f32 %v773, %v790
        %v795 = vld [vmem:[%s1 + $0x1a] sm:$0x1]
        %v796 = vlaneseq
        %v797 = vshrl.u32 %v796, 7
        %v798 = vsub.s32 0, %v797
        %v799 = vrot.slane %v795, %v798
        %801 = vrot.lane.b32.xlu0 %v799, 6
        %v802 = vpop.permute.xlu0 %801
        %v804 = vmul.f32 %v688, %v802
        %v805 = vmul.f32 %v689, %v802
        %808 = vrot.lane.b32.xlu0 %v804, 122
        %v809 = vpop.permute.xlu0 %808
        %810 = vrot.lane.b32.xlu0 %v805, 122
        %v811 = vpop.permute.xlu0 %810
        %v814 = vadd.f32 %v793, %v809
        %v815 = vadd.f32 %v794, %v811
        %v816 = vld [vmem:[%s1 + $0x1b] sm:$0x1]
        %v817 = vlaneseq
        %v818 = vshrl.u32 %v817, 7
        %v819 = vsub.s32 0, %v818
        %v820 = vrot.slane %v816, %v819
        %822 = vrot.lane.b32.xlu0 %v820, 7
        %v823 = vpop.permute.xlu0 %822
        %v825 = vmul.f32 %v688, %v823
        %v826 = vmul.f32 %v689, %v823
        %829 = vrot.lane.b32.xlu0 %v825, 121
        %v830 = vpop.permute.xlu0 %829
        %831 = vrot.lane.b32.xlu0 %v826, 121
        %v832 = vpop.permute.xlu0 %831
        %v835 = vadd.f32 %v814, %v830
        %v836 = vadd.f32 %v815, %v832
        %v837 = vld [vmem:[%s1 + $0x1c] sm:$0x1]
        %v838 = vlaneseq
        %v839 = vshrl.u32 %v838, 7
        %v840 = vsub.s32 0, %v839
        %v841 = vrot.slane %v837, %v840
        %843 = vrot.lane.b32.xlu0 %v841, 5
        %v844 = vpop.permute.xlu0 %843
        %v846 = vmul.f32 %v688, %v844
        %v847 = vmul.f32 %v689, %v844
        %850 = vrot.lane.b32.xlu0 %v846, 123
        %v851 = vpop.permute.xlu0 %850
        %852 = vrot.lane.b32.xlu0 %v847, 123
        %v853 = vpop.permute.xlu0 %852
        %v856 = vadd.f32 %v835, %v851
        %v857 = vadd.f32 %v836, %v853
        %v858 = vld [vmem:[%s1 + $0x1d] sm:$0x1]
        %v859 = vlaneseq
        %v860 = vshrl.u32 %v859, 7
        %v861 = vsub.s32 0, %v860
        %v862 = vrot.slane %v858, %v861
        %864 = vrot.lane.b32.xlu0 %v862, 6
        %v865 = vpop.permute.xlu0 %864
        %v867 = vmul.f32 %v688, %v865
        %v868 = vmul.f32 %v689, %v865
        %871 = vrot.lane.b32.xlu0 %v867, 122
        %v872 = vpop.permute.xlu0 %871
        %873 = vrot.lane.b32.xlu0 %v868, 122
        %v874 = vpop.permute.xlu0 %873
        %v877 = vadd.f32 %v856, %v872
        %v878 = vadd.f32 %v857, %v874
        %v879 = vld [vmem:[%s1 + $0x1e] sm:$0x1]
        %v880 = vlaneseq
        %v881 = vshrl.u32 %v880, 7
        %v882 = vsub.s32 0, %v881
        %v883 = vrot.slane %v879, %v882
        %885 = vrot.lane.b32.xlu0 %v883, 7
        %v886 = vpop.permute.xlu0 %885
        %v888 = vmul.f32 %v688, %v886
        %v889 = vmul.f32 %v689, %v886
        %892 = vrot.lane.b32.xlu0 %v888, 121
        %v893 = vpop.permute.xlu0 %892
        %894 = vrot.lane.b32.xlu0 %v889, 121
        %v895 = vpop.permute.xlu0 %894
        %v898 = vadd.f32 %v877, %v893
        %v899 = vadd.f32 %v878, %v895
        %v900 = vld [vmem:[%s1 + $0x1f] sm:$0x1]
        %v901 = vlaneseq
        %v902 = vshrl.u32 %v901, 7
        %v903 = vsub.s32 0, %v902
        %v904 = vrot.slane %v900, %v903
        %906 = vrot.lane.b32.xlu0 %v904, 8
        %v907 = vpop.permute.xlu0 %906
        %v909 = vmul.f32 %v688, %v907
        %v910 = vmul.f32 %v689, %v907
        %913 = vrot.lane.b32.xlu0 %v909, 120
        %v914 = vpop.permute.xlu0 %913
        %915 = vrot.lane.b32.xlu0 %v910, 120
        %v916 = vpop.permute.xlu0 %915
        %v919 = vadd.f32 %v898, %v914
        %v920 = vadd.f32 %v899, %v916
        %v921 = vld [vmem:[%s1 + $0x20] sm:$0x1]
        %v922 = vlaneseq
        %v923 = vshrl.u32 %v922, 7
        %v924 = vsub.s32 0, %v923
        %v925 = vrot.slane %v921, %v924
        %927 = vrot.lane.b32.xlu0 %v925, 9
        %v928 = vpop.permute.xlu0 %927
        %v930 = vmul.f32 %v688, %v928
        %v931 = vmul.f32 %v689, %v928
        %934 = vrot.lane.b32.xlu0 %v930, 119
        %v935 = vpop.permute.xlu0 %934
        %936 = vrot.lane.b32.xlu0 %v931, 119
        %v937 = vpop.permute.xlu0 %936
        %v940 = vadd.f32 %v919, %v935
        %v941 = vadd.f32 %v920, %v937
        %v942 = vld [vmem:[%s1 + $0x21] sm:$0x1]
        %v943 = vlaneseq
        %v944 = vshrl.u32 %v943, 7
        %v945 = vsub.s32 0, %v944
        %v946 = vrot.slane %v942, %v945
        %948 = vrot.lane.b32.xlu0 %v946, 10
        %v949 = vpop.permute.xlu0 %948
        %v951 = vmul.f32 %v688, %v949
        %v952 = vmul.f32 %v689, %v949
        %955 = vrot.lane.b32.xlu0 %v951, 118
        %v956 = vpop.permute.xlu0 %955
        %957 = vrot.lane.b32.xlu0 %v952, 118
        %v958 = vpop.permute.xlu0 %957
        %v961 = vadd.f32 %v940, %v956
        %v962 = vadd.f32 %v941, %v958
        %v963 = vld [vmem:[%s1 + $0x22] sm:$0x1]
        %v964 = vlaneseq
        %v965 = vshrl.u32 %v964, 7
        %v966 = vsub.s32 0, %v965
        %v967 = vrot.slane %v963, %v966
        %969 = vrot.lane.b32.xlu0 %v967, 11
        %v970 = vpop.permute.xlu0 %969
        %v972 = vmul.f32 %v688, %v970
        %v973 = vmul.f32 %v689, %v970
        %976 = vrot.lane.b32.xlu0 %v972, 117
        %v977 = vpop.permute.xlu0 %976
        %978 = vrot.lane.b32.xlu0 %v973, 117
        %v979 = vpop.permute.xlu0 %978
        %v982 = vadd.f32 %v961, %v977
        %v983 = vadd.f32 %v962, %v979
        %v984 = vld [vmem:[%s1 + $0x23] sm:$0x1]
        %v985 = vlaneseq
        %v986 = vshrl.u32 %v985, 7
        %v987 = vsub.s32 0, %v986
        %v988 = vrot.slane %v984, %v987
        %990 = vrot.lane.b32.xlu0 %v988, 9
        %v991 = vpop.permute.xlu0 %990
        %v993 = vmul.f32 %v688, %v991
        %v994 = vmul.f32 %v689, %v991
        %997 = vrot.lane.b32.xlu0 %v993, 119
        %v998 = vpop.permute.xlu0 %997
        %999 = vrot.lane.b32.xlu0 %v994, 119
        %v1000 = vpop.permute.xlu0 %999
        %v1003 = vadd.f32 %v982, %v998
        %v1004 = vadd.f32 %v983, %v1000
        %v1005 = vld [vmem:[%s1 + $0x24] sm:$0x1]
        %v1006 = vlaneseq
        %v1007 = vshrl.u32 %v1006, 7
        %v1008 = vsub.s32 0, %v1007
        %v1009 = vrot.slane %v1005, %v1008
        %1011 = vrot.lane.b32.xlu0 %v1009, 10
        %v1012 = vpop.permute.xlu0 %1011
        %v1014 = vmul.f32 %v688, %v1012
        %v1015 = vmul.f32 %v689, %v1012
        %1018 = vrot.lane.b32.xlu0 %v1014, 118
        %v1019 = vpop.permute.xlu0 %1018
        %1020 = vrot.lane.b32.xlu0 %v1015, 118
        %v1021 = vpop.permute.xlu0 %1020
        %v1024 = vadd.f32 %v1003, %v1019
        %v1025 = vadd.f32 %v1004, %v1021
        %v1026 = vld [vmem:[%s1 + $0x25] sm:$0x1]
        %v1027 = vlaneseq
        %v1028 = vshrl.u32 %v1027, 7
        %v1029 = vsub.s32 0, %v1028
        %v1030 = vrot.slane %v1026, %v1029
        %1032 = vrot.lane.b32.xlu0 %v1030, 11
        %v1033 = vpop.permute.xlu0 %1032
        %v1035 = vmul.f32 %v688, %v1033
        %v1036 = vmul.f32 %v689, %v1033
        %1039 = vrot.lane.b32.xlu0 %v1035, 117
        %v1040 = vpop.permute.xlu0 %1039
        %1041 = vrot.lane.b32.xlu0 %v1036, 117
        %v1042 = vpop.permute.xlu0 %1041
        %v1045 = vadd.f32 %v1024, %v1040
        %v1046 = vadd.f32 %v1025, %v1042
        %v1047 = vld [vmem:[%s1 + $0x26] sm:$0x1]
        %v1048 = vlaneseq
        %v1049 = vshrl.u32 %v1048, 7
        %v1050 = vsub.s32 0, %v1049
        %v1051 = vrot.slane %v1047, %v1050
        %1053 = vrot.lane.b32.xlu0 %v1051, 12
        %v1054 = vpop.permute.xlu0 %1053
        %v1056 = vmul.f32 %v688, %v1054
        %v1057 = vmul.f32 %v689, %v1054
        %1060 = vrot.lane.b32.xlu0 %v1056, 116
        %v1061 = vpop.permute.xlu0 %1060
        %1062 = vrot.lane.b32.xlu0 %v1057, 116
        %v1063 = vpop.permute.xlu0 %1062
        %v1066 = vadd.f32 %v1045, %v1061
        %v1067 = vadd.f32 %v1046, %v1063
        %v1068 = vld [vmem:[%s1 + $0x27] sm:$0x1]
        %v1069 = vlaneseq
        %v1070 = vshrl.u32 %v1069, 7
        %v1071 = vsub.s32 0, %v1070
        %v1072 = vrot.slane %v1068, %v1071
        %1074 = vrot.lane.b32.xlu0 %v1072, 13
        %v1075 = vpop.permute.xlu0 %1074
        %v1077 = vmul.f32 %v688, %v1075
        %v1078 = vmul.f32 %v689, %v1075
        %1081 = vrot.lane.b32.xlu0 %v1077, 115
        %v1082 = vpop.permute.xlu0 %1081
        %1083 = vrot.lane.b32.xlu0 %v1078, 115
        %v1084 = vpop.permute.xlu0 %1083
        %v1087 = vadd.f32 %v1066, %v1082
        %v1088 = vadd.f32 %v1067, %v1084
        %v1089 = vld [vmem:[%s1 + $0x28] sm:$0x1]
        %v1090 = vlaneseq
        %v1091 = vshrl.u32 %v1090, 7
        %v1092 = vsub.s32 0, %v1091
        %v1093 = vrot.slane %v1089, %v1092
        %1095 = vrot.lane.b32.xlu0 %v1093, 14
        %v1096 = vpop.permute.xlu0 %1095
        %v1098 = vmul.f32 %v688, %v1096
        %v1099 = vmul.f32 %v689, %v1096
        %1102 = vrot.lane.b32.xlu0 %v1098, 114
        %v1103 = vpop.permute.xlu0 %1102
        %1104 = vrot.lane.b32.xlu0 %v1099, 114
        %v1105 = vpop.permute.xlu0 %1104
        %v1108 = vadd.f32 %v1087, %v1103
        %v1109 = vadd.f32 %v1088, %v1105
        %v1110 = vld [vmem:[%s1 + $0x29] sm:$0x1]
        %v1111 = vlaneseq
        %v1112 = vshrl.u32 %v1111, 7
        %v1113 = vsub.s32 0, %v1112
        %v1114 = vrot.slane %v1110, %v1113
        %1116 = vrot.lane.b32.xlu0 %v1114, 15
        %v1117 = vpop.permute.xlu0 %1116
        %v1119 = vmul.f32 %v688, %v1117
        %v1120 = vmul.f32 %v689, %v1117
        %1123 = vrot.lane.b32.xlu0 %v1119, 113
        %v1124 = vpop.permute.xlu0 %1123
        %1125 = vrot.lane.b32.xlu0 %v1120, 113
        %v1126 = vpop.permute.xlu0 %1125
        %v1129 = vadd.f32 %v1108, %v1124
        %v1130 = vadd.f32 %v1109, %v1126
        %v1131 = vld [vmem:[%s237 + $0x2] sm:$0xff]
        %v1132 = vld [vmem:[%s237 + $0xa] sm:$0xff]
        %v1133 = vld [vmem:[%s1 + $0x2a] sm:$0x1]
        %v1134 = vlaneseq
        %v1135 = vshrl.u32 %v1134, 7
        %v1136 = vsub.s32 0, %v1135
        %v1137 = vrot.slane %v1133, %v1136
        %1139 = vrot.lane.b32.xlu0 %v1137, 1
        %v1140 = vpop.permute.xlu0 %1139
        %v1142 = vmul.f32 %v1131, %v1140
        %v1143 = vmul.f32 %v1132, %v1140
        %1146 = vrot.lane.b32.xlu0 %v1142, 127
        %v1147 = vpop.permute.xlu0 %1146
        %1148 = vrot.lane.b32.xlu0 %v1143, 127
        %v1149 = vpop.permute.xlu0 %1148
        %v1152 = vadd.f32 %v1129, %v1147
        %v1153 = vadd.f32 %v1130, %v1149
        %v1154 = vld [vmem:[%s1 + $0x2b] sm:$0x1]
        %v1155 = vlaneseq
        %v1156 = vshrl.u32 %v1155, 7
        %v1157 = vsub.s32 0, %v1156
        %v1158 = vrot.slane %v1154, %v1157
        %1160 = vrot.lane.b32.xlu0 %v1158, 2
        %v1161 = vpop.permute.xlu0 %1160
        %v1163 = vmul.f32 %v1131, %v1161
        %v1164 = vmul.f32 %v1132, %v1161
        %1167 = vrot.lane.b32.xlu0 %v1163, 126
        %v1168 = vpop.permute.xlu0 %1167
        %1169 = vrot.lane.b32.xlu0 %v1164, 126
        %v1170 = vpop.permute.xlu0 %1169
        %v1173 = vadd.f32 %v1152, %v1168
        %v1174 = vadd.f32 %v1153, %v1170
        %v1175 = vld [vmem:[%s1 + $0x2c] sm:$0x1]
        %v1176 = vlaneseq
        %v1177 = vshrl.u32 %v1176, 7
        %v1178 = vsub.s32 0, %v1177
        %v1179 = vrot.slane %v1175, %v1178
        %1181 = vrot.lane.b32.xlu0 %v1179, 3
        %v1182 = vpop.permute.xlu0 %1181
        %v1184 = vmul.f32 %v1131, %v1182
        %v1185 = vmul.f32 %v1132, %v1182
        %1188 = vrot.lane.b32.xlu0 %v1184, 125
        %v1189 = vpop.permute.xlu0 %1188
        %1190 = vrot.lane.b32.xlu0 %v1185, 125
        %v1191 = vpop.permute.xlu0 %1190
        %v1194 = vadd.f32 %v1173, %v1189
        %v1195 = vadd.f32 %v1174, %v1191
        %v1196 = vld [vmem:[%s1 + $0x2d] sm:$0x1]
        %v1197 = vlaneseq
        %v1198 = vshrl.u32 %v1197, 7
        %v1199 = vsub.s32 0, %v1198
        %v1200 = vrot.slane %v1196, %v1199
        %1202 = vrot.lane.b32.xlu0 %v1200, 4
        %v1203 = vpop.permute.xlu0 %1202
        %v1205 = vmul.f32 %v1131, %v1203
        %v1206 = vmul.f32 %v1132, %v1203
        %1209 = vrot.lane.b32.xlu0 %v1205, 124
        %v1210 = vpop.permute.xlu0 %1209
        %1211 = vrot.lane.b32.xlu0 %v1206, 124
        %v1212 = vpop.permute.xlu0 %1211
        %v1215 = vadd.f32 %v1194, %v1210
        %v1216 = vadd.f32 %v1195, %v1212
        %v1217 = vld [vmem:[%s1 + $0x2e] sm:$0x1]
        %v1218 = vlaneseq
        %v1219 = vshrl.u32 %v1218, 7
        %v1220 = vsub.s32 0, %v1219
        %v1221 = vrot.slane %v1217, %v1220
        %1223 = vrot.lane.b32.xlu0 %v1221, 5
        %v1224 = vpop.permute.xlu0 %1223
        %v1226 = vmul.f32 %v1131, %v1224
        %v1227 = vmul.f32 %v1132, %v1224
        %1230 = vrot.lane.b32.xlu0 %v1226, 123
        %v1231 = vpop.permute.xlu0 %1230
        %1232 = vrot.lane.b32.xlu0 %v1227, 123
        %v1233 = vpop.permute.xlu0 %1232
        %v1236 = vadd.f32 %v1215, %v1231
        %v1237 = vadd.f32 %v1216, %v1233
        %v1238 = vld [vmem:[%s1 + $0x2f] sm:$0x1]
        %v1239 = vlaneseq
        %v1240 = vshrl.u32 %v1239, 7
        %v1241 = vsub.s32 0, %v1240
        %v1242 = vrot.slane %v1238, %v1241
        %1244 = vrot.lane.b32.xlu0 %v1242, 6
        %v1245 = vpop.permute.xlu0 %1244
        %v1247 = vmul.f32 %v1131, %v1245
        %v1248 = vmul.f32 %v1132, %v1245
        %1251 = vrot.lane.b32.xlu0 %v1247, 122
        %v1252 = vpop.permute.xlu0 %1251
        %1253 = vrot.lane.b32.xlu0 %v1248, 122
        %v1254 = vpop.permute.xlu0 %1253
        %v1257 = vadd.f32 %v1236, %v1252
        %v1258 = vadd.f32 %v1237, %v1254
        %v1259 = vld [vmem:[%s1 + $0x30] sm:$0x1]
        %v1260 = vlaneseq
        %v1261 = vshrl.u32 %v1260, 7
        %v1262 = vsub.s32 0, %v1261
        %v1263 = vrot.slane %v1259, %v1262
        %1265 = vrot.lane.b32.xlu0 %v1263, 7
        %v1266 = vpop.permute.xlu0 %1265
        %v1268 = vmul.f32 %v1131, %v1266
        %v1269 = vmul.f32 %v1132, %v1266
        %1272 = vrot.lane.b32.xlu0 %v1268, 121
        %v1273 = vpop.permute.xlu0 %1272
        %1274 = vrot.lane.b32.xlu0 %v1269, 121
        %v1275 = vpop.permute.xlu0 %1274
        %v1278 = vadd.f32 %v1257, %v1273
        %v1279 = vadd.f32 %v1258, %v1275
        %v1280 = vld [vmem:[%s1 + $0x31] sm:$0x1]
        %v1281 = vlaneseq
        %v1282 = vshrl.u32 %v1281, 7
        %v1283 = vsub.s32 0, %v1282
        %v1284 = vrot.slane %v1280, %v1283
        %1286 = vrot.lane.b32.xlu0 %v1284, 5
        %v1287 = vpop.permute.xlu0 %1286
        %v1289 = vmul.f32 %v1131, %v1287
        %v1290 = vmul.f32 %v1132, %v1287
        %1293 = vrot.lane.b32.xlu0 %v1289, 123
        %v1294 = vpop.permute.xlu0 %1293
        %1295 = vrot.lane.b32.xlu0 %v1290, 123
        %v1296 = vpop.permute.xlu0 %1295
        %v1299 = vadd.f32 %v1278, %v1294
        %v1300 = vadd.f32 %v1279, %v1296
        %v1301 = vld [vmem:[%s1 + $0x32] sm:$0x1]
        %v1302 = vlaneseq
        %v1303 = vshrl.u32 %v1302, 7
        %v1304 = vsub.s32 0, %v1303
        %v1305 = vrot.slane %v1301, %v1304
        %1307 = vrot.lane.b32.xlu0 %v1305, 6
        %v1308 = vpop.permute.xlu0 %1307
        %v1310 = vmul.f32 %v1131, %v1308
        %v1311 = vmul.f32 %v1132, %v1308
        %1314 = vrot.lane.b32.xlu0 %v1310, 122
        %v1315 = vpop.permute.xlu0 %1314
        %1316 = vrot.lane.b32.xlu0 %v1311, 122
        %v1317 = vpop.permute.xlu0 %1316
        %v1320 = vadd.f32 %v1299, %v1315
        %v1321 = vadd.f32 %v1300, %v1317
        %v1322 = vld [vmem:[%s1 + $0x33] sm:$0x1]
        %v1323 = vlaneseq
        %v1324 = vshrl.u32 %v1323, 7
        %v1325 = vsub.s32 0, %v1324
        %v1326 = vrot.slane %v1322, %v1325
        %1328 = vrot.lane.b32.xlu0 %v1326, 7
        %v1329 = vpop.permute.xlu0 %1328
        %v1331 = vmul.f32 %v1131, %v1329
        %v1332 = vmul.f32 %v1132, %v1329
        %1335 = vrot.lane.b32.xlu0 %v1331, 121
        %v1336 = vpop.permute.xlu0 %1335
        %1337 = vrot.lane.b32.xlu0 %v1332, 121
        %v1338 = vpop.permute.xlu0 %1337
        %v1341 = vadd.f32 %v1320, %v1336
        %v1342 = vadd.f32 %v1321, %v1338
        %v1343 = vld [vmem:[%s1 + $0x34] sm:$0x1]
        %v1344 = vlaneseq
        %v1345 = vshrl.u32 %v1344, 7
        %v1346 = vsub.s32 0, %v1345
        %v1347 = vrot.slane %v1343, %v1346
        %1349 = vrot.lane.b32.xlu0 %v1347, 8
        %v1350 = vpop.permute.xlu0 %1349
        %v1352 = vmul.f32 %v1131, %v1350
        %v1353 = vmul.f32 %v1132, %v1350
        %1356 = vrot.lane.b32.xlu0 %v1352, 120
        %v1357 = vpop.permute.xlu0 %1356
        %1358 = vrot.lane.b32.xlu0 %v1353, 120
        %v1359 = vpop.permute.xlu0 %1358
        %v1362 = vadd.f32 %v1341, %v1357
        %v1363 = vadd.f32 %v1342, %v1359
        %v1364 = vld [vmem:[%s1 + $0x35] sm:$0x1]
        %v1365 = vlaneseq
        %v1366 = vshrl.u32 %v1365, 7
        %v1367 = vsub.s32 0, %v1366
        %v1368 = vrot.slane %v1364, %v1367
        %1370 = vrot.lane.b32.xlu0 %v1368, 9
        %v1371 = vpop.permute.xlu0 %1370
        %v1373 = vmul.f32 %v1131, %v1371
        %v1374 = vmul.f32 %v1132, %v1371
        %1377 = vrot.lane.b32.xlu0 %v1373, 119
        %v1378 = vpop.permute.xlu0 %1377
        %1379 = vrot.lane.b32.xlu0 %v1374, 119
        %v1380 = vpop.permute.xlu0 %1379
        %v1383 = vadd.f32 %v1362, %v1378
        %v1384 = vadd.f32 %v1363, %v1380
        %v1385 = vld [vmem:[%s1 + $0x36] sm:$0x1]
        %v1386 = vlaneseq
        %v1387 = vshrl.u32 %v1386, 7
        %v1388 = vsub.s32 0, %v1387
        %v1389 = vrot.slane %v1385, %v1388
        %1391 = vrot.lane.b32.xlu0 %v1389, 10
        %v1392 = vpop.permute.xlu0 %1391
        %v1394 = vmul.f32 %v1131, %v1392
        %v1395 = vmul.f32 %v1132, %v1392
        %1398 = vrot.lane.b32.xlu0 %v1394, 118
        %v1399 = vpop.permute.xlu0 %1398
        %1400 = vrot.lane.b32.xlu0 %v1395, 118
        %v1401 = vpop.permute.xlu0 %1400
        %v1404 = vadd.f32 %v1383, %v1399
        %v1405 = vadd.f32 %v1384, %v1401
        %v1406 = vld [vmem:[%s1 + $0x37] sm:$0x1]
        %v1407 = vlaneseq
        %v1408 = vshrl.u32 %v1407, 7
        %v1409 = vsub.s32 0, %v1408
        %v1410 = vrot.slane %v1406, %v1409
        %1412 = vrot.lane.b32.xlu0 %v1410, 11
        %v1413 = vpop.permute.xlu0 %1412
        %v1415 = vmul.f32 %v1131, %v1413
        %v1416 = vmul.f32 %v1132, %v1413
        %1419 = vrot.lane.b32.xlu0 %v1415, 117
        %v1420 = vpop.permute.xlu0 %1419
        %1421 = vrot.lane.b32.xlu0 %v1416, 117
        %v1422 = vpop.permute.xlu0 %1421
        %v1425 = vadd.f32 %v1404, %v1420
        %v1426 = vadd.f32 %v1405, %v1422
        %v1427 = vld [vmem:[%s1 + $0x38] sm:$0x1]
        %v1428 = vlaneseq
        %v1429 = vshrl.u32 %v1428, 7
        %v1430 = vsub.s32 0, %v1429
        %v1431 = vrot.slane %v1427, %v1430
        %1433 = vrot.lane.b32.xlu0 %v1431, 9
        %v1434 = vpop.permute.xlu0 %1433
        %v1436 = vmul.f32 %v1131, %v1434
        %v1437 = vmul.f32 %v1132, %v1434
        %1440 = vrot.lane.b32.xlu0 %v1436, 119
        %v1441 = vpop.permute.xlu0 %1440
        %1442 = vrot.lane.b32.xlu0 %v1437, 119
        %v1443 = vpop.permute.xlu0 %1442
        %v1446 = vadd.f32 %v1425, %v1441
        %v1447 = vadd.f32 %v1426, %v1443
        %v1448 = vld [vmem:[%s1 + $0x39] sm:$0x1]
        %v1449 = vlaneseq
        %v1450 = vshrl.u32 %v1449, 7
        %v1451 = vsub.s32 0, %v1450
        %v1452 = vrot.slane %v1448, %v1451
        %1454 = vrot.lane.b32.xlu0 %v1452, 10
        %v1455 = vpop.permute.xlu0 %1454
        %v1457 = vmul.f32 %v1131, %v1455
        %v1458 = vmul.f32 %v1132, %v1455
        %1461 = vrot.lane.b32.xlu0 %v1457, 118
        %v1462 = vpop.permute.xlu0 %1461
        %1463 = vrot.lane.b32.xlu0 %v1458, 118
        %v1464 = vpop.permute.xlu0 %1463
        %v1467 = vadd.f32 %v1446, %v1462
        %v1468 = vadd.f32 %v1447, %v1464
        %v1469 = vld [vmem:[%s1 + $0x3a] sm:$0x1]
        %v1470 = vlaneseq
        %v1471 = vshrl.u32 %v1470, 7
        %v1472 = vsub.s32 0, %v1471
        %v1473 = vrot.slane %v1469, %v1472
        %1475 = vrot.lane.b32.xlu0 %v1473, 11
        %v1476 = vpop.permute.xlu0 %1475
        %v1478 = vmul.f32 %v1131, %v1476
        %v1479 = vmul.f32 %v1132, %v1476
        %1482 = vrot.lane.b32.xlu0 %v1478, 117
        %v1483 = vpop.permute.xlu0 %1482
        %1484 = vrot.lane.b32.xlu0 %v1479, 117
        %v1485 = vpop.permute.xlu0 %1484
        %v1488 = vadd.f32 %v1467, %v1483
        %v1489 = vadd.f32 %v1468, %v1485
        %v1490 = vld [vmem:[%s1 + $0x3b] sm:$0x1]
        %v1491 = vlaneseq
        %v1492 = vshrl.u32 %v1491, 7
        %v1493 = vsub.s32 0, %v1492
        %v1494 = vrot.slane %v1490, %v1493
        %1496 = vrot.lane.b32.xlu0 %v1494, 12
        %v1497 = vpop.permute.xlu0 %1496
        %v1499 = vmul.f32 %v1131, %v1497
        %v1500 = vmul.f32 %v1132, %v1497
        %1503 = vrot.lane.b32.xlu0 %v1499, 116
        %v1504 = vpop.permute.xlu0 %1503
        %1505 = vrot.lane.b32.xlu0 %v1500, 116
        %v1506 = vpop.permute.xlu0 %1505
        %v1509 = vadd.f32 %v1488, %v1504
        %v1510 = vadd.f32 %v1489, %v1506
        %v1511 = vld [vmem:[%s1 + $0x3c] sm:$0x1]
        %v1512 = vlaneseq
        %v1513 = vshrl.u32 %v1512, 7
        %v1514 = vsub.s32 0, %v1513
        %v1515 = vrot.slane %v1511, %v1514
        %1517 = vrot.lane.b32.xlu0 %v1515, 13
        %v1518 = vpop.permute.xlu0 %1517
        %v1520 = vmul.f32 %v1131, %v1518
        %v1521 = vmul.f32 %v1132, %v1518
        %1524 = vrot.lane.b32.xlu0 %v1520, 115
        %v1525 = vpop.permute.xlu0 %1524
        %1526 = vrot.lane.b32.xlu0 %v1521, 115
        %v1527 = vpop.permute.xlu0 %1526
        %v1530 = vadd.f32 %v1509, %v1525
        %v1531 = vadd.f32 %v1510, %v1527
        %v1532 = vld [vmem:[%s1 + $0x3d] sm:$0x1]
        %v1533 = vlaneseq
        %v1534 = vshrl.u32 %v1533, 7
        %v1535 = vsub.s32 0, %v1534
        %v1536 = vrot.slane %v1532, %v1535
        %1538 = vrot.lane.b32.xlu0 %v1536, 14
        %v1539 = vpop.permute.xlu0 %1538
        %v1541 = vmul.f32 %v1131, %v1539
        %v1542 = vmul.f32 %v1132, %v1539
        %1545 = vrot.lane.b32.xlu0 %v1541, 114
        %v1546 = vpop.permute.xlu0 %1545
        %1547 = vrot.lane.b32.xlu0 %v1542, 114
        %v1548 = vpop.permute.xlu0 %1547
        %v1551 = vadd.f32 %v1530, %v1546
        %v1552 = vadd.f32 %v1531, %v1548
        %v1553 = vld [vmem:[%s1 + $0x3e] sm:$0x1]
        %v1554 = vlaneseq
        %v1555 = vshrl.u32 %v1554, 7
        %v1556 = vsub.s32 0, %v1555
        %v1557 = vrot.slane %v1553, %v1556
        %1559 = vrot.lane.b32.xlu0 %v1557, 15
        %v1560 = vpop.permute.xlu0 %1559
        %v1562 = vmul.f32 %v1131, %v1560
        %v1563 = vmul.f32 %v1132, %v1560
        %1566 = vrot.lane.b32.xlu0 %v1562, 113
        %v1567 = vpop.permute.xlu0 %1566
        %1568 = vrot.lane.b32.xlu0 %v1563, 113
        %v1569 = vpop.permute.xlu0 %1568
        %v1572 = vadd.f32 %v1551, %v1567
        %v1573 = vadd.f32 %v1552, %v1569
        %v1574 = vmax.f32 %v1572, 0.0
        %v1575 = vmax.f32 %v1573, 0.0
        %vm1578 = vcmask 1040384
        %v1579 = vrot.slane %v1574, 7
        %v1580 = vrot.slane %v1575, 7
        %v1581 = vsel %vm1578, %v1579, %v1580
        %v1584 = vsel %vm1578, 0.0, %v1579
        %v1585 = vsel %vm1578, %v1580, 0.0
        %1588 = vrot.lane.b32.xlu0 %v1584, 8
        %v1589 = vpop.permute.xlu0 %1588
        %1590 = vrot.lane.b32.xlu0 %v1581, 8
        %v1591 = vpop.permute.xlu0 %1590
        %1592 = vrot.lane.b32.xlu0 %v1585, 8
        %v1593 = vpop.permute.xlu0 %1592
        %vm1597 = vcmask 64512
        %v1598 = vsel %vm1597, 0.0, %v1589
        %v1599 = vsel %vm1597, 0.0, %v1591
        %v1600 = vsel %vm1597, 0.0, %v1593
        %vm1601 = vcmask 588800
        %v1602 = vsel %vm1601, %v1598, 0.0
        %v1603 = vsel %vm1601, %v1599, 0.0
        %v1604 = vsel %vm1601, %v1600, 0.0
        %v1605 = vld [vmem:[%s4] sm:$0x1]
        %v1607 = vlaneseq
        %v1608 = vshrl.u32 %v1607, 7
        %v1609 = vsub.s32 0, %v1608
        %v1610 = vrot.slane %v1605, %v1609
        %v1612 = vld [vmem:[#allocation2] sm:$0x1]
        %v1613 = vlaneseq
        %v1614 = vshrl.u32 %v1613, 7
        %v1615 = vsub.s32 0, %v1614
        %v1616 = vrot.slane %v1612, %v1615
        %1618 = vrot.lane.b32.xlu0 %v1616, 1
        %v1619 = vpop.permute.xlu0 %1618
        %v1621 = vmul.f32 %v1602, %v1619
        %v1622 = vmul.f32 %v1603, %v1619
        %1625 = vrot.lane.b32.xlu0 %v1621, 127
        %v1626 = vpop.permute.xlu0 %1625
        %1627 = vrot.lane.b32.xlu0 %v1622, 127
        %v1628 = vpop.permute.xlu0 %1627
        %v1631 = vadd.f32 %v1610, %v1626
        %v1632 = vadd.f32 %v1610, %v1628
        %v1633 = vld [vmem:[#allocation2 + $0x1] sm:$0x1]
        %v1634 = vlaneseq
        %v1635 = vshrl.u32 %v1634, 7
        %v1636 = vsub.s32 0, %v1635
        %v1637 = vrot.slane %v1633, %v1636
        %1639 = vrot.lane.b32.xlu0 %v1637, 2
        %v1640 = vpop.permute.xlu0 %1639
        %v1642 = vmul.f32 %v1602, %v1640
        %v1643 = vmul.f32 %v1603, %v1640
        %1646 = vrot.lane.b32.xlu0 %v1642, 126
        %v1647 = vpop.permute.xlu0 %1646
        %1648 = vrot.lane.b32.xlu0 %v1643, 126
        %v1649 = vpop.permute.xlu0 %1648
        %v1652 = vadd.f32 %v1631, %v1647
        %v1653 = vadd.f32 %v1632, %v1649
        %v1654 = vld [vmem:[#allocation2 + $0x2] sm:$0x1]
        %v1655 = vlaneseq
        %v1656 = vshrl.u32 %v1655, 7
        %v1657 = vsub.s32 0, %v1656
        %v1658 = vrot.slane %v1654, %v1657
        %1660 = vrot.lane.b32.xlu0 %v1658, 3
        %v1661 = vpop.permute.xlu0 %1660
        %v1663 = vmul.f32 %v1602, %v1661
        %v1664 = vmul.f32 %v1603, %v1661
        %1667 = vrot.lane.b32.xlu0 %v1663, 125
        %v1668 = vpop.permute.xlu0 %1667
        %1669 = vrot.lane.b32.xlu0 %v1664, 125
        %v1670 = vpop.permute.xlu0 %1669
        %v1673 = vadd.f32 %v1652, %v1668
        %v1674 = vadd.f32 %v1653, %v1670
        %v1675 = vld [vmem:[#allocation2 + $0x3] sm:$0x1]
        %v1676 = vlaneseq
        %v1677 = vshrl.u32 %v1676, 7
        %v1678 = vsub.s32 0, %v1677
        %v1679 = vrot.slane %v1675, %v1678
        %1681 = vrot.lane.b32.xlu0 %v1679, 4
        %v1682 = vpop.permute.xlu0 %1681
        %v1684 = vmul.f32 %v1602, %v1682
        %v1685 = vmul.f32 %v1603, %v1682
        %1688 = vrot.lane.b32.xlu0 %v1684, 124
        %v1689 = vpop.permute.xlu0 %1688
        %1690 = vrot.lane.b32.xlu0 %v1685, 124
        %v1691 = vpop.permute.xlu0 %1690
        %v1694 = vadd.f32 %v1673, %v1689
        %v1695 = vadd.f32 %v1674, %v1691
        %v1696 = vld [vmem:[#allocation2 + $0x4] sm:$0x1]
        %v1697 = vlaneseq
        %v1698 = vshrl.u32 %v1697, 7
        %v1699 = vsub.s32 0, %v1698
        %v1700 = vrot.slane %v1696, %v1699
        %1702 = vrot.lane.b32.xlu0 %v1700, 5
        %v1703 = vpop.permute.xlu0 %1702
        %v1705 = vmul.f32 %v1602, %v1703
        %v1706 = vmul.f32 %v1603, %v1703
        %1709 = vrot.lane.b32.xlu0 %v1705, 123
        %v1710 = vpop.permute.xlu0 %1709
        %1711 = vrot.lane.b32.xlu0 %v1706, 123
        %v1712 = vpop.permute.xlu0 %1711
        %v1715 = vadd.f32 %v1694, %v1710
        %v1716 = vadd.f32 %v1695, %v1712
        %v1717 = vld [vmem:[#allocation2 + $0x5] sm:$0x1]
        %v1718 = vlaneseq
        %v1719 = vshrl.u32 %v1718, 7
        %v1720 = vsub.s32 0, %v1719
        %v1721 = vrot.slane %v1717, %v1720
        %1723 = vrot.lane.b32.xlu0 %v1721, 6
        %v1724 = vpop.permute.xlu0 %1723
        %v1726 = vmul.f32 %v1602, %v1724
        %v1727 = vmul.f32 %v1603, %v1724
        %1730 = vrot.lane.b32.xlu0 %v1726, 122
        %v1731 = vpop.permute.xlu0 %1730
        %1732 = vrot.lane.b32.xlu0 %v1727, 122
        %v1733 = vpop.permute.xlu0 %1732
        %v1736 = vadd.f32 %v1715, %v1731
        %v1737 = vadd.f32 %v1716, %v1733
        %v1738 = vld [vmem:[#allocation2 + $0x6] sm:$0x1]
        %v1739 = vlaneseq
        %v1740 = vshrl.u32 %v1739, 7
        %v1741 = vsub.s32 0, %v1740
        %v1742 = vrot.slane %v1738, %v1741
        %1744 = vrot.lane.b32.xlu0 %v1742, 7
        %v1745 = vpop.permute.xlu0 %1744
        %v1747 = vmul.f32 %v1602, %v1745
        %v1748 = vmul.f32 %v1603, %v1745
        %1751 = vrot.lane.b32.xlu0 %v1747, 121
        %v1752 = vpop.permute.xlu0 %1751
        %1753 = vrot.lane.b32.xlu0 %v1748, 121
        %v1754 = vpop.permute.xlu0 %1753
        %v1757 = vadd.f32 %v1736, %v1752
        %v1758 = vadd.f32 %v1737, %v1754
        %v1759 = vld [vmem:[#allocation2 + $0x7] sm:$0x1]
        %v1760 = vlaneseq
        %v1761 = vshrl.u32 %v1760, 7
        %v1762 = vsub.s32 0, %v1761
        %v1763 = vrot.slane %v1759, %v1762
        %1765 = vrot.lane.b32.xlu0 %v1763, 5
        %v1766 = vpop.permute.xlu0 %1765
        %v1768 = vmul.f32 %v1602, %v1766
        %v1769 = vmul.f32 %v1603, %v1766
        %1772 = vrot.lane.b32.xlu0 %v1768, 123
        %v1773 = vpop.permute.xlu0 %1772
        %1774 = vrot.lane.b32.xlu0 %v1769, 123
        %v1775 = vpop.permute.xlu0 %1774
        %v1778 = vadd.f32 %v1757, %v1773
        %v1779 = vadd.f32 %v1758, %v1775
        %v1780 = vld [vmem:[#allocation2 + $0x8] sm:$0x1]
        %v1781 = vlaneseq
        %v1782 = vshrl.u32 %v1781, 7
        %v1783 = vsub.s32 0, %v1782
        %v1784 = vrot.slane %v1780, %v1783
        %1786 = vrot.lane.b32.xlu0 %v1784, 6
        %v1787 = vpop.permute.xlu0 %1786
        %v1789 = vmul.f32 %v1602, %v1787
        %v1790 = vmul.f32 %v1603, %v1787
        %1793 = vrot.lane.b32.xlu0 %v1789, 122
        %v1794 = vpop.permute.xlu0 %1793
        %1795 = vrot.lane.b32.xlu0 %v1790, 122
        %v1796 = vpop.permute.xlu0 %1795
        %v1799 = vadd.f32 %v1778, %v1794
        %v1800 = vadd.f32 %v1779, %v1796
        %v1801 = vld [vmem:[#allocation2 + $0x9] sm:$0x1]
        %v1802 = vlaneseq
        %v1803 = vshrl.u32 %v1802, 7
        %v1804 = vsub.s32 0, %v1803
        %v1805 = vrot.slane %v1801, %v1804
        %1807 = vrot.lane.b32.xlu0 %v1805, 7
        %v1808 = vpop.permute.xlu0 %1807
        %v1810 = vmul.f32 %v1602, %v1808
        %v1811 = vmul.f32 %v1603, %v1808
        %1814 = vrot.lane.b32.xlu0 %v1810, 121
        %v1815 = vpop.permute.xlu0 %1814
        %1816 = vrot.lane.b32.xlu0 %v1811, 121
        %v1817 = vpop.permute.xlu0 %1816
        %v1820 = vadd.f32 %v1799, %v1815
        %v1821 = vadd.f32 %v1800, %v1817
        %v1822 = vld [vmem:[#allocation2 + $0xa] sm:$0x1]
        %v1823 = vlaneseq
        %v1824 = vshrl.u32 %v1823, 7
        %v1825 = vsub.s32 0, %v1824
        %v1826 = vrot.slane %v1822, %v1825
        %1828 = vrot.lane.b32.xlu0 %v1826, 8
        %v1829 = vpop.permute.xlu0 %1828
        %v1831 = vmul.f32 %v1602, %v1829
        %v1832 = vmul.f32 %v1603, %v1829
        %1835 = vrot.lane.b32.xlu0 %v1831, 120
        %v1836 = vpop.permute.xlu0 %1835
        %1837 = vrot.lane.b32.xlu0 %v1832, 120
        %v1838 = vpop.permute.xlu0 %1837
        %v1841 = vadd.f32 %v1820, %v1836
        %v1842 = vadd.f32 %v1821, %v1838
        %v1843 = vld [vmem:[#allocation2 + $0xb] sm:$0x1]
        %v1844 = vlaneseq
        %v1845 = vshrl.u32 %v1844, 7
        %v1846 = vsub.s32 0, %v1845
        %v1847 = vrot.slane %v1843, %v1846
        %1849 = vrot.lane.b32.xlu0 %v1847, 9
        %v1850 = vpop.permute.xlu0 %1849
        %v1852 = vmul.f32 %v1602, %v1850
        %v1853 = vmul.f32 %v1603, %v1850
        %1856 = vrot.lane.b32.xlu0 %v1852, 119
        %v1857 = vpop.permute.xlu0 %1856
        %1858 = vrot.lane.b32.xlu0 %v1853, 119
        %v1859 = vpop.permute.xlu0 %1858
        %v1862 = vadd.f32 %v1841, %v1857
        %v1863 = vadd.f32 %v1842, %v1859
        %v1864 = vld [vmem:[#allocation2 + $0xc] sm:$0x1]
        %v1865 = vlaneseq
        %v1866 = vshrl.u32 %v1865, 7
        %v1867 = vsub.s32 0, %v1866
        %v1868 = vrot.slane %v1864, %v1867
        %1870 = vrot.lane.b32.xlu0 %v1868, 10
        %v1871 = vpop.permute.xlu0 %1870
        %v1873 = vmul.f32 %v1602, %v1871
        %v1874 = vmul.f32 %v1603, %v1871
        %1877 = vrot.lane.b32.xlu0 %v1873, 118
        %v1878 = vpop.permute.xlu0 %1877
        %1879 = vrot.lane.b32.xlu0 %v1874, 118
        %v1880 = vpop.permute.xlu0 %1879
        %v1883 = vadd.f32 %v1862, %v1878
        %v1884 = vadd.f32 %v1863, %v1880
        %v1885 = vld [vmem:[#allocation2 + $0xd] sm:$0x1]
        %v1886 = vlaneseq
        %v1887 = vshrl.u32 %v1886, 7
        %v1888 = vsub.s32 0, %v1887
        %v1889 = vrot.slane %v1885, %v1888
        %1891 = vrot.lane.b32.xlu0 %v1889, 11
        %v1892 = vpop.permute.xlu0 %1891
        %v1894 = vmul.f32 %v1602, %v1892
        %v1895 = vmul.f32 %v1603, %v1892
        %1898 = vrot.lane.b32.xlu0 %v1894, 117
        %v1899 = vpop.permute.xlu0 %1898
        %1900 = vrot.lane.b32.xlu0 %v1895, 117
        %v1901 = vpop.permute.xlu0 %1900
        %v1904 = vadd.f32 %v1883, %v1899
        %v1905 = vadd.f32 %v1884, %v1901
        %v1906 = vld [vmem:[#allocation2 + $0xe] sm:$0x1]
        %v1907 = vlaneseq
        %v1908 = vshrl.u32 %v1907, 7
        %v1909 = vsub.s32 0, %v1908
        %v1910 = vrot.slane %v1906, %v1909
        %1912 = vrot.lane.b32.xlu0 %v1910, 9
        %v1913 = vpop.permute.xlu0 %1912
        %v1915 = vmul.f32 %v1602, %v1913
        %v1916 = vmul.f32 %v1603, %v1913
        %1919 = vrot.lane.b32.xlu0 %v1915, 119
        %v1920 = vpop.permute.xlu0 %1919
        %1921 = vrot.lane.b32.xlu0 %v1916, 119
        %v1922 = vpop.permute.xlu0 %1921
        %v1925 = vadd.f32 %v1904, %v1920
        %v1926 = vadd.f32 %v1905, %v1922
        %v1927 = vld [vmem:[#allocation2 + $0xf] sm:$0x1]
        %v1928 = vlaneseq
        %v1929 = vshrl.u32 %v1928, 7
        %v1930 = vsub.s32 0, %v1929
        %v1931 = vrot.slane %v1927, %v1930
        %1933 = vrot.lane.b32.xlu0 %v1931, 10
        %v1934 = vpop.permute.xlu0 %1933
        %v1936 = vmul.f32 %v1602, %v1934
        %v1937 = vmul.f32 %v1603, %v1934
        %1940 = vrot.lane.b32.xlu0 %v1936, 118
        %v1941 = vpop.permute.xlu0 %1940
        %1942 = vrot.lane.b32.xlu0 %v1937, 118
        %v1943 = vpop.permute.xlu0 %1942
        %v1946 = vadd.f32 %v1925, %v1941
        %v1947 = vadd.f32 %v1926, %v1943
        %v1948 = vld [vmem:[#allocation2 + $0x10] sm:$0x1]
        %v1949 = vlaneseq
        %v1950 = vshrl.u32 %v1949, 7
        %v1951 = vsub.s32 0, %v1950
        %v1952 = vrot.slane %v1948, %v1951
        %1954 = vrot.lane.b32.xlu0 %v1952, 11
        %v1955 = vpop.permute.xlu0 %1954
        %v1957 = vmul.f32 %v1602, %v1955
        %v1958 = vmul.f32 %v1603, %v1955
        %1961 = vrot.lane.b32.xlu0 %v1957, 117
        %v1962 = vpop.permute.xlu0 %1961
        %1963 = vrot.lane.b32.xlu0 %v1958, 117
        %v1964 = vpop.permute.xlu0 %1963
        %v1967 = vadd.f32 %v1946, %v1962
        %v1968 = vadd.f32 %v1947, %v1964
        %v1969 = vld [vmem:[#allocation2 + $0x11] sm:$0x1]
        %v1970 = vlaneseq
        %v1971 = vshrl.u32 %v1970, 7
        %v1972 = vsub.s32 0, %v1971
        %v1973 = vrot.slane %v1969, %v1972
        %1975 = vrot.lane.b32.xlu0 %v1973, 12
        %v1976 = vpop.permute.xlu0 %1975
        %v1978 = vmul.f32 %v1602, %v1976
        %v1979 = vmul.f32 %v1603, %v1976
        %1982 = vrot.lane.b32.xlu0 %v1978, 116
        %v1983 = vpop.permute.xlu0 %1982
        %1984 = vrot.lane.b32.xlu0 %v1979, 116
        %v1985 = vpop.permute.xlu0 %1984
        %v1988 = vadd.f32 %v1967, %v1983
        %v1989 = vadd.f32 %v1968, %v1985
        %v1990 = vld [vmem:[#allocation2 + $0x12] sm:$0x1]
        %v1991 = vlaneseq
        %v1992 = vshrl.u32 %v1991, 7
        %v1993 = vsub.s32 0, %v1992
        %v1994 = vrot.slane %v1990, %v1993
        %1996 = vrot.lane.b32.xlu0 %v1994, 13
        %v1997 = vpop.permute.xlu0 %1996
        %v1999 = vmul.f32 %v1602, %v1997
        %v2000 = vmul.f32 %v1603, %v1997
        %2003 = vrot.lane.b32.xlu0 %v1999, 115
        %v2004 = vpop.permute.xlu0 %2003
        %2005 = vrot.lane.b32.xlu0 %v2000, 115
        %v2006 = vpop.permute.xlu0 %2005
        %v2009 = vadd.f32 %v1988, %v2004
        %v2010 = vadd.f32 %v1989, %v2006
        %v2011 = vld [vmem:[#allocation2 + $0x13] sm:$0x1]
        %v2012 = vlaneseq
        %v2013 = vshrl.u32 %v2012, 7
        %v2014 = vsub.s32 0, %v2013
        %v2015 = vrot.slane %v2011, %v2014
        %2017 = vrot.lane.b32.xlu0 %v2015, 14
        %v2018 = vpop.permute.xlu0 %2017
        %v2020 = vmul.f32 %v1602, %v2018
        %v2021 = vmul.f32 %v1603, %v2018
        %2024 = vrot.lane.b32.xlu0 %v2020, 114
        %v2025 = vpop.permute.xlu0 %2024
        %2026 = vrot.lane.b32.xlu0 %v2021, 114
        %v2027 = vpop.permute.xlu0 %2026
        %v2030 = vadd.f32 %v2009, %v2025
        %v2031 = vadd.f32 %v2010, %v2027
        %v2032 = vld [vmem:[#allocation2 + $0x14] sm:$0x1]
        %v2033 = vlaneseq
        %v2034 = vshrl.u32 %v2033, 7
        %v2035 = vsub.s32 0, %v2034
        %v2036 = vrot.slane %v2032, %v2035
        %2038 = vrot.lane.b32.xlu0 %v2036, 15
        %v2039 = vpop.permute.xlu0 %2038
        %v2041 = vmul.f32 %v1602, %v2039
        %v2042 = vmul.f32 %v1603, %v2039
        %2045 = vrot.lane.b32.xlu0 %v2041, 113
        %v2046 = vpop.permute.xlu0 %2045
        %2047 = vrot.lane.b32.xlu0 %v2042, 113
        %v2048 = vpop.permute.xlu0 %2047
        %v2051 = vadd.f32 %v2030, %v2046
        %v2052 = vadd.f32 %v2031, %v2048
        %v2053 = vld [vmem:[#allocation2 + $0x15] sm:$0x1]
        %v2054 = vlaneseq
        %v2055 = vshrl.u32 %v2054, 7
        %v2056 = vsub.s32 0, %v2055
        %v2057 = vrot.slane %v2053, %v2056
        %2059 = vrot.lane.b32.xlu0 %v2057, 1
        %v2060 = vpop.permute.xlu0 %2059
        %v2062 = vmul.f32 %v1602, %v2060
        %v2063 = vmul.f32 %v1603, %v2060
        %v2064 = vmul.f32 %v1604, %v2060
        %vm2068 = vcmask 1046528
        %v2069 = vrot.slane %v2062, 1
        %v2070 = vrot.slane %v2063, 1
        %v2071 = vsel %vm2068, %v2069, %v2070
        %v2072 = vrot.slane %v2064, 1
        %v2073 = vsel %vm2068, %v2070, %v2072
        %2074 = vrot.lane.b32.xlu0 %v2071, 127
        %v2075 = vpop.permute.xlu0 %2074
        %2076 = vrot.lane.b32.xlu0 %v2073, 127
        %v2077 = vpop.permute.xlu0 %2076
        %v2080 = vadd.f32 %v2051, %v2075
        %v2081 = vadd.f32 %v2052, %v2077
        %v2082 = vld [vmem:[#allocation2 + $0x16] sm:$0x1]
        %v2083 = vlaneseq
        %v2084 = vshrl.u32 %v2083, 7
        %v2085 = vsub.s32 0, %v2084
        %v2086 = vrot.slane %v2082, %v2085
        %2088 = vrot.lane.b32.xlu0 %v2086, 2
        %v2089 = vpop.permute.xlu0 %2088
        %v2091 = vmul.f32 %v1602, %v2089
        %v2092 = vmul.f32 %v1603, %v2089
        %v2093 = vmul.f32 %v1604, %v2089
        %v2097 = vrot.slane %v2091, 1
        %v2098 = vrot.slane %v2092, 1
        %v2099 = vsel %vm2068, %v2097, %v2098
        %v2100 = vrot.slane %v2093, 1
        %v2101 = vsel %vm2068, %v2098, %v2100
        %2102 = vrot.lane.b32.xlu0 %v2099, 126
        %v2103 = vpop.permute.xlu0 %2102
        %2104 = vrot.lane.b32.xlu0 %v2101, 126
        %v2105 = vpop.permute.xlu0 %2104
        %v2108 = vadd.f32 %v2080, %v2103
        %v2109 = vadd.f32 %v2081, %v2105
        %v2110 = vld [vmem:[#allocation2 + $0x17] sm:$0x1]
        %v2111 = vlaneseq
        %v2112 = vshrl.u32 %v2111, 7
        %v2113 = vsub.s32 0, %v2112
        %v2114 = vrot.slane %v2110, %v2113
        %2116 = vrot.lane.b32.xlu0 %v2114, 3
        %v2117 = vpop.permute.xlu0 %2116
        %v2119 = vmul.f32 %v1602, %v2117
        %v2120 = vmul.f32 %v1603, %v2117
        %v2121 = vmul.f32 %v1604, %v2117
        %v2125 = vrot.slane %v2119, 1
        %v2126 = vrot.slane %v2120, 1
        %v2127 = vsel %vm2068, %v2125, %v2126
        %v2128 = vrot.slane %v2121, 1
        %v2129 = vsel %vm2068, %v2126, %v2128
        %2130 = vrot.lane.b32.xlu0 %v2127, 125
        %v2131 = vpop.permute.xlu0 %2130
        %2132 = vrot.lane.b32.xlu0 %v2129, 125
        %v2133 = vpop.permute.xlu0 %2132
        %v2136 = vadd.f32 %v2108, %v2131
        %v2137 = vadd.f32 %v2109, %v2133
        %v2138 = vld [vmem:[#allocation2 + $0x18] sm:$0x1]
        %v2139 = vlaneseq
        %v2140 = vshrl.u32 %v2139, 7
        %v2141 = vsub.s32 0, %v2140
        %v2142 = vrot.slane %v2138, %v2141
        %2144 = vrot.lane.b32.xlu0 %v2142, 4
        %v2145 = vpop.permute.xlu0 %2144
        %v2147 = vmul.f32 %v1602, %v2145
        %v2148 = vmul.f32 %v1603, %v2145
        %v2149 = vmul.f32 %v1604, %v2145
        %v2153 = vrot.slane %v2147, 1
        %v2154 = vrot.slane %v2148, 1
        %v2155 = vsel %vm2068, %v2153, %v2154
        %v2156 = vrot.slane %v2149, 1
        %v2157 = vsel %vm2068, %v2154, %v2156
        %2158 = vrot.lane.b32.xlu0 %v2155, 124
        %v2159 = vpop.permute.xlu0 %2158
        %2160 = vrot.lane.b32.xlu0 %v2157, 124
        %v2161 = vpop.permute.xlu0 %2160
        %v2164 = vadd.f32 %v2136, %v2159
        %v2165 = vadd.f32 %v2137, %v2161
        %v2166 = vld [vmem:[#allocation2 + $0x19] sm:$0x1]
        %v2167 = vlaneseq
        %v2168 = vshrl.u32 %v2167, 7
        %v2169 = vsub.s32 0, %v2168
        %v2170 = vrot.slane %v2166, %v2169
        %2172 = vrot.lane.b32.xlu0 %v2170, 5
        %v2173 = vpop.permute.xlu0 %2172
        %v2175 = vmul.f32 %v1602, %v2173
        %v2176 = vmul.f32 %v1603, %v2173
        %v2177 = vmul.f32 %v1604, %v2173
        %v2181 = vrot.slane %v2175, 1
        %v2182 = vrot.slane %v2176, 1
        %v2183 = vsel %vm2068, %v2181, %v2182
        %v2184 = vrot.slane %v2177, 1
        %v2185 = vsel %vm2068, %v2182, %v2184
        %2186 = vrot.lane.b32.xlu0 %v2183, 123
        %v2187 = vpop.permute.xlu0 %2186
        %2188 = vrot.lane.b32.xlu0 %v2185, 123
        %v2189 = vpop.permute.xlu0 %2188
        %v2192 = vadd.f32 %v2164, %v2187
        %v2193 = vadd.f32 %v2165, %v2189
        %v2194 = vld [vmem:[#allocation2 + $0x1a] sm:$0x1]
        %v2195 = vlaneseq
        %v2196 = vshrl.u32 %v2195, 7
        %v2197 = vsub.s32 0, %v2196
        %v2198 = vrot.slane %v2194, %v2197
        %2200 = vrot.lane.b32.xlu0 %v2198, 6
        %v2201 = vpop.permute.xlu0 %2200
        %v2203 = vmul.f32 %v1602, %v2201
        %v2204 = vmul.f32 %v1603, %v2201
        %v2205 = vmul.f32 %v1604, %v2201
        %v2209 = vrot.slane %v2203, 1
        %v2210 = vrot.slane %v2204, 1
        %v2211 = vsel %vm2068, %v2209, %v2210
        %v2212 = vrot.slane %v2205, 1
        %v2213 = vsel %vm2068, %v2210, %v2212
        %2214 = vrot.lane.b32.xlu0 %v2211, 122
        %v2215 = vpop.permute.xlu0 %2214
        %2216 = vrot.lane.b32.xlu0 %v2213, 122
        %v2217 = vpop.permute.xlu0 %2216
        %v2220 = vadd.f32 %v2192, %v2215
        %v2221 = vadd.f32 %v2193, %v2217
        %v2222 = vld [vmem:[#allocation2 + $0x1b] sm:$0x1]
        %v2223 = vlaneseq
        %v2224 = vshrl.u32 %v2223, 7
        %v2225 = vsub.s32 0, %v2224
        %v2226 = vrot.slane %v2222, %v2225
        %2228 = vrot.lane.b32.xlu0 %v2226, 7
        %v2229 = vpop.permute.xlu0 %2228
        %v2231 = vmul.f32 %v1602, %v2229
        %v2232 = vmul.f32 %v1603, %v2229
        %v2233 = vmul.f32 %v1604, %v2229
        %v2237 = vrot.slane %v2231, 1
        %v2238 = vrot.slane %v2232, 1
        %v2239 = vsel %vm2068, %v2237, %v2238
        %v2240 = vrot.slane %v2233, 1
        %v2241 = vsel %vm2068, %v2238, %v2240
        %2242 = vrot.lane.b32.xlu0 %v2239, 121
        %v2243 = vpop.permute.xlu0 %2242
        %2244 = vrot.lane.b32.xlu0 %v2241, 121
        %v2245 = vpop.permute.xlu0 %2244
        %v2248 = vadd.f32 %v2220, %v2243
        %v2249 = vadd.f32 %v2221, %v2245
        %v2250 = vld [vmem:[#allocation2 + $0x1c] sm:$0x1]
        %v2251 = vlaneseq
        %v2252 = vshrl.u32 %v2251, 7
        %v2253 = vsub.s32 0, %v2252
        %v2254 = vrot.slane %v2250, %v2253
        %2256 = vrot.lane.b32.xlu0 %v2254, 5
        %v2257 = vpop.permute.xlu0 %2256
        %v2259 = vmul.f32 %v1602, %v2257
        %v2260 = vmul.f32 %v1603, %v2257
        %v2261 = vmul.f32 %v1604, %v2257
        %v2265 = vrot.slane %v2259, 1
        %v2266 = vrot.slane %v2260, 1
        %v2267 = vsel %vm2068, %v2265, %v2266
        %v2268 = vrot.slane %v2261, 1
        %v2269 = vsel %vm2068, %v2266, %v2268
        %2270 = vrot.lane.b32.xlu0 %v2267, 123
        %v2271 = vpop.permute.xlu0 %2270
        %2272 = vrot.lane.b32.xlu0 %v2269, 123
        %v2273 = vpop.permute.xlu0 %2272
        %v2276 = vadd.f32 %v2248, %v2271
        %v2277 = vadd.f32 %v2249, %v2273
        %v2278 = vld [vmem:[#allocation2 + $0x1d] sm:$0x1]
        %v2279 = vlaneseq
        %v2280 = vshrl.u32 %v2279, 7
        %v2281 = vsub.s32 0, %v2280
        %v2282 = vrot.slane %v2278, %v2281
        %2284 = vrot.lane.b32.xlu0 %v2282, 6
        %v2285 = vpop.permute.xlu0 %2284
        %v2287 = vmul.f32 %v1602, %v2285
        %v2288 = vmul.f32 %v1603, %v2285
        %v2289 = vmul.f32 %v1604, %v2285
        %v2293 = vrot.slane %v2287, 1
        %v2294 = vrot.slane %v2288, 1
        %v2295 = vsel %vm2068, %v2293, %v2294
        %v2296 = vrot.slane %v2289, 1
        %v2297 = vsel %vm2068, %v2294, %v2296
        %2298 = vrot.lane.b32.xlu0 %v2295, 122
        %v2299 = vpop.permute.xlu0 %2298
        %2300 = vrot.lane.b32.xlu0 %v2297, 122
        %v2301 = vpop.permute.xlu0 %2300
        %v2304 = vadd.f32 %v2276, %v2299
        %v2305 = vadd.f32 %v2277, %v2301
        %v2306 = vld [vmem:[#allocation2 + $0x1e] sm:$0x1]
        %v2307 = vlaneseq
        %v2308 = vshrl.u32 %v2307, 7
        %v2309 = vsub.s32 0, %v2308
        %v2310 = vrot.slane %v2306, %v2309
        %2312 = vrot.lane.b32.xlu0 %v2310, 7
        %v2313 = vpop.permute.xlu0 %2312
        %v2315 = vmul.f32 %v1602, %v2313
        %v2316 = vmul.f32 %v1603, %v2313
        %v2317 = vmul.f32 %v1604, %v2313
        %v2321 = vrot.slane %v2315, 1
        %v2322 = vrot.slane %v2316, 1
        %v2323 = vsel %vm2068, %v2321, %v2322
        %v2324 = vrot.slane %v2317, 1
        %v2325 = vsel %vm2068, %v2322, %v2324
        %2326 = vrot.lane.b32.xlu0 %v2323, 121
        %v2327 = vpop.permute.xlu0 %2326
        %2328 = vrot.lane.b32.xlu0 %v2325, 121
        %v2329 = vpop.permute.xlu0 %2328
        %v2332 = vadd.f32 %v2304, %v2327
        %v2333 = vadd.f32 %v2305, %v2329
        %v2334 = vld [vmem:[#allocation2 + $0x1f] sm:$0x1]
        %v2335 = vlaneseq
        %v2336 = vshrl.u32 %v2335, 7
        %v2337 = vsub.s32 0, %v2336
        %v2338 = vrot.slane %v2334, %v2337
        %2340 = vrot.lane.b32.xlu0 %v2338, 8
        %v2341 = vpop.permute.xlu0 %2340
        %v2343 = vmul.f32 %v1602, %v2341
        %v2344 = vmul.f32 %v1603, %v2341
        %v2345 = vmul.f32 %v1604, %v2341
        %v2349 = vrot.slane %v2343, 1
        %v2350 = vrot.slane %v2344, 1
        %v2351 = vsel %vm2068, %v2349, %v2350
        %v2352 = vrot.slane %v2345, 1
        %v2353 = vsel %vm2068, %v2350, %v2352
        %2354 = vrot.lane.b32.xlu0 %v2351, 120
        %v2355 = vpop.permute.xlu0 %2354
        %2356 = vrot.lane.b32.xlu0 %v2353, 120
        %v2357 = vpop.permute.xlu0 %2356
        %v2360 = vadd.f32 %v2332, %v2355
        %v2361 = vadd.f32 %v2333, %v2357
        %v2362 = vld [vmem:[#allocation2 + $0x20] sm:$0x1]
        %v2363 = vlaneseq
        %v2364 = vshrl.u32 %v2363, 7
        %v2365 = vsub.s32 0, %v2364
        %v2366 = vrot.slane %v2362, %v2365
        %2368 = vrot.lane.b32.xlu0 %v2366, 9
        %v2369 = vpop.permute.xlu0 %2368
        %v2371 = vmul.f32 %v1602, %v2369
        %v2372 = vmul.f32 %v1603, %v2369
        %v2373 = vmul.f32 %v1604, %v2369
        %v2377 = vrot.slane %v2371, 1
        %v2378 = vrot.slane %v2372, 1
        %v2379 = vsel %vm2068, %v2377, %v2378
        %v2380 = vrot.slane %v2373, 1
        %v2381 = vsel %vm2068, %v2378, %v2380
        %2382 = vrot.lane.b32.xlu0 %v2379, 119
        %v2383 = vpop.permute.xlu0 %2382
        %2384 = vrot.lane.b32.xlu0 %v2381, 119
        %v2385 = vpop.permute.xlu0 %2384
        %v2388 = vadd.f32 %v2360, %v2383
        %v2389 = vadd.f32 %v2361, %v2385
        %v2390 = vld [vmem:[#allocation2 + $0x21] sm:$0x1]
        %v2391 = vlaneseq
        %v2392 = vshrl.u32 %v2391, 7
        %v2393 = vsub.s32 0, %v2392
        %v2394 = vrot.slane %v2390, %v2393
        %2396 = vrot.lane.b32.xlu0 %v2394, 10
        %v2397 = vpop.permute.xlu0 %2396
        %v2399 = vmul.f32 %v1602, %v2397
        %v2400 = vmul.f32 %v1603, %v2397
        %v2401 = vmul.f32 %v1604, %v2397
        %v2405 = vrot.slane %v2399, 1
        %v2406 = vrot.slane %v2400, 1
        %v2407 = vsel %vm2068, %v2405, %v2406
        %v2408 = vrot.slane %v2401, 1
        %v2409 = vsel %vm2068, %v2406, %v2408
        %2410 = vrot.lane.b32.xlu0 %v2407, 118
        %v2411 = vpop.permute.xlu0 %2410
        %2412 = vrot.lane.b32.xlu0 %v2409, 118
        %v2413 = vpop.permute.xlu0 %2412
        %v2416 = vadd.f32 %v2388, %v2411
        %v2417 = vadd.f32 %v2389, %v2413
        %v2418 = vld [vmem:[#allocation2 + $0x22] sm:$0x1]
        %v2419 = vlaneseq
        %v2420 = vshrl.u32 %v2419, 7
        %v2421 = vsub.s32 0, %v2420
        %v2422 = vrot.slane %v2418, %v2421
        %2424 = vrot.lane.b32.xlu0 %v2422, 11
        %v2425 = vpop.permute.xlu0 %2424
        %v2427 = vmul.f32 %v1602, %v2425
        %v2428 = vmul.f32 %v1603, %v2425
        %v2429 = vmul.f32 %v1604, %v2425
        %v2433 = vrot.slane %v2427, 1
        %v2434 = vrot.slane %v2428, 1
        %v2435 = vsel %vm2068, %v2433, %v2434
        %v2436 = vrot.slane %v2429, 1
        %v2437 = vsel %vm2068, %v2434, %v2436
        %2438 = vrot.lane.b32.xlu0 %v2435, 117
        %v2439 = vpop.permute.xlu0 %2438
        %2440 = vrot.lane.b32.xlu0 %v2437, 117
        %v2441 = vpop.permute.xlu0 %2440
        %v2444 = vadd.f32 %v2416, %v2439
        %v2445 = vadd.f32 %v2417, %v2441
        %v2446 = vld [vmem:[#allocation2 + $0x23] sm:$0x1]
        %v2447 = vlaneseq
        %v2448 = vshrl.u32 %v2447, 7
        %v2449 = vsub.s32 0, %v2448
        %v2450 = vrot.slane %v2446, %v2449
        %2452 = vrot.lane.b32.xlu0 %v2450, 9
        %v2453 = vpop.permute.xlu0 %2452
        %v2455 = vmul.f32 %v1602, %v2453
        %v2456 = vmul.f32 %v1603, %v2453
        %v2457 = vmul.f32 %v1604, %v2453
        %v2461 = vrot.slane %v2455, 1
        %v2462 = vrot.slane %v2456, 1
        %v2463 = vsel %vm2068, %v2461, %v2462
        %v2464 = vrot.slane %v2457, 1
        %v2465 = vsel %vm2068, %v2462, %v2464
        %2466 = vrot.lane.b32.xlu0 %v2463, 119
        %v2467 = vpop.permute.xlu0 %2466
        %2468 = vrot.lane.b32.xlu0 %v2465, 119
        %v2469 = vpop.permute.xlu0 %2468
        %v2472 = vadd.f32 %v2444, %v2467
        %v2473 = vadd.f32 %v2445, %v2469
        %v2474 = vld [vmem:[#allocation2 + $0x24] sm:$0x1]
        %v2475 = vlaneseq
        %v2476 = vshrl.u32 %v2475, 7
        %v2477 = vsub.s32 0, %v2476
        %v2478 = vrot.slane %v2474, %v2477
        %2480 = vrot.lane.b32.xlu0 %v2478, 10
        %v2481 = vpop.permute.xlu0 %2480
        %v2483 = vmul.f32 %v1602, %v2481
        %v2484 = vmul.f32 %v1603, %v2481
        %v2485 = vmul.f32 %v1604, %v2481
        %v2489 = vrot.slane %v2483, 1
        %v2490 = vrot.slane %v2484, 1
        %v2491 = vsel %vm2068, %v2489, %v2490
        %v2492 = vrot.slane %v2485, 1
        %v2493 = vsel %vm2068, %v2490, %v2492
        %2494 = vrot.lane.b32.xlu0 %v2491, 118
        %v2495 = vpop.permute.xlu0 %2494
        %2496 = vrot.lane.b32.xlu0 %v2493, 118
        %v2497 = vpop.permute.xlu0 %2496
        %v2500 = vadd.f32 %v2472, %v2495
        %v2501 = vadd.f32 %v2473, %v2497
        %v2502 = vld [vmem:[#allocation2 + $0x25] sm:$0x1]
        %v2503 = vlaneseq
        %v2504 = vshrl.u32 %v2503, 7
        %v2505 = vsub.s32 0, %v2504
        %v2506 = vrot.slane %v2502, %v2505
        %2508 = vrot.lane.b32.xlu0 %v2506, 11
        %v2509 = vpop.permute.xlu0 %2508
        %v2511 = vmul.f32 %v1602, %v2509
        %v2512 = vmul.f32 %v1603, %v2509
        %v2513 = vmul.f32 %v1604, %v2509
        %v2517 = vrot.slane %v2511, 1
        %v2518 = vrot.slane %v2512, 1
        %v2519 = vsel %vm2068, %v2517, %v2518
        %v2520 = vrot.slane %v2513, 1
        %v2521 = vsel %vm2068, %v2518, %v2520
        %2522 = vrot.lane.b32.xlu0 %v2519, 117
        %v2523 = vpop.permute.xlu0 %2522
        %2524 = vrot.lane.b32.xlu0 %v2521, 117
        %v2525 = vpop.permute.xlu0 %2524
        %v2528 = vadd.f32 %v2500, %v2523
        %v2529 = vadd.f32 %v2501, %v2525
        %v2530 = vld [vmem:[#allocation2 + $0x26] sm:$0x1]
        %v2531 = vlaneseq
        %v2532 = vshrl.u32 %v2531, 7
        %v2533 = vsub.s32 0, %v2532
        %v2534 = vrot.slane %v2530, %v2533
        %2536 = vrot.lane.b32.xlu0 %v2534, 12
        %v2537 = vpop.permute.xlu0 %2536
        %v2539 = vmul.f32 %v1602, %v2537
        %v2540 = vmul.f32 %v1603, %v2537
        %v2541 = vmul.f32 %v1604, %v2537
        %v2545 = vrot.slane %v2539, 1
        %v2546 = vrot.slane %v2540, 1
        %v2547 = vsel %vm2068, %v2545, %v2546
        %v2548 = vrot.slane %v2541, 1
        %v2549 = vsel %vm2068, %v2546, %v2548
        %2550 = vrot.lane.b32.xlu0 %v2547, 116
        %v2551 = vpop.permute.xlu0 %2550
        %2552 = vrot.lane.b32.xlu0 %v2549, 116
        %v2553 = vpop.permute.xlu0 %2552
        %v2556 = vadd.f32 %v2528, %v2551
        %v2557 = vadd.f32 %v2529, %v2553
        %v2558 = vld [vmem:[#allocation2 + $0x27] sm:$0x1]
        %v2559 = vlaneseq
        %v2560 = vshrl.u32 %v2559, 7
        %v2561 = vsub.s32 0, %v2560
        %v2562 = vrot.slane %v2558, %v2561
        %2564 = vrot.lane.b32.xlu0 %v2562, 13
        %v2565 = vpop.permute.xlu0 %2564
        %v2567 = vmul.f32 %v1602, %v2565
        %v2568 = vmul.f32 %v1603, %v2565
        %v2569 = vmul.f32 %v1604, %v2565
        %v2573 = vrot.slane %v2567, 1
        %v2574 = vrot.slane %v2568, 1
        %v2575 = vsel %vm2068, %v2573, %v2574
        %v2576 = vrot.slane %v2569, 1
        %v2577 = vsel %vm2068, %v2574, %v2576
        %2578 = vrot.lane.b32.xlu0 %v2575, 115
        %v2579 = vpop.permute.xlu0 %2578
        %2580 = vrot.lane.b32.xlu0 %v2577, 115
        %v2581 = vpop.permute.xlu0 %2580
        %v2584 = vadd.f32 %v2556, %v2579
        %v2585 = vadd.f32 %v2557, %v2581
        %v2586 = vld [vmem:[#allocation2 + $0x28] sm:$0x1]
        %v2587 = vlaneseq
        %v2588 = vshrl.u32 %v2587, 7
        %v2589 = vsub.s32 0, %v2588
        %v2590 = vrot.slane %v2586, %v2589
        %2592 = vrot.lane.b32.xlu0 %v2590, 14
        %v2593 = vpop.permute.xlu0 %2592
        %v2595 = vmul.f32 %v1602, %v2593
        %v2596 = vmul.f32 %v1603, %v2593
        %v2597 = vmul.f32 %v1604, %v2593
        %v2601 = vrot.slane %v2595, 1
        %v2602 = vrot.slane %v2596, 1
        %v2603 = vsel %vm2068, %v2601, %v2602
        %v2604 = vrot.slane %v2597, 1
        %v2605 = vsel %vm2068, %v2602, %v2604
        %2606 = vrot.lane.b32.xlu0 %v2603, 114
        %v2607 = vpop.permute.xlu0 %2606
        %2608 = vrot.lane.b32.xlu0 %v2605, 114
        %v2609 = vpop.permute.xlu0 %2608
        %v2612 = vadd.f32 %v2584, %v2607
        %v2613 = vadd.f32 %v2585, %v2609
        %v2614 = vld [vmem:[#allocation2 + $0x29] sm:$0x1]
        %v2615 = vlaneseq
        %v2616 = vshrl.u32 %v2615, 7
        %v2617 = vsub.s32 0, %v2616
        %v2618 = vrot.slane %v2614, %v2617
        %2620 = vrot.lane.b32.xlu0 %v2618, 15
        %v2621 = vpop.permute.xlu0 %2620
        %v2623 = vmul.f32 %v1602, %v2621
        %v2624 = vmul.f32 %v1603, %v2621
        %v2625 = vmul.f32 %v1604, %v2621
        %v2629 = vrot.slane %v2623, 1
        %v2630 = vrot.slane %v2624, 1
        %v2631 = vsel %vm2068, %v2629, %v2630
        %v2632 = vrot.slane %v2625, 1
        %v2633 = vsel %vm2068, %v2630, %v2632
        %2634 = vrot.lane.b32.xlu0 %v2631, 113
        %v2635 = vpop.permute.xlu0 %2634
        %2636 = vrot.lane.b32.xlu0 %v2633, 113
        %v2637 = vpop.permute.xlu0 %2636
        %v2640 = vadd.f32 %v2612, %v2635
        %v2641 = vadd.f32 %v2613, %v2637
        %v2642 = vld [vmem:[#allocation2 + $0x2a] sm:$0x1]
        %v2643 = vlaneseq
        %v2644 = vshrl.u32 %v2643, 7
        %v2645 = vsub.s32 0, %v2644
        %v2646 = vrot.slane %v2642, %v2645
        %2648 = vrot.lane.b32.xlu0 %v2646, 1
        %v2649 = vpop.permute.xlu0 %2648
        %v2651 = vmul.f32 %v1602, %v2649
        %v2652 = vmul.f32 %v1603, %v2649
        %v2653 = vmul.f32 %v1604, %v2649
        %vm2657 = vcmask 1045504
        %v2658 = vrot.slane %v2651, 2
        %v2659 = vrot.slane %v2652, 2
        %v2660 = vsel %vm2657, %v2658, %v2659
        %v2661 = vrot.slane %v2653, 2
        %v2662 = vsel %vm2657, %v2659, %v2661
        %2663 = vrot.lane.b32.xlu0 %v2660, 127
        %v2664 = vpop.permute.xlu0 %2663
        %2665 = vrot.lane.b32.xlu0 %v2662, 127
        %v2666 = vpop.permute.xlu0 %2665
        %v2669 = vadd.f32 %v2640, %v2664
        %v2670 = vadd.f32 %v2641, %v2666
        %v2671 = vld [vmem:[#allocation2 + $0x2b] sm:$0x1]
        %v2672 = vlaneseq
        %v2673 = vshrl.u32 %v2672, 7
        %v2674 = vsub.s32 0, %v2673
        %v2675 = vrot.slane %v2671, %v2674
        %2677 = vrot.lane.b32.xlu0 %v2675, 2
        %v2678 = vpop.permute.xlu0 %2677
        %v2680 = vmul.f32 %v1602, %v2678
        %v2681 = vmul.f32 %v1603, %v2678
        %v2682 = vmul.f32 %v1604, %v2678
        %v2686 = vrot.slane %v2680, 2
        %v2687 = vrot.slane %v2681, 2
        %v2688 = vsel %vm2657, %v2686, %v2687
        %v2689 = vrot.slane %v2682, 2
        %v2690 = vsel %vm2657, %v2687, %v2689
        %2691 = vrot.lane.b32.xlu0 %v2688, 126
        %v2692 = vpop.permute.xlu0 %2691
        %2693 = vrot.lane.b32.xlu0 %v2690, 126
        %v2694 = vpop.permute.xlu0 %2693
        %v2697 = vadd.f32 %v2669, %v2692
        %v2698 = vadd.f32 %v2670, %v2694
        %v2699 = vld [vmem:[#allocation2 + $0x2c] sm:$0x1]
        %v2700 = vlaneseq
        %v2701 = vshrl.u32 %v2700, 7
        %v2702 = vsub.s32 0, %v2701
        %v2703 = vrot.slane %v2699, %v2702
        %2705 = vrot.lane.b32.xlu0 %v2703, 3
        %v2706 = vpop.permute.xlu0 %2705
        %v2708 = vmul.f32 %v1602, %v2706
        %v2709 = vmul.f32 %v1603, %v2706
        %v2710 = vmul.f32 %v1604, %v2706
        %v2714 = vrot.slane %v2708, 2
        %v2715 = vrot.slane %v2709, 2
        %v2716 = vsel %vm2657, %v2714, %v2715
        %v2717 = vrot.slane %v2710, 2
        %v2718 = vsel %vm2657, %v2715, %v2717
        %2719 = vrot.lane.b32.xlu0 %v2716, 125
        %v2720 = vpop.permute.xlu0 %2719
        %2721 = vrot.lane.b32.xlu0 %v2718, 125
        %v2722 = vpop.permute.xlu0 %2721
        %v2725 = vadd.f32 %v2697, %v2720
        %v2726 = vadd.f32 %v2698, %v2722
        %v2727 = vld [vmem:[#allocation2 + $0x2d] sm:$0x1]
        %v2728 = vlaneseq
        %v2729 = vshrl.u32 %v2728, 7
        %v2730 = vsub.s32 0, %v2729
        %v2731 = vrot.slane %v2727, %v2730
        %2733 = vrot.lane.b32.xlu0 %v2731, 4
        %v2734 = vpop.permute.xlu0 %2733
        %v2736 = vmul.f32 %v1602, %v2734
        %v2737 = vmul.f32 %v1603, %v2734
        %v2738 = vmul.f32 %v1604, %v2734
        %v2742 = vrot.slane %v2736, 2
        %v2743 = vrot.slane %v2737, 2
        %v2744 = vsel %vm2657, %v2742, %v2743
        %v2745 = vrot.slane %v2738, 2
        %v2746 = vsel %vm2657, %v2743, %v2745
        %2747 = vrot.lane.b32.xlu0 %v2744, 124
        %v2748 = vpop.permute.xlu0 %2747
        %2749 = vrot.lane.b32.xlu0 %v2746, 124
        %v2750 = vpop.permute.xlu0 %2749
        %v2753 = vadd.f32 %v2725, %v2748
        %v2754 = vadd.f32 %v2726, %v2750
        %v2755 = vld [vmem:[#allocation2 + $0x2e] sm:$0x1]
        %v2756 = vlaneseq
        %v2757 = vshrl.u32 %v2756, 7
        %v2758 = vsub.s32 0, %v2757
        %v2759 = vrot.slane %v2755, %v2758
        %2761 = vrot.lane.b32.xlu0 %v2759, 5
        %v2762 = vpop.permute.xlu0 %2761
        %v2764 = vmul.f32 %v1602, %v2762
        %v2765 = vmul.f32 %v1603, %v2762
        %v2766 = vmul.f32 %v1604, %v2762
        %v2770 = vrot.slane %v2764, 2
        %v2771 = vrot.slane %v2765, 2
        %v2772 = vsel %vm2657, %v2770, %v2771
        %v2773 = vrot.slane %v2766, 2
        %v2774 = vsel %vm2657, %v2771, %v2773
        %2775 = vrot.lane.b32.xlu0 %v2772, 123
        %v2776 = vpop.permute.xlu0 %2775
        %2777 = vrot.lane.b32.xlu0 %v2774, 123
        %v2778 = vpop.permute.xlu0 %2777
        %v2781 = vadd.f32 %v2753, %v2776
        %v2782 = vadd.f32 %v2754, %v2778
        %v2783 = vld [vmem:[#allocation2 + $0x2f] sm:$0x1]
        %v2784 = vlaneseq
        %v2785 = vshrl.u32 %v2784, 7
        %v2786 = vsub.s32 0, %v2785
        %v2787 = vrot.slane %v2783, %v2786
        %2789 = vrot.lane.b32.xlu0 %v2787, 6
        %v2790 = vpop.permute.xlu0 %2789
        %v2792 = vmul.f32 %v1602, %v2790
        %v2793 = vmul.f32 %v1603, %v2790
        %v2794 = vmul.f32 %v1604, %v2790
        %v2798 = vrot.slane %v2792, 2
        %v2799 = vrot.slane %v2793, 2
        %v2800 = vsel %vm2657, %v2798, %v2799
        %v2801 = vrot.slane %v2794, 2
        %v2802 = vsel %vm2657, %v2799, %v2801
        %2803 = vrot.lane.b32.xlu0 %v2800, 122
        %v2804 = vpop.permute.xlu0 %2803
        %2805 = vrot.lane.b32.xlu0 %v2802, 122
        %v2806 = vpop.permute.xlu0 %2805
        %v2809 = vadd.f32 %v2781, %v2804
        %v2810 = vadd.f32 %v2782, %v2806
        %v2811 = vld [vmem:[#allocation2 + $0x30] sm:$0x1]
        %v2812 = vlaneseq
        %v2813 = vshrl.u32 %v2812, 7
        %v2814 = vsub.s32 0, %v2813
        %v2815 = vrot.slane %v2811, %v2814
        %2817 = vrot.lane.b32.xlu0 %v2815, 7
        %v2818 = vpop.permute.xlu0 %2817
        %v2820 = vmul.f32 %v1602, %v2818
        %v2821 = vmul.f32 %v1603, %v2818
        %v2822 = vmul.f32 %v1604, %v2818
        %v2826 = vrot.slane %v2820, 2
        %v2827 = vrot.slane %v2821, 2
        %v2828 = vsel %vm2657, %v2826, %v2827
        %v2829 = vrot.slane %v2822, 2
        %v2830 = vsel %vm2657, %v2827, %v2829
        %2831 = vrot.lane.b32.xlu0 %v2828, 121
        %v2832 = vpop.permute.xlu0 %2831
        %2833 = vrot.lane.b32.xlu0 %v2830, 121
        %v2834 = vpop.permute.xlu0 %2833
        %v2837 = vadd.f32 %v2809, %v2832
        %v2838 = vadd.f32 %v2810, %v2834
        %v2839 = vld [vmem:[#allocation2 + $0x31] sm:$0x1]
        %v2840 = vlaneseq
        %v2841 = vshrl.u32 %v2840, 7
        %v2842 = vsub.s32 0, %v2841
        %v2843 = vrot.slane %v2839, %v2842
        %2845 = vrot.lane.b32.xlu0 %v2843, 5
        %v2846 = vpop.permute.xlu0 %2845
        %v2848 = vmul.f32 %v1602, %v2846
        %v2849 = vmul.f32 %v1603, %v2846
        %v2850 = vmul.f32 %v1604, %v2846
        %v2854 = vrot.slane %v2848, 2
        %v2855 = vrot.slane %v2849, 2
        %v2856 = vsel %vm2657, %v2854, %v2855
        %v2857 = vrot.slane %v2850, 2
        %v2858 = vsel %vm2657, %v2855, %v2857
        %2859 = vrot.lane.b32.xlu0 %v2856, 123
        %v2860 = vpop.permute.xlu0 %2859
        %2861 = vrot.lane.b32.xlu0 %v2858, 123
        %v2862 = vpop.permute.xlu0 %2861
        %v2865 = vadd.f32 %v2837, %v2860
        %v2866 = vadd.f32 %v2838, %v2862
        %v2867 = vld [vmem:[#allocation2 + $0x32] sm:$0x1]
        %v2868 = vlaneseq
        %v2869 = vshrl.u32 %v2868, 7
        %v2870 = vsub.s32 0, %v2869
        %v2871 = vrot.slane %v2867, %v2870
        %2873 = vrot.lane.b32.xlu0 %v2871, 6
        %v2874 = vpop.permute.xlu0 %2873
        %v2876 = vmul.f32 %v1602, %v2874
        %v2877 = vmul.f32 %v1603, %v2874
        %v2878 = vmul.f32 %v1604, %v2874
        %v2882 = vrot.slane %v2876, 2
        %v2883 = vrot.slane %v2877, 2
        %v2884 = vsel %vm2657, %v2882, %v2883
        %v2885 = vrot.slane %v2878, 2
        %v2886 = vsel %vm2657, %v2883, %v2885
        %2887 = vrot.lane.b32.xlu0 %v2884, 122
        %v2888 = vpop.permute.xlu0 %2887
        %2889 = vrot.lane.b32.xlu0 %v2886, 122
        %v2890 = vpop.permute.xlu0 %2889
        %v2893 = vadd.f32 %v2865, %v2888
        %v2894 = vadd.f32 %v2866, %v2890
        %v2895 = vld [vmem:[#allocation2 + $0x33] sm:$0x1]
        %v2896 = vlaneseq
        %v2897 = vshrl.u32 %v2896, 7
        %v2898 = vsub.s32 0, %v2897
        %v2899 = vrot.slane %v2895, %v2898
        %2901 = vrot.lane.b32.xlu0 %v2899, 7
        %v2902 = vpop.permute.xlu0 %2901
        %v2904 = vmul.f32 %v1602, %v2902
        %v2905 = vmul.f32 %v1603, %v2902
        %v2906 = vmul.f32 %v1604, %v2902
        %v2910 = vrot.slane %v2904, 2
        %v2911 = vrot.slane %v2905, 2
        %v2912 = vsel %vm2657, %v2910, %v2911
        %v2913 = vrot.slane %v2906, 2
        %v2914 = vsel %vm2657, %v2911, %v2913
        %2915 = vrot.lane.b32.xlu0 %v2912, 121
        %v2916 = vpop.permute.xlu0 %2915
        %2917 = vrot.lane.b32.xlu0 %v2914, 121
        %v2918 = vpop.permute.xlu0 %2917
        %v2921 = vadd.f32 %v2893, %v2916
        %v2922 = vadd.f32 %v2894, %v2918
        %v2923 = vld [vmem:[#allocation2 + $0x34] sm:$0x1]
        %v2924 = vlaneseq
        %v2925 = vshrl.u32 %v2924, 7
        %v2926 = vsub.s32 0, %v2925
        %v2927 = vrot.slane %v2923, %v2926
        %2929 = vrot.lane.b32.xlu0 %v2927, 8
        %v2930 = vpop.permute.xlu0 %2929
        %v2932 = vmul.f32 %v1602, %v2930
        %v2933 = vmul.f32 %v1603, %v2930
        %v2934 = vmul.f32 %v1604, %v2930
        %v2938 = vrot.slane %v2932, 2
        %v2939 = vrot.slane %v2933, 2
        %v2940 = vsel %vm2657, %v2938, %v2939
        %v2941 = vrot.slane %v2934, 2
        %v2942 = vsel %vm2657, %v2939, %v2941
        %2943 = vrot.lane.b32.xlu0 %v2940, 120
        %v2944 = vpop.permute.xlu0 %2943
        %2945 = vrot.lane.b32.xlu0 %v2942, 120
        %v2946 = vpop.permute.xlu0 %2945
        %v2949 = vadd.f32 %v2921, %v2944
        %v2950 = vadd.f32 %v2922, %v2946
        %v2951 = vld [vmem:[#allocation2 + $0x35] sm:$0x1]
        %v2952 = vlaneseq
        %v2953 = vshrl.u32 %v2952, 7
        %v2954 = vsub.s32 0, %v2953
        %v2955 = vrot.slane %v2951, %v2954
        %2957 = vrot.lane.b32.xlu0 %v2955, 9
        %v2958 = vpop.permute.xlu0 %2957
        %v2960 = vmul.f32 %v1602, %v2958
        %v2961 = vmul.f32 %v1603, %v2958
        %v2962 = vmul.f32 %v1604, %v2958
        %v2966 = vrot.slane %v2960, 2
        %v2967 = vrot.slane %v2961, 2
        %v2968 = vsel %vm2657, %v2966, %v2967
        %v2969 = vrot.slane %v2962, 2
        %v2970 = vsel %vm2657, %v2967, %v2969
        %2971 = vrot.lane.b32.xlu0 %v2968, 119
        %v2972 = vpop.permute.xlu0 %2971
        %2973 = vrot.lane.b32.xlu0 %v2970, 119
        %v2974 = vpop.permute.xlu0 %2973
        %v2977 = vadd.f32 %v2949, %v2972
        %v2978 = vadd.f32 %v2950, %v2974
        %v2979 = vld [vmem:[#allocation2 + $0x36] sm:$0x1]
        %v2980 = vlaneseq
        %v2981 = vshrl.u32 %v2980, 7
        %v2982 = vsub.s32 0, %v2981
        %v2983 = vrot.slane %v2979, %v2982
        %2985 = vrot.lane.b32.xlu0 %v2983, 10
        %v2986 = vpop.permute.xlu0 %2985
        %v2988 = vmul.f32 %v1602, %v2986
        %v2989 = vmul.f32 %v1603, %v2986
        %v2990 = vmul.f32 %v1604, %v2986
        %v2994 = vrot.slane %v2988, 2
        %v2995 = vrot.slane %v2989, 2
        %v2996 = vsel %vm2657, %v2994, %v2995
        %v2997 = vrot.slane %v2990, 2
        %v2998 = vsel %vm2657, %v2995, %v2997
        %2999 = vrot.lane.b32.xlu0 %v2996, 118
        %v3000 = vpop.permute.xlu0 %2999
        %3001 = vrot.lane.b32.xlu0 %v2998, 118
        %v3002 = vpop.permute.xlu0 %3001
        %v3005 = vadd.f32 %v2977, %v3000
        %v3006 = vadd.f32 %v2978, %v3002
        %v3007 = vld [vmem:[#allocation2 + $0x37] sm:$0x1]
        %v3008 = vlaneseq
        %v3009 = vshrl.u32 %v3008, 7
        %v3010 = vsub.s32 0, %v3009
        %v3011 = vrot.slane %v3007, %v3010
        %3013 = vrot.lane.b32.xlu0 %v3011, 11
        %v3014 = vpop.permute.xlu0 %3013
        %v3016 = vmul.f32 %v1602, %v3014
        %v3017 = vmul.f32 %v1603, %v3014
        %v3018 = vmul.f32 %v1604, %v3014
        %v3022 = vrot.slane %v3016, 2
        %v3023 = vrot.slane %v3017, 2
        %v3024 = vsel %vm2657, %v3022, %v3023
        %v3025 = vrot.slane %v3018, 2
        %v3026 = vsel %vm2657, %v3023, %v3025
        %3027 = vrot.lane.b32.xlu0 %v3024, 117
        %v3028 = vpop.permute.xlu0 %3027
        %3029 = vrot.lane.b32.xlu0 %v3026, 117
        %v3030 = vpop.permute.xlu0 %3029
        %v3033 = vadd.f32 %v3005, %v3028
        %v3034 = vadd.f32 %v3006, %v3030
        %v3035 = vld [vmem:[#allocation2 + $0x38] sm:$0x1]
        %v3036 = vlaneseq
        %v3037 = vshrl.u32 %v3036, 7
        %v3038 = vsub.s32 0, %v3037
        %v3039 = vrot.slane %v3035, %v3038
        %3041 = vrot.lane.b32.xlu0 %v3039, 9
        %v3042 = vpop.permute.xlu0 %3041
        %v3044 = vmul.f32 %v1602, %v3042
        %v3045 = vmul.f32 %v1603, %v3042
        %v3046 = vmul.f32 %v1604, %v3042
        %v3050 = vrot.slane %v3044, 2
        %v3051 = vrot.slane %v3045, 2
        %v3052 = vsel %vm2657, %v3050, %v3051
        %v3053 = vrot.slane %v3046, 2
        %v3054 = vsel %vm2657, %v3051, %v3053
        %3055 = vrot.lane.b32.xlu0 %v3052, 119
        %v3056 = vpop.permute.xlu0 %3055
        %3057 = vrot.lane.b32.xlu0 %v3054, 119
        %v3058 = vpop.permute.xlu0 %3057
        %v3061 = vadd.f32 %v3033, %v3056
        %v3062 = vadd.f32 %v3034, %v3058
        %v3063 = vld [vmem:[#allocation2 + $0x39] sm:$0x1]
        %v3064 = vlaneseq
        %v3065 = vshrl.u32 %v3064, 7
        %v3066 = vsub.s32 0, %v3065
        %v3067 = vrot.slane %v3063, %v3066
        %3069 = vrot.lane.b32.xlu0 %v3067, 10
        %v3070 = vpop.permute.xlu0 %3069
        %v3072 = vmul.f32 %v1602, %v3070
        %v3073 = vmul.f32 %v1603, %v3070
        %v3074 = vmul.f32 %v1604, %v3070
        %v3078 = vrot.slane %v3072, 2
        %v3079 = vrot.slane %v3073, 2
        %v3080 = vsel %vm2657, %v3078, %v3079
        %v3081 = vrot.slane %v3074, 2
        %v3082 = vsel %vm2657, %v3079, %v3081
        %3083 = vrot.lane.b32.xlu0 %v3080, 118
        %v3084 = vpop.permute.xlu0 %3083
        %3085 = vrot.lane.b32.xlu0 %v3082, 118
        %v3086 = vpop.permute.xlu0 %3085
        %v3089 = vadd.f32 %v3061, %v3084
        %v3090 = vadd.f32 %v3062, %v3086
        %v3091 = vld [vmem:[#allocation2 + $0x3a] sm:$0x1]
        %v3092 = vlaneseq
        %v3093 = vshrl.u32 %v3092, 7
        %v3094 = vsub.s32 0, %v3093
        %v3095 = vrot.slane %v3091, %v3094
        %3097 = vrot.lane.b32.xlu0 %v3095, 11
        %v3098 = vpop.permute.xlu0 %3097
        %v3100 = vmul.f32 %v1602, %v3098
        %v3101 = vmul.f32 %v1603, %v3098
        %v3102 = vmul.f32 %v1604, %v3098
        %v3106 = vrot.slane %v3100, 2
        %v3107 = vrot.slane %v3101, 2
        %v3108 = vsel %vm2657, %v3106, %v3107
        %v3109 = vrot.slane %v3102, 2
        %v3110 = vsel %vm2657, %v3107, %v3109
        %3111 = vrot.lane.b32.xlu0 %v3108, 117
        %v3112 = vpop.permute.xlu0 %3111
        %3113 = vrot.lane.b32.xlu0 %v3110, 117
        %v3114 = vpop.permute.xlu0 %3113
        %v3117 = vadd.f32 %v3089, %v3112
        %v3118 = vadd.f32 %v3090, %v3114
        %v3119 = vld [vmem:[#allocation2 + $0x3b] sm:$0x1]
        %v3120 = vlaneseq
        %v3121 = vshrl.u32 %v3120, 7
        %v3122 = vsub.s32 0, %v3121
        %v3123 = vrot.slane %v3119, %v3122
        %3125 = vrot.lane.b32.xlu0 %v3123, 12
        %v3126 = vpop.permute.xlu0 %3125
        %v3128 = vmul.f32 %v1602, %v3126
        %v3129 = vmul.f32 %v1603, %v3126
        %v3130 = vmul.f32 %v1604, %v3126
        %v3134 = vrot.slane %v3128, 2
        %v3135 = vrot.slane %v3129, 2
        %v3136 = vsel %vm2657, %v3134, %v3135
        %v3137 = vrot.slane %v3130, 2
        %v3138 = vsel %vm2657, %v3135, %v3137
        %3139 = vrot.lane.b32.xlu0 %v3136, 116
        %v3140 = vpop.permute.xlu0 %3139
        %3141 = vrot.lane.b32.xlu0 %v3138, 116
        %v3142 = vpop.permute.xlu0 %3141
        %v3145 = vadd.f32 %v3117, %v3140
        %v3146 = vadd.f32 %v3118, %v3142
        %v3147 = vld [vmem:[#allocation2 + $0x3c] sm:$0x1]
        %v3148 = vlaneseq
        %v3149 = vshrl.u32 %v3148, 7
        %v3150 = vsub.s32 0, %v3149
        %v3151 = vrot.slane %v3147, %v3150
        %3153 = vrot.lane.b32.xlu0 %v3151, 13
        %v3154 = vpop.permute.xlu0 %3153
        %v3156 = vmul.f32 %v1602, %v3154
        %v3157 = vmul.f32 %v1603, %v3154
        %v3158 = vmul.f32 %v1604, %v3154
        %v3162 = vrot.slane %v3156, 2
        %v3163 = vrot.slane %v3157, 2
        %v3164 = vsel %vm2657, %v3162, %v3163
        %v3165 = vrot.slane %v3158, 2
        %v3166 = vsel %vm2657, %v3163, %v3165
        %3167 = vrot.lane.b32.xlu0 %v3164, 115
        %v3168 = vpop.permute.xlu0 %3167
        %3169 = vrot.lane.b32.xlu0 %v3166, 115
        %v3170 = vpop.permute.xlu0 %3169
        %v3173 = vadd.f32 %v3145, %v3168
        %v3174 = vadd.f32 %v3146, %v3170
        %v3175 = vld [vmem:[#allocation2 + $0x3d] sm:$0x1]
        %v3176 = vlaneseq
        %v3177 = vshrl.u32 %v3176, 7
        %v3178 = vsub.s32 0, %v3177
        %v3179 = vrot.slane %v3175, %v3178
        %3181 = vrot.lane.b32.xlu0 %v3179, 14
        %v3182 = vpop.permute.xlu0 %3181
        %v3184 = vmul.f32 %v1602, %v3182
        %v3185 = vmul.f32 %v1603, %v3182
        %v3186 = vmul.f32 %v1604, %v3182
        %v3190 = vrot.slane %v3184, 2
        %v3191 = vrot.slane %v3185, 2
        %v3192 = vsel %vm2657, %v3190, %v3191
        %v3193 = vrot.slane %v3186, 2
        %v3194 = vsel %vm2657, %v3191, %v3193
        %3195 = vrot.lane.b32.xlu0 %v3192, 114
        %v3196 = vpop.permute.xlu0 %3195
        %3197 = vrot.lane.b32.xlu0 %v3194, 114
        %v3198 = vpop.permute.xlu0 %3197
        %v3201 = vadd.f32 %v3173, %v3196
        %v3202 = vadd.f32 %v3174, %v3198
        %v3203 = vld [vmem:[#allocation2 + $0x3e] sm:$0x1]
        %v3204 = vlaneseq
        %v3205 = vshrl.u32 %v3204, 7
        %v3206 = vsub.s32 0, %v3205
        %v3207 = vrot.slane %v3203, %v3206
        %3209 = vrot.lane.b32.xlu0 %v3207, 15
        %v3210 = vpop.permute.xlu0 %3209
        %v3212 = vmul.f32 %v1602, %v3210
        %v3213 = vmul.f32 %v1603, %v3210
        %v3214 = vmul.f32 %v1604, %v3210
        %v3218 = vrot.slane %v3212, 2
        %v3219 = vrot.slane %v3213, 2
        %v3220 = vsel %vm2657, %v3218, %v3219
        %v3221 = vrot.slane %v3214, 2
        %v3222 = vsel %vm2657, %v3219, %v3221
        %3223 = vrot.lane.b32.xlu0 %v3220, 113
        %v3224 = vpop.permute.xlu0 %3223
        %3225 = vrot.lane.b32.xlu0 %v3222, 113
        %v3226 = vpop.permute.xlu0 %3225
        %v3229 = vadd.f32 %v3201, %v3224
        %v3230 = vadd.f32 %v3202, %v3226
        %3233 = vrot.lane.b32.xlu0 %v688, 120
        %v3234 = vpop.permute.xlu0 %3233
        %3235 = vrot.lane.b32.xlu0 %v689, 120
        %v3236 = vpop.permute.xlu0 %3235
        %v3239 = vadd.f32 %v3229, %v3234
        %v3240 = vadd.f32 %v3230, %v3236
        %v3241 = vmax.f32 %v3239, 0.0
        %v3242 = vmax.f32 %v3240, 0.0
        %vm3243 = vcmask 523264
        %3244 = vst.msk [vmem:[%s232] sm:$0xff] %vm3243, %v3241
        %3245 = vst.msk [vmem:[%s232 + $0x8] sm:$0xff] %vm3243, %v3242
        %s3246 = sand.u32 %s138, 1
        %s3247 = scalar_lea.sflag [#allocation4], %s3246
        %s3248 = sand.u32 %s138, 1
        %s3249 = smul.addr %s3248, 16
        %s3250 = scalar_lea.vmem [#allocation5], %s3249
        // Predicated region
        $region45: #{tpu_custom_call.1} parent=39 // pred_check
          %p3251 = pneg %p148
        $region46: #{tpu_custom_call.1} parent=39 // pred_check_branch
          %3253 = sbr.rel (%p3251) target = $region48
        $region47: #{tpu_custom_call.1} parent=39 // pred_region
          %s3255 = ssub.s32 256, 256
          %3256 = vsyncadd %s3247, %s3255
          %s3257 = smul.addr %s20, 2
          %s3258 = smul.addr %s3257, 128
          %s3259 = scalar_lea.hbm %s5, %s3258
          %s3260 = sshll.u32 %s3250, 4
          %s3261 = int_to_ptr.vmem [resolvable:$true] %s3260
          %3266 = dma.vmem_to_hbm [thread:$0]  %s3261, 256, %s3259, %s3247, 128, 128, 8
        $region48: #{tpu_custom_call.1} parent=39 // pred_fallthru
          _
      $region40: #{tpu_custom_call.1} parent=5 // pred_fallthru
        _
      %p3267 = scmp.le.s32.totalorder 2, %s15
      // Predicated region
      $region49: #{tpu_custom_call.1} parent=5 // pred_check
        %p3268 = pneg %p3267
      $region50: #{tpu_custom_call.1} parent=5 // pred_check_branch
        %3270 = sbr.rel (%p3268) target = $region52
      $region51: #{tpu_custom_call.1} parent=5 // pred_region
        %s3271 = ssub.s32 %s15, 2
        // Predicated region
        $region53: #{tpu_custom_call.1} parent=51 // pred_check
          %p3272 = pneg %p154
        $region54: #{tpu_custom_call.1} parent=51 // pred_check_branch
          %3274 = sbr.rel (%p3272) target = $region56
        $region55: #{tpu_custom_call.1} parent=51 // pred_region
          %s3275 = sand.u32 %s139, 1
          %s3276 = scalar_lea.sflag [#allocation4], %s3275
          %s3277 = sand.u32 %s139, 1
          %s3278 = smul.addr %s3277, 16
          %s3279 = scalar_lea.vmem [#allocation5], %s3278
          %3280 = dma.done %s3276, 256
        $region56: #{tpu_custom_call.1} parent=51 // pred_fallthru
          _
      $region52: #{tpu_custom_call.1} parent=5 // pred_fallthru
        _
    $region6: #{tpu_custom_call.1} parent=1 // loop_footer
      %s19 = sadd.s32 1, %s15
    $region7: #{tpu_custom_call.1} parent=1 // loop_footer_branch
      %14 = sbr.rel target = $region3
    $region8: #{tpu_custom_call.1} parent=1 // loop_exit
      _
    %3281 = vsyncpa [#allocation3], 1
    %s3282 = scalar_lea.sflag [#allocation3], 1
    %3283 = vsyncpa %s3282, 1
    %3284 = vsyncpa [#allocation4], 1
    %s3285 = scalar_lea.sflag [#allocation4], 1
    %3286 = vsyncpa %s3285, 1

</llo_original>
